<compile_context>
chip_gen: v5e
topology: v5e:2x2
jax: 0.10.0
libtpu: 0.0.40
codegen_flags: <defaults>
</compile_context>

<pallas_src>
from itertools import combinations

import numpy as np
import jax
import jax.numpy as jnp
from jax.experimental import pallas as pl
from jax.experimental.pallas import tpu as pltpu

NUM_LAGS = 9
WINDOWS = 4
PAD_NODES = 16          # per-graph node rows, padded 9 -> 16 (2 full sublane tiles)
IN_LANES = 16           # packed per-node input lanes: [lag | weather(8) | zeros(7)]
BN_EPS = 1e-5


# ---------------------------------------------------------------------------
# Graph -> dense mean-aggregation matrix (exact replica of get_batch_graph)
# ---------------------------------------------------------------------------
def build_graph_agg(num_lags=NUM_LAGS, windows=WINDOWS):
    edges = []
    for j in range(windows, num_lags + 1):
        t = list(range(j - windows, j))
        combos = list(combinations(t, 2))
        for (s, d) in combos[:-1]:          # edges[0:-1]
            edges.append((s, d))
    edges.append((num_lags - 2, num_lags - 1))
    edges.append((num_lags - 1, 0))

    a = np.zeros((num_lags, num_lags), dtype=np.float32)
    for s, d in edges:                      # directed src -> dst, multi-edges kept
        a[d, s] += 1.0
    deg = a.sum(axis=1, keepdims=True)
    # every node has in-degree >= 1 -> DGL "keep old feature" case never triggers
    assert np.all(deg > 0)
    return a / deg


# ---------------------------------------------------------------------------
# Fused kernel: packed MLPs + 2 x MGN layers + regression head for one tile
# ---------------------------------------------------------------------------
def fused_kernel(x_ref, a_ref, w1_ref, b1_ref, w2_ref, b2_ref,
                 wm1_ref, bm1_ref, wm2_ref, bm2_ref, wr_ref, br_ref, out_ref):
    f32 = jnp.float32
    g, pn, _ = a_ref.shape          # graphs per tile, padded nodes per graph
    h2 = w2_ref.shape[0]            # 2 * hidden
    h = wm2_ref.shape[1]            # hidden
    n_reg = br_ref.shape[1]

    # --- fused lags|weather MLPs (block-diagonal packed weights, BN folded) --
    x = jnp.tanh(jnp.dot(x_ref[...], w1_ref[...], preferred_element_type=f32)
                 + b1_ref[...])                                        # (gp,2H)=[l1|w1]
    x = jnp.tanh(jnp.dot(x, w2_ref[...], preferred_element_type=f32)
                 + b2_ref[...])                                        # (gp,2H)=[l |w ]

    a = a_ref[...]                                                     # (g, 16, 16)

    # --- MGN layer 1: per-graph mean aggregation (batched, O(g)) + packed merge
    xm = jnp.einsum('gij,gjh->gih', a, x.reshape(g, pn, h2),
                    preferred_element_type=f32).reshape(g * pn, h2)    # [lm | wm]
    # merge weight extended with an identity block -> output is [l_new | wm]
    x = jnp.dot(xm, wm1_ref[...], preferred_element_type=f32) + bm1_ref[...]

    # --- MGN layer 2 (only the l half is needed afterwards) ------------------
    xm = jnp.einsum('gij,gjh->gih', a, x.reshape(g, pn, h2),
                    preferred_element_type=f32).reshape(g * pn, h2)
    l = jnp.dot(xm, wm2_ref[...], preferred_element_type=f32) + bm2_ref[...]   # (gp,H)

    # --- regression head: out[g, r] = sum_{n,h} l[g,n,h] * Wr[r,n,h] + br[r]
    # (Wr rows for the padded node positions 9..15 are zero, so the garbage the
    #  fake node rows carry never contributes.)
    l3 = l.reshape(g, pn, h)
    cols = []
    for r in range(n_reg):                                             # n_reg tiny, static
        zr = jnp.sum(l3 * wr_ref[r], axis=-1)                          # (g, 16)
        cols.append(jnp.sum(zr, axis=-1, keepdims=True))               # (g, 1)
    out_ref[0] = jnp.concatenate(cols, axis=-1) + br_ref[...]


def regression_forward(lags, weather, params, wr_t, br, *, graphs_per_tile=32):
    """lags: (bs, 9) f32, weather: (bs, 9, 8) f32 -> (bs, n_reg) f32."""
    bs = lags.shape[0]
    hid = params["w_l2"].shape[0]
    h2 = 2 * hid
    n_reg = wr_t.shape[1]
    g = graphs_per_tile
    bsp = ((bs + g - 1) // g) * g          # batch padded to a multiple of the tile
    ntiles = bsp // g
    gp = g * PAD_NODES

    # ---- host-side folds / packing ---------------------------------------
    # fold eval-mode BatchNorm into the second lags Linear (exact algebraic fold)
    w_l2f = params["bn_scale"].T * params["w_l2"]
    b_l2f = params["bn_shift"] @ params["w_l2"] + params["b_l2"]

    # packed per-node input: lanes = [lag, weather(8), zeros(7)]
    xin = jnp.zeros((bsp, PAD_NODES, IN_LANES), jnp.float32)
    xin = xin.at[:bs, :NUM_LAGS, 0].set(lags.astype(jnp.float32))
    xin = xin.at[:bs, :NUM_LAGS, 1:1 + 8].set(weather.astype(jnp.float32))
    xin = xin.reshape(bsp * PAD_NODES, IN_LANES)

    # block-diagonal first layer (16 -> 2H): lag column feeds the l half,
    # weather columns feed the w half
    w1p = jnp.zeros((IN_LANES, h2), jnp.float32)
    w1p = w1p.at[0, :hid].set(params["w_l1"][0])
    w1p = w1p.at[1:1 + 8, hid:].set(params["w_w1"])
    b1p = jnp.concatenate([params["b_l1"], params["b_w1"]], axis=-1)

    # block-diagonal second layer (2H -> 2H), BN folded into the lags block
    w2p = jnp.zeros((h2, h2), jnp.float32)
    w2p = w2p.at[:hid, :hid].set(w_l2f)
    w2p = w2p.at[hid:, hid:].set(params["w_w2"])
    b2p = jnp.concatenate([b_l2f, params["b_w2"]], axis=-1)

    # MGN-1 merge extended with an identity pass-through for the w half
    wm1e = jnp.zeros((h2, h2), jnp.float32)
    wm1e = wm1e.at[:, :hid].set(params["wm1"])
    wm1e = wm1e.at[hid:, hid:].set(jnp.eye(hid, dtype=jnp.float32))
    bm1e = jnp.concatenate([params["bm1"], jnp.zeros((1, hid), jnp.float32)], axis=-1)

    # per-graph mean-aggregation matrix (padded rows/cols zero), replicated over
    # the tile's graphs for the batched contraction (g * 1 KiB resident)
    a9 = build_graph_agg()
    a16 = np.zeros((PAD_NODES, PAD_NODES), np.float32)
    a16[:NUM_LAGS, :NUM_LAGS] = a9
    a_b = jnp.asarray(np.tile(a16[None], (g, 1, 1)))               # (g, 16, 16)

    # regression weights as (reg, node, hidden) with zero rows for padded nodes
    wr_rs = jnp.transpose(wr_t.reshape(NUM_LAGS, hid, n_reg), (2, 0, 1))
    wr_pad = jnp.zeros((n_reg, PAD_NODES, hid), jnp.float32).at[:, :NUM_LAGS, :].set(wr_rs)

    ins = [xin, a_b, w1p, b1p, w2p, b2p, wm1e, bm1e,
           params["wm2"], params["bm2"], wr_pad, br]

    def resident(arr):      # weights / constants: DMA'd once, stay in VMEM
        nd = arr.ndim
        return pl.BlockSpec(arr.shape, lambda i, nd=nd: (0,) * nd)

    in_specs = [pl.BlockSpec((gp, IN_LANES), lambda i: (i, 0))] \
        + [resident(x) for x in ins[1:]]

    # advisory cost estimate (per-tile matmul/tanh volume x ntiles)
    flops_tile = 2 * (gp * IN_LANES * h2 + gp * h2 * h2            # packed MLP
                      + 2 * g * PAD_NODES * PAD_NODES * h2         # 2 aggregations
                      + gp * h2 * h2 + gp * h2 * hid               # merges
                      + gp * hid * n_reg)                          # head
    weight_bytes = 4 * sum(int(np.prod(x.shape)) for x in ins[1:])
    cost = pl.CostEstimate(
        flops=flops_tile * ntiles,
        transcendentals=2 * gp * h2 * ntiles,
        bytes_accessed=int(xin.size) * 4 + weight_bytes + bsp * n_reg * 4)

    # TODO(synk): output last dim is n_reg (=2) -> masked partial store; bytes are
    # negligible at large tiles so the lane-dense transpose was not applied.
    out = pl.pallas_call(
        fused_kernel,
        out_shape=jax.ShapeDtypeStruct((ntiles, g, n_reg), jnp.float32),
        grid=(ntiles,),
        in_specs=in_specs,
        out_specs=pl.BlockSpec((1, g, n_reg), lambda i: (i, 0, 0)),
        compiler_params=pltpu.CompilerParams(dimension_semantics=("parallel",)),
        cost_estimate=cost,
    )(*ins)
    return out.reshape(bsp, n_reg)[:bs]


# ---------------------------------------------------------------------------
# Pure-JAX reference (un-fused, un-padded math) for correctness check
# ---------------------------------------------------------------------------
def reference_forward(lags, weather, p, wr_t, br):
    bs = lags.shape[0]
    a_blk = jnp.asarray(np.kron(np.eye(bs, dtype=np.float32), build_graph_agg()))
    lf = lags.reshape(-1, 1)
    wf = weather.reshape(-1, 8)
    l = jnp.tanh(lf * p["w_l1"] + p["b_l1"])
    l = l * p["bn_scale"] + p["bn_shift"]                 # lags_norm200 (eval)
    l = jnp.tanh(l @ p["w_l2"] + p["b_l2"])
    w = jnp.tanh(wf @ p["w_w1"] + p["b_w1"])
    w = jnp.tanh(w @ p["w_w2"] + p["b_w2"])
    for wm, bm in ((p["wm1"], p["bm1"]), (p["wm2"], p["bm2"])):
        lm = a_blk @ l
        wmn = a_blk @ w
        l = jnp.concatenate([lm, wmn], axis=-1) @ wm + bm
        w = wmn
    hg = l.reshape(bs, -1)
    return hg @ wr_t + br


# ---------------------------------------------------------------------------
# Deterministic parameter construction (synthetic; shapes from __init__)
# ---------------------------------------------------------------------------
def make_params(key, hidden):
    ks = jax.random.split(key, 16)
    nrm = lambda k, s, scale=0.1: scale * jax.random.normal(k, s, jnp.float32)
    p = {}
    p["w_l1"] = nrm(ks[0], (1, hidden))                   # lags_hidden200 (stored (in,out))
    p["b_l1"] = nrm(ks[1], (1, hidden), 0.05)
    gamma = 1.0 + 0.1 * jax.random.normal(ks[2], (1, hidden), jnp.float32)
    beta = 0.1 * jax.random.normal(ks[3], (1, hidden), jnp.float32)
    r_mean = 0.1 * jax.random.normal(ks[4], (1, hidden), jnp.float32)
    r_var = 0.5 + jax.random.uniform(ks[5], (1, hidden), jnp.float32)
    p["bn_scale"] = gamma / jnp.sqrt(r_var + BN_EPS)      # lags_norm200 (eval stats)
    p["bn_shift"] = beta - r_mean * p["bn_scale"]
    p["w_l2"] = nrm(ks[6], (hidden, hidden))              # lags_hidden50
    p["b_l2"] = nrm(ks[7], (1, hidden), 0.05)
    p["w_w1"] = nrm(ks[8], (8, hidden))                   # weather_hidden200
    p["b_w1"] = nrm(ks[9], (1, hidden), 0.05)
    p["w_w2"] = nrm(ks[10], (hidden, hidden))             # weather_hidden50
    p["b_w2"] = nrm(ks[11], (1, hidden), 0.05)
    p["wm1"] = nrm(ks[12], (2 * hidden, hidden))          # MGN-1 merge_linner
    p["bm1"] = nrm(ks[13], (1, hidden), 0.05)
    p["wm2"] = nrm(ks[14], (2 * hidden, hidden))          # MGN-2 merge_linner
    p["bm2"] = nrm(ks[15], (1, hidden), 0.05)
    return p


if __name__ == "__main__":
    hidden = 32
    n_reg = 2
    bs = 37        # deliberately NOT a multiple of graphs_per_tile -> exercises padding

    key = jax.random.PRNGKey(0)
    k_lags, k_weather, k_params, k_wr, k_br = jax.random.split(key, 5)

    # inputs: lags (bs, NUM_LAGS), weather (bs, NUM_LAGS, 8)
    lags = jax.random.normal(k_lags, (bs, NUM_LAGS), jnp.float32)
    weather = jax.random.normal(k_weather, (bs, NUM_LAGS, 8), jnp.float32)

    params = make_params(k_params, hidden)
    wr_t = 0.1 * jax.random.normal(k_wr, (hidden * NUM_LAGS, n_reg), jnp.float32)  # regression W^T
    br = 0.05 * jax.random.normal(k_br, (1, n_reg), jnp.float32)

    ref = jax.block_until_ready(reference_forward(lags, weather, params, wr_t, br))

    # default config: 32 graphs / tile -> 2 grid steps (both v7x TCs get work),
    # last tile partially filled (batch padding path exercised)
    out = jax.block_until_ready(regression_forward(lags, weather, params, wr_t, br))
    assert out.shape == (bs, n_reg)
    assert np.allclose(np.asarray(out), np.asarray(ref), atol=1e-4, rtol=1e-4)

    # smaller tiles: more grid steps, different padding remainder
    out8 = jax.block_until_ready(
        regression_forward(lags, weather, params, wr_t, br, graphs_per_tile=8))
    assert np.allclose(np.asarray(out8), np.asarray(ref), atol=1e-4, rtol=1e-4)

    print("KERNEL_OK")
</pallas_src>

<mosaic_0001>
module attributes {stable_mosaic.version = 11 : i64} {
  func.func @fused_kernel(%arg0: i32, %arg1: memref<512x16xf32, #tpu.memory_space<vmem>>, %arg2: memref<32x16x16xf32, #tpu.memory_space<vmem>>, %arg3: memref<16x64xf32, #tpu.memory_space<vmem>>, %arg4: memref<1x64xf32, #tpu.memory_space<vmem>>, %arg5: memref<64x64xf32, #tpu.memory_space<vmem>>, %arg6: memref<1x64xf32, #tpu.memory_space<vmem>>, %arg7: memref<64x64xf32, #tpu.memory_space<vmem>>, %arg8: memref<1x64xf32, #tpu.memory_space<vmem>>, %arg9: memref<64x32xf32, #tpu.memory_space<vmem>>, %arg10: memref<1x32xf32, #tpu.memory_space<vmem>>, %arg11: memref<2x16x32xf32, #tpu.memory_space<vmem>>, %arg12: memref<1x2xf32, #tpu.memory_space<vmem>>, %arg13: memref<1x32x2xf32, #tpu.memory_space<vmem>>) attributes {dimension_semantics = [#tpu.dimension_semantics<parallel>], iteration_bounds = array<i64: 2>, scalar_prefetch = 0 : i64, scratch_operands = 0 : i64, tpu.core_type = #tpu.core_type<tc>, window_params = [{transform_indices = @transform_0, window_bounds = array<i64: 512, 16>}, {pipeline_mode = #tpu.pipeline_mode<synchronous>, transform_indices = @transform_1, window_bounds = array<i64: 32, 16, 16>}, {pipeline_mode = #tpu.pipeline_mode<synchronous>, transform_indices = @transform_2, window_bounds = array<i64: 16, 64>}, {pipeline_mode = #tpu.pipeline_mode<synchronous>, transform_indices = @transform_3, window_bounds = array<i64: 1, 64>}, {pipeline_mode = #tpu.pipeline_mode<synchronous>, transform_indices = @transform_4, window_bounds = array<i64: 64, 64>}, {pipeline_mode = #tpu.pipeline_mode<synchronous>, transform_indices = @transform_5, window_bounds = array<i64: 1, 64>}, {pipeline_mode = #tpu.pipeline_mode<synchronous>, transform_indices = @transform_6, window_bounds = array<i64: 64, 64>}, {pipeline_mode = #tpu.pipeline_mode<synchronous>, transform_indices = @transform_7, window_bounds = array<i64: 1, 64>}, {pipeline_mode = #tpu.pipeline_mode<synchronous>, transform_indices = @transform_8, window_bounds = array<i64: 64, 32>}, {pipeline_mode = #tpu.pipeline_mode<synchronous>, transform_indices = @transform_9, window_bounds = array<i64: 1, 32>}, {pipeline_mode = #tpu.pipeline_mode<synchronous>, transform_indices = @transform_10, window_bounds = array<i64: 2, 16, 32>}, {pipeline_mode = #tpu.pipeline_mode<synchronous>, transform_indices = @transform_11, window_bounds = array<i64: 1, 2>}, {transform_indices = @transform_12, window_bounds = array<i64: 1, 32, 2>}]} {
    %c0 = arith.constant 0 : index
    %c0_0 = arith.constant 0 : index
    %0 = vector.load %arg1[%c0, %c0_0] : memref<512x16xf32, #tpu.memory_space<vmem>>, vector<512x16xf32>
    %c0_1 = arith.constant 0 : index
    %c0_2 = arith.constant 0 : index
    %1 = vector.load %arg3[%c0_1, %c0_2] : memref<16x64xf32, #tpu.memory_space<vmem>>, vector<16x64xf32>
    %cst = arith.constant dense<0.000000e+00> : vector<512x64xf32>
    %2 = tpu.matmul %0, %1, %cst {dimension_numbers = #tpu.dot_dimension_numbers<[1], [0], [0], [1], [0, 0, 1, 1], [], []>} : vector<512x16xf32>, vector<16x64xf32>, vector<512x64xf32> -> vector<512x64xf32>
    %c0_3 = arith.constant 0 : index
    %c0_4 = arith.constant 0 : index
    %3 = vector.load %arg4[%c0_3, %c0_4] : memref<1x64xf32, #tpu.memory_space<vmem>>, vector<1x64xf32>
    %4 = vector.broadcast %3 : vector<1x64xf32> to vector<512x64xf32>
    %5 = arith.addf %2, %4 : vector<512x64xf32>
    %6 = math.tanh %5 : vector<512x64xf32>
    %c0_5 = arith.constant 0 : index
    %c0_6 = arith.constant 0 : index
    %7 = vector.load %arg5[%c0_5, %c0_6] : memref<64x64xf32, #tpu.memory_space<vmem>>, vector<64x64xf32>
    %cst_7 = arith.constant dense<0.000000e+00> : vector<512x64xf32>
    %8 = tpu.matmul %6, %7, %cst_7 {dimension_numbers = #tpu.dot_dimension_numbers<[1], [0], [0], [1], [0, 0, 1, 1], [], []>} : vector<512x64xf32>, vector<64x64xf32>, vector<512x64xf32> -> vector<512x64xf32>
    %c0_8 = arith.constant 0 : index
    %c0_9 = arith.constant 0 : index
    %9 = vector.load %arg6[%c0_8, %c0_9] : memref<1x64xf32, #tpu.memory_space<vmem>>, vector<1x64xf32>
    %10 = vector.broadcast %9 : vector<1x64xf32> to vector<512x64xf32>
    %11 = arith.addf %8, %10 : vector<512x64xf32>
    %12 = math.tanh %11 : vector<512x64xf32>
    %c0_10 = arith.constant 0 : index
    %c0_11 = arith.constant 0 : index
    %c0_12 = arith.constant 0 : index
    %13 = vector.load %arg2[%c0_10, %c0_11, %c0_12] : memref<32x16x16xf32, #tpu.memory_space<vmem>>, vector<32x16x16xf32>
    %14 = vector.shape_cast %12 : vector<512x64xf32> to vector<32x16x64xf32>
    "tpu.trace_start"() <{level = 10 : i32, message = "gij,gjh->gih"}> : () -> ()
    %cst_13 = arith.constant dense<0.000000e+00> : vector<32x16x64xf32>
    %15 = tpu.matmul %13, %14, %cst_13 {dimension_numbers = #tpu.dot_dimension_numbers<[2], [1], [1], [2], [0, 0, 0, 1, 1, 2], [0], [0]>} : vector<32x16x16xf32>, vector<32x16x64xf32>, vector<32x16x64xf32> -> vector<32x16x64xf32>
    "tpu.trace_stop"() : () -> ()
    %16 = vector.shape_cast %15 : vector<32x16x64xf32> to vector<512x64xf32>
    %c0_14 = arith.constant 0 : index
    %c0_15 = arith.constant 0 : index
    %17 = vector.load %arg7[%c0_14, %c0_15] : memref<64x64xf32, #tpu.memory_space<vmem>>, vector<64x64xf32>
    %cst_16 = arith.constant dense<0.000000e+00> : vector<512x64xf32>
    %18 = tpu.matmul %16, %17, %cst_16 {dimension_numbers = #tpu.dot_dimension_numbers<[1], [0], [0], [1], [0, 0, 1, 1], [], []>} : vector<512x64xf32>, vector<64x64xf32>, vector<512x64xf32> -> vector<512x64xf32>
    %c0_17 = arith.constant 0 : index
    %c0_18 = arith.constant 0 : index
    %19 = vector.load %arg8[%c0_17, %c0_18] : memref<1x64xf32, #tpu.memory_space<vmem>>, vector<1x64xf32>
    %20 = vector.broadcast %19 : vector<1x64xf32> to vector<512x64xf32>
    %21 = arith.addf %18, %20 : vector<512x64xf32>
    %22 = vector.shape_cast %21 : vector<512x64xf32> to vector<32x16x64xf32>
    "tpu.trace_start"() <{level = 10 : i32, message = "gij,gjh->gih"}> : () -> ()
    %cst_19 = arith.constant dense<0.000000e+00> : vector<32x16x64xf32>
    %23 = tpu.matmul %13, %22, %cst_19 {dimension_numbers = #tpu.dot_dimension_numbers<[2], [1], [1], [2], [0, 0, 0, 1, 1, 2], [0], [0]>} : vector<32x16x16xf32>, vector<32x16x64xf32>, vector<32x16x64xf32> -> vector<32x16x64xf32>
    "tpu.trace_stop"() : () -> ()
    %24 = vector.shape_cast %23 : vector<32x16x64xf32> to vector<512x64xf32>
    %c0_20 = arith.constant 0 : index
    %c0_21 = arith.constant 0 : index
    %25 = vector.load %arg9[%c0_20, %c0_21] : memref<64x32xf32, #tpu.memory_space<vmem>>, vector<64x32xf32>
    %cst_22 = arith.constant dense<0.000000e+00> : vector<512x32xf32>
    %26 = tpu.matmul %24, %25, %cst_22 {dimension_numbers = #tpu.dot_dimension_numbers<[1], [0], [0], [1], [0, 0, 1, 1], [], []>} : vector<512x64xf32>, vector<64x32xf32>, vector<512x32xf32> -> vector<512x32xf32>
    %c0_23 = arith.constant 0 : index
    %c0_24 = arith.constant 0 : index
    %27 = vector.load %arg10[%c0_23, %c0_24] : memref<1x32xf32, #tpu.memory_space<vmem>>, vector<1x32xf32>
    %28 = vector.broadcast %27 : vector<1x32xf32> to vector<512x32xf32>
    %29 = arith.addf %26, %28 : vector<512x32xf32>
    %30 = vector.shape_cast %29 : vector<512x32xf32> to vector<32x16x32xf32>
    %c0_25 = arith.constant 0 : index
    %c0_26 = arith.constant 0 : index
    %c0_27 = arith.constant 0 : index
    %31 = vector.load %arg11[%c0_25, %c0_26, %c0_27] : memref<2x16x32xf32, #tpu.memory_space<vmem>>, vector<1x16x32xf32>
    %32 = vector.shape_cast %31 : vector<1x16x32xf32> to vector<16x32xf32>
    %33 = vector.shape_cast %32 : vector<16x32xf32> to vector<1x16x32xf32>
    %34 = vector.broadcast %33 : vector<1x16x32xf32> to vector<32x16x32xf32>
    %35 = arith.mulf %30, %34 : vector<32x16x32xf32>
    %cst_28 = arith.constant dense<0.000000e+00> : vector<32x16xf32>
    %36 = vector.multi_reduction <add>, %35, %cst_28 [2] : vector<32x16x32xf32> to vector<32x16xf32>
    %cst_29 = arith.constant dense<0.000000e+00> : vector<32xf32>
    %37 = vector.multi_reduction <add>, %36, %cst_29 [1] : vector<32x16xf32> to vector<32xf32>
    %38 = vector.shape_cast %37 : vector<32xf32> to vector<32x1xf32>
    %c1 = arith.constant 1 : index
    %c0_30 = arith.constant 0 : index
    %c0_31 = arith.constant 0 : index
    %39 = vector.load %arg11[%c1, %c0_30, %c0_31] : memref<2x16x32xf32, #tpu.memory_space<vmem>>, vector<1x16x32xf32>
    %40 = vector.shape_cast %39 : vector<1x16x32xf32> to vector<16x32xf32>
    %41 = vector.shape_cast %40 : vector<16x32xf32> to vector<1x16x32xf32>
    %42 = vector.broadcast %41 : vector<1x16x32xf32> to vector<32x16x32xf32>
    %43 = arith.mulf %30, %42 : vector<32x16x32xf32>
    %cst_32 = arith.constant dense<0.000000e+00> : vector<32x16xf32>
    %44 = vector.multi_reduction <add>, %43, %cst_32 [2] : vector<32x16x32xf32> to vector<32x16xf32>
    %cst_33 = arith.constant dense<0.000000e+00> : vector<32xf32>
    %45 = vector.multi_reduction <add>, %44, %cst_33 [1] : vector<32x16xf32> to vector<32xf32>
    %46 = vector.shape_cast %45 : vector<32xf32> to vector<32x1xf32>
    %47 = tpu.concatenate %38, %46 in 1 : vector<32x1xf32>, vector<32x1xf32> -> vector<32x2xf32>
    %c0_34 = arith.constant 0 : index
    %c0_35 = arith.constant 0 : index
    %48 = vector.load %arg12[%c0_34, %c0_35] : memref<1x2xf32, #tpu.memory_space<vmem>>, vector<1x2xf32>
    %49 = vector.broadcast %48 : vector<1x2xf32> to vector<32x2xf32>
    %50 = arith.addf %47, %49 : vector<32x2xf32>
    %c0_36 = arith.constant 0 : index
    %c0_37 = arith.constant 0 : index
    %c0_38 = arith.constant 0 : index
    %51 = vector.load %arg13[%c0_36, %c0_37, %c0_38] : memref<1x32x2xf32, #tpu.memory_space<vmem>>, vector<1x32x2xf32>
    %52 = vector.shape_cast %51 : vector<1x32x2xf32> to vector<32x2xf32>
    %53 = vector.shape_cast %50 : vector<32x2xf32> to vector<1x32x2xf32>
    tpu.vector_store %arg13[%c0_36, %c0_37, %c0_38], %53 {strides = array<i32>} : memref<1x32x2xf32, #tpu.memory_space<vmem>>, vector<1x32x2xf32>,
    return
  }
  func.func @transform_0(%arg0: i32) -> (i32, i32) {
    %c0_i32 = arith.constant 0 : i32
    %c0_i32_0 = arith.constant 0 : i32
    return %arg0, %c0_i32 : i32, i32
  }
  func.func @transform_1(%arg0: i32) -> (i32, i32, i32) {
    %c0_i32 = arith.constant 0 : i32
    %c0_i32_0 = arith.constant 0 : i32
    %c0_i32_1 = arith.constant 0 : i32
    %c0_i32_2 = arith.constant 0 : i32
    return %c0_i32, %c0_i32_0, %c0_i32_1 : i32, i32, i32
  }
  func.func @transform_2(%arg0: i32) -> (i32, i32) {
    %c0_i32 = arith.constant 0 : i32
    %c0_i32_0 = arith.constant 0 : i32
    %c0_i32_1 = arith.constant 0 : i32
    return %c0_i32, %c0_i32_0 : i32, i32
  }
  func.func @transform_3(%arg0: i32) -> (i32, i32) {
    %c0_i32 = arith.constant 0 : i32
    %c0_i32_0 = arith.constant 0 : i32
    %c0_i32_1 = arith.constant 0 : i32
    return %c0_i32, %c0_i32_0 : i32, i32
  }
  func.func @transform_4(%arg0: i32) -> (i32, i32) {
    %c0_i32 = arith.constant 0 : i32
    %c0_i32_0 = arith.constant 0 : i32
    %c0_i32_1 = arith.constant 0 : i32
    return %c0_i32, %c0_i32_0 : i32, i32
  }
  func.func @transform_5(%arg0: i32) -> (i32, i32) {
    %c0_i32 = arith.constant 0 : i32
    %c0_i32_0 = arith.constant 0 : i32
    %c0_i32_1 = arith.constant 0 : i32
    return %c0_i32, %c0_i32_0 : i32, i32
  }
  func.func @transform_6(%arg0: i32) -> (i32, i32) {
    %c0_i32 = arith.constant 0 : i32
    %c0_i32_0 = arith.constant 0 : i32
    %c0_i32_1 = arith.constant 0 : i32
    return %c0_i32, %c0_i32_0 : i32, i32
  }
  func.func @transform_7(%arg0: i32) -> (i32, i32) {
    %c0_i32 = arith.constant 0 : i32
    %c0_i32_0 = arith.constant 0 : i32
    %c0_i32_1 = arith.constant 0 : i32
    return %c0_i32, %c0_i32_0 : i32, i32
  }
  func.func @transform_8(%arg0: i32) -> (i32, i32) {
    %c0_i32 = arith.constant 0 : i32
    %c0_i32_0 = arith.constant 0 : i32
    %c0_i32_1 = arith.constant 0 : i32
    return %c0_i32, %c0_i32_0 : i32, i32
  }
  func.func @transform_9(%arg0: i32) -> (i32, i32) {
    %c0_i32 = arith.constant 0 : i32
    %c0_i32_0 = arith.constant 0 : i32
    %c0_i32_1 = arith.constant 0 : i32
    return %c0_i32, %c0_i32_0 : i32, i32
  }
  func.func @transform_10(%arg0: i32) -> (i32, i32, i32) {
    %c0_i32 = arith.constant 0 : i32
    %c0_i32_0 = arith.constant 0 : i32
    %c0_i32_1 = arith.constant 0 : i32
    %c0_i32_2 = arith.constant 0 : i32
    return %c0_i32, %c0_i32_0, %c0_i32_1 : i32, i32, i32
  }
  func.func @transform_11(%arg0: i32) -> (i32, i32) {
    %c0_i32 = arith.constant 0 : i32
    %c0_i32_0 = arith.constant 0 : i32
    %c0_i32_1 = arith.constant 0 : i32
    return %c0_i32, %c0_i32_0 : i32, i32
  }
  func.func @transform_12(%arg0: i32) -> (i32, i32, i32) {
    %c0_i32 = arith.constant 0 : i32
    %c0_i32_0 = arith.constant 0 : i32
    %c0_i32_1 = arith.constant 0 : i32
    return %arg0, %c0_i32, %c0_i32_0 : i32, i32, i32
  }
}

</mosaic_0001>

<llo_original>
// kernel: tpu_custom_call.1
$region0: #{tpu_custom_call.1}
  #allocation0 [shape = 'u32[]', space=smem, size = 0x4, offset = 0x4, fixed_abs, tag = 'smem constant byte address 0x4 - core index']
  #allocation1 [shape = 'u32[72,128]{1,0:T(1,128)}', space=vmem, size = 0x9000, scoped, tag = 'internal scratch']
  %s0 = inlined_call_operand.vmem [shape: f32[1024,16], index: 0, kind: input, shape index: {}]
  %s1 = inlined_call_operand.vmem [shape: f32[32,16,16], index: 1, kind: input, shape index: {}]
  %s2 = inlined_call_operand.vmem [shape: f32[16,64], index: 2, kind: input, shape index: {}]
  %s3 = inlined_call_operand.vmem [shape: f32[1,64], index: 3, kind: input, shape index: {}]
  %s4 = inlined_call_operand.vmem [shape: f32[64,64], index: 4, kind: input, shape index: {}]
  %s5 = inlined_call_operand.vmem [shape: f32[1,64], index: 5, kind: input, shape index: {}]
  %s6 = inlined_call_operand.vmem [shape: f32[64,64], index: 6, kind: input, shape index: {}]
  %s7 = inlined_call_operand.vmem [shape: f32[1,64], index: 7, kind: input, shape index: {}]
  %s8 = inlined_call_operand.vmem [shape: f32[64,32], index: 8, kind: input, shape index: {}]
  %s9 = inlined_call_operand.vmem [shape: f32[1,32], index: 9, kind: input, shape index: {}]
  %s10 = inlined_call_operand.vmem [shape: f32[2,16,32], index: 10, kind: input, shape index: {}]
  %s11 = inlined_call_operand.vmem [shape: f32[1,2], index: 11, kind: input, shape index: {}]
  %s12 = inlined_call_operand.vmem [shape: f32[2,32,2], index: 12, kind: output, shape index: {}]
  %s13 = sld [smem:[#allocation0]]
  $region81: #{tpu_custom_call.1} parent=0
    _
  %s15 = ssub.s32 1, %s13
  %s16 = scalar_select 0, %s15, %s13
  loop: start=0, step=1, limit=4
  $region2: #{tpu_custom_call.1} parent=0 // loop_pre_header
    _
  $region3: #{tpu_custom_call.1} parent=0 // loop_header
    %s18 = sphi 0, %s22
    %p19 = scmp.ge.s32.totalorder %s18, 4
    %s28 = sphi 0, %s30
    %s31 = sphi 0, %s28
    %s32 = sphi 0, %s31
    %s48 = sphi 0, %s32
    %s52 = sphi 0, %s52
    %s54 = sphi 0, %s52
    %s55 = sphi 0, %s54
    %s69 = sphi 0, %s55
    %s73 = sphi 0, %s73
    %s75 = sphi 0, %s73
    %s76 = sphi 0, %s75
    %s90 = sphi 0, %s76
    %s94 = sphi 0, %s94
    %s96 = sphi 0, %s94
    %s97 = sphi 0, %s96
    %s111 = sphi 0, %s97
    %s115 = sphi 0, %s115
    %s117 = sphi 0, %s115
    %s118 = sphi 0, %s117
    %s132 = sphi 0, %s118
    %s136 = sphi 0, %s136
    %s138 = sphi 0, %s136
    %s139 = sphi 0, %s138
    %s153 = sphi 0, %s139
    %s157 = sphi 0, %s157
    %s159 = sphi 0, %s157
    %s160 = sphi 0, %s159
    %s174 = sphi 0, %s160
    %s178 = sphi 0, %s178
    %s180 = sphi 0, %s178
    %s181 = sphi 0, %s180
    %s195 = sphi 0, %s181
    %s199 = sphi 0, %s199
    %s201 = sphi 0, %s199
    %s202 = sphi 0, %s201
    %s216 = sphi 0, %s202
    %s220 = sphi 0, %s220
    %s222 = sphi 0, %s220
    %s223 = sphi 0, %s222
    %s237 = sphi 0, %s223
    %s241 = sphi 0, %s241
    %s243 = sphi 0, %s241
    %s244 = sphi 0, %s243
    %s258 = sphi 0, %s244
    %s262 = sphi 0, %s262
    %s264 = sphi 0, %s262
    %s265 = sphi 0, %s264
    %s279 = sphi 0, %s265
    %s285 = sphi 0, %s287
    %s288 = sphi 0, %s285
    %s289 = sphi 0, %s288
    %s305 = sphi 0, %s289
  $region4: #{tpu_custom_call.1} parent=0 // loop_header_branch
    %21 = sbr.rel (%p19) target = $region8
  $region5: #{tpu_custom_call.1} parent=0 // loop_body
    %s23 = ssub.s32 %s18, 1
    %s24 = ssub.s32 %s18, 2
    %s25 = sadd.s32 %s18, 1
    %s26 = ssub.s32 %s18, %s25
    %p27 = scmp.eq.s32.totalorder %s26, 0
    %s29 = sadd.s32 %s28, 1
    %s30 = scalar_select %p27, %s28, %s29
    %p33 = pneg %p27
    %p34 = scmp.eq.s32.totalorder %s18, 1
    %p35 = por %p33, %p34
    %p36 = scmp.ne.s32.totalorder %s28, %s31
    %p37 = scmp.eq.s32.totalorder %s18, 0
    %p38 = por %p36, %p37
    %p39 = scmp.ne.s32.totalorder %s28, %s31
    %p40 = scmp.eq.s32.totalorder %s23, 1
    %p41 = por %p39, %p40
    %p42 = scmp.ne.s32.totalorder %s31, %s32
    %p43 = scmp.eq.s32.totalorder %s23, 0
    %p44 = por %p42, %p43
    %p45 = scmp.ne.s32.totalorder %s31, %s32
    %p46 = scmp.eq.s32.totalorder %s24, 1
    %p47 = por %p45, %p46
    %p49 = scmp.ne.s32.totalorder %s32, %s48
    %p50 = scmp.eq.s32.totalorder %s24, 0
    %p51 = por %p49, %p50
    %s53 = sadd.s32 %s52, 1
    %p56 = scmp.eq.s32.totalorder %s18, 1
    %p57 = scmp.ne.s32.totalorder %s52, %s54
    %p58 = scmp.eq.s32.totalorder %s18, 0
    %p59 = por %p57, %p58
    %p60 = scmp.ne.s32.totalorder %s52, %s54
    %p61 = scmp.eq.s32.totalorder %s23, 1
    %p62 = por %p60, %p61
    %p63 = scmp.ne.s32.totalorder %s54, %s55
    %p64 = scmp.eq.s32.totalorder %s23, 0
    %p65 = por %p63, %p64
    %p66 = scmp.ne.s32.totalorder %s54, %s55
    %p67 = scmp.eq.s32.totalorder %s24, 1
    %p68 = por %p66, %p67
    %p70 = scmp.ne.s32.totalorder %s55, %s69
    %p71 = scmp.eq.s32.totalorder %s24, 0
    %p72 = por %p70, %p71
    %s74 = sadd.s32 %s73, 1
    %p77 = scmp.eq.s32.totalorder %s18, 1
    %p78 = scmp.ne.s32.totalorder %s73, %s75
    %p79 = scmp.eq.s32.totalorder %s18, 0
    %p80 = por %p78, %p79
    %p81 = scmp.ne.s32.totalorder %s73, %s75
    %p82 = scmp.eq.s32.totalorder %s23, 1
    %p83 = por %p81, %p82
    %p84 = scmp.ne.s32.totalorder %s75, %s76
    %p85 = scmp.eq.s32.totalorder %s23, 0
    %p86 = por %p84, %p85
    %p87 = scmp.ne.s32.totalorder %s75, %s76
    %p88 = scmp.eq.s32.totalorder %s24, 1
    %p89 = por %p87, %p88
    %p91 = scmp.ne.s32.totalorder %s76, %s90
    %p92 = scmp.eq.s32.totalorder %s24, 0
    %p93 = por %p91, %p92
    %s95 = sadd.s32 %s94, 1
    %p98 = scmp.eq.s32.totalorder %s18, 1
    %p99 = scmp.ne.s32.totalorder %s94, %s96
    %p100 = scmp.eq.s32.totalorder %s18, 0
    %p101 = por %p99, %p100
    %p102 = scmp.ne.s32.totalorder %s94, %s96
    %p103 = scmp.eq.s32.totalorder %s23, 1
    %p104 = por %p102, %p103
    %p105 = scmp.ne.s32.totalorder %s96, %s97
    %p106 = scmp.eq.s32.totalorder %s23, 0
    %p107 = por %p105, %p106
    %p108 = scmp.ne.s32.totalorder %s96, %s97
    %p109 = scmp.eq.s32.totalorder %s24, 1
    %p110 = por %p108, %p109
    %p112 = scmp.ne.s32.totalorder %s97, %s111
    %p113 = scmp.eq.s32.totalorder %s24, 0
    %p114 = por %p112, %p113
    %s116 = sadd.s32 %s115, 1
    %p119 = scmp.eq.s32.totalorder %s18, 1
    %p120 = scmp.ne.s32.totalorder %s115, %s117
    %p121 = scmp.eq.s32.totalorder %s18, 0
    %p122 = por %p120, %p121
    %p123 = scmp.ne.s32.totalorder %s115, %s117
    %p124 = scmp.eq.s32.totalorder %s23, 1
    %p125 = por %p123, %p124
    %p126 = scmp.ne.s32.totalorder %s117, %s118
    %p127 = scmp.eq.s32.totalorder %s23, 0
    %p128 = por %p126, %p127
    %p129 = scmp.ne.s32.totalorder %s117, %s118
    %p130 = scmp.eq.s32.totalorder %s24, 1
    %p131 = por %p129, %p130
    %p133 = scmp.ne.s32.totalorder %s118, %s132
    %p134 = scmp.eq.s32.totalorder %s24, 0
    %p135 = por %p133, %p134
    %s137 = sadd.s32 %s136, 1
    %p140 = scmp.eq.s32.totalorder %s18, 1
    %p141 = scmp.ne.s32.totalorder %s136, %s138
    %p142 = scmp.eq.s32.totalorder %s18, 0
    %p143 = por %p141, %p142
    %p144 = scmp.ne.s32.totalorder %s136, %s138
    %p145 = scmp.eq.s32.totalorder %s23, 1
    %p146 = por %p144, %p145
    %p147 = scmp.ne.s32.totalorder %s138, %s139
    %p148 = scmp.eq.s32.totalorder %s23, 0
    %p149 = por %p147, %p148
    %p150 = scmp.ne.s32.totalorder %s138, %s139
    %p151 = scmp.eq.s32.totalorder %s24, 1
    %p152 = por %p150, %p151
    %p154 = scmp.ne.s32.totalorder %s139, %s153
    %p155 = scmp.eq.s32.totalorder %s24, 0
    %p156 = por %p154, %p155
    %s158 = sadd.s32 %s157, 1
    %p161 = scmp.eq.s32.totalorder %s18, 1
    %p162 = scmp.ne.s32.totalorder %s157, %s159
    %p163 = scmp.eq.s32.totalorder %s18, 0
    %p164 = por %p162, %p163
    %p165 = scmp.ne.s32.totalorder %s157, %s159
    %p166 = scmp.eq.s32.totalorder %s23, 1
    %p167 = por %p165, %p166
    %p168 = scmp.ne.s32.totalorder %s159, %s160
    %p169 = scmp.eq.s32.totalorder %s23, 0
    %p170 = por %p168, %p169
    %p171 = scmp.ne.s32.totalorder %s159, %s160
    %p172 = scmp.eq.s32.totalorder %s24, 1
    %p173 = por %p171, %p172
    %p175 = scmp.ne.s32.totalorder %s160, %s174
    %p176 = scmp.eq.s32.totalorder %s24, 0
    %p177 = por %p175, %p176
    %s179 = sadd.s32 %s178, 1
    %p182 = scmp.eq.s32.totalorder %s18, 1
    %p183 = scmp.ne.s32.totalorder %s178, %s180
    %p184 = scmp.eq.s32.totalorder %s18, 0
    %p185 = por %p183, %p184
    %p186 = scmp.ne.s32.totalorder %s178, %s180
    %p187 = scmp.eq.s32.totalorder %s23, 1
    %p188 = por %p186, %p187
    %p189 = scmp.ne.s32.totalorder %s180, %s181
    %p190 = scmp.eq.s32.totalorder %s23, 0
    %p191 = por %p189, %p190
    %p192 = scmp.ne.s32.totalorder %s180, %s181
    %p193 = scmp.eq.s32.totalorder %s24, 1
    %p194 = por %p192, %p193
    %p196 = scmp.ne.s32.totalorder %s181, %s195
    %p197 = scmp.eq.s32.totalorder %s24, 0
    %p198 = por %p196, %p197
    %s200 = sadd.s32 %s199, 1
    %p203 = scmp.eq.s32.totalorder %s18, 1
    %p204 = scmp.ne.s32.totalorder %s199, %s201
    %p205 = scmp.eq.s32.totalorder %s18, 0
    %p206 = por %p204, %p205
    %p207 = scmp.ne.s32.totalorder %s199, %s201
    %p208 = scmp.eq.s32.totalorder %s23, 1
    %p209 = por %p207, %p208
    %p210 = scmp.ne.s32.totalorder %s201, %s202
    %p211 = scmp.eq.s32.totalorder %s23, 0
    %p212 = por %p210, %p211
    %p213 = scmp.ne.s32.totalorder %s201, %s202
    %p214 = scmp.eq.s32.totalorder %s24, 1
    %p215 = por %p213, %p214
    %p217 = scmp.ne.s32.totalorder %s202, %s216
    %p218 = scmp.eq.s32.totalorder %s24, 0
    %p219 = por %p217, %p218
    %s221 = sadd.s32 %s220, 1
    %p224 = scmp.eq.s32.totalorder %s18, 1
    %p225 = scmp.ne.s32.totalorder %s220, %s222
    %p226 = scmp.eq.s32.totalorder %s18, 0
    %p227 = por %p225, %p226
    %p228 = scmp.ne.s32.totalorder %s220, %s222
    %p229 = scmp.eq.s32.totalorder %s23, 1
    %p230 = por %p228, %p229
    %p231 = scmp.ne.s32.totalorder %s222, %s223
    %p232 = scmp.eq.s32.totalorder %s23, 0
    %p233 = por %p231, %p232
    %p234 = scmp.ne.s32.totalorder %s222, %s223
    %p235 = scmp.eq.s32.totalorder %s24, 1
    %p236 = por %p234, %p235
    %p238 = scmp.ne.s32.totalorder %s223, %s237
    %p239 = scmp.eq.s32.totalorder %s24, 0
    %p240 = por %p238, %p239
    %s242 = sadd.s32 %s241, 1
    %p245 = scmp.eq.s32.totalorder %s18, 1
    %p246 = scmp.ne.s32.totalorder %s241, %s243
    %p247 = scmp.eq.s32.totalorder %s18, 0
    %p248 = por %p246, %p247
    %p249 = scmp.ne.s32.totalorder %s241, %s243
    %p250 = scmp.eq.s32.totalorder %s23, 1
    %p251 = por %p249, %p250
    %p252 = scmp.ne.s32.totalorder %s243, %s244
    %p253 = scmp.eq.s32.totalorder %s23, 0
    %p254 = por %p252, %p253
    %p255 = scmp.ne.s32.totalorder %s243, %s244
    %p256 = scmp.eq.s32.totalorder %s24, 1
    %p257 = por %p255, %p256
    %p259 = scmp.ne.s32.totalorder %s244, %s258
    %p260 = scmp.eq.s32.totalorder %s24, 0
    %p261 = por %p259, %p260
    %s263 = sadd.s32 %s262, 1
    %p266 = scmp.eq.s32.totalorder %s18, 1
    %p267 = scmp.ne.s32.totalorder %s262, %s264
    %p268 = scmp.eq.s32.totalorder %s18, 0
    %p269 = por %p267, %p268
    %p270 = scmp.ne.s32.totalorder %s262, %s264
    %p271 = scmp.eq.s32.totalorder %s23, 1
    %p272 = por %p270, %p271
    %p273 = scmp.ne.s32.totalorder %s264, %s265
    %p274 = scmp.eq.s32.totalorder %s23, 0
    %p275 = por %p273, %p274
    %p276 = scmp.ne.s32.totalorder %s264, %s265
    %p277 = scmp.eq.s32.totalorder %s24, 1
    %p278 = por %p276, %p277
    %p280 = scmp.ne.s32.totalorder %s265, %s279
    %p281 = scmp.eq.s32.totalorder %s24, 0
    %p282 = por %p280, %p281
    %s283 = ssub.s32 %s18, %s25
    %p284 = scmp.eq.s32.totalorder %s283, 0
    %s286 = sadd.s32 %s285, 1
    %s287 = scalar_select %p284, %s285, %s286
    %p290 = pneg %p284
    %p291 = scmp.eq.s32.totalorder %s18, 1
    %p292 = por %p290, %p291
    %p293 = scmp.ne.s32.totalorder %s285, %s288
    %p294 = scmp.eq.s32.totalorder %s18, 0
    %p295 = por %p293, %p294
    %p296 = scmp.ne.s32.totalorder %s285, %s288
    %p297 = scmp.eq.s32.totalorder %s23, 1
    %p298 = por %p296, %p297
    %p299 = scmp.ne.s32.totalorder %s288, %s289
    %p300 = scmp.eq.s32.totalorder %s23, 0
    %p301 = por %p299, %p300
    %p302 = scmp.ne.s32.totalorder %s288, %s289
    %p303 = scmp.eq.s32.totalorder %s24, 1
    %p304 = por %p302, %p303
    %p306 = scmp.ne.s32.totalorder %s289, %s305
    %p307 = scmp.eq.s32.totalorder %s24, 0
    %p308 = por %p306, %p307
    %p309 = scmp.le.s32.totalorder 1, %s18
    %p310 = scmp.lt.s32.totalorder %s18, 3
    %p311 = pnand %p309, %p310
    %p312 = pneg %p311
    // Predicated region
    $region9: #{tpu_custom_call.1} parent=5 // pred_check
      _
    $region10: #{tpu_custom_call.1} parent=5 // pred_check_branch
      %314 = sbr.rel (%p311) target = $region12
    $region11: #{tpu_custom_call.1} parent=5 // pred_region
      %s315 = ssub.s32 %s18, 1
      // Predicated region
      $region13: #{tpu_custom_call.1} parent=11 // pred_check
        %p316 = pneg %p65
      $region14: #{tpu_custom_call.1} parent=11 // pred_check_branch
        %318 = sbr.rel (%p316) target = $region16
      $region15: #{tpu_custom_call.1} parent=11 // pred_region
        _
      $region16: #{tpu_custom_call.1} parent=11 // pred_fallthru
        _
      // Predicated region
      $region17: #{tpu_custom_call.1} parent=11 // pred_check
        %p319 = pneg %p86
      $region18: #{tpu_custom_call.1} parent=11 // pred_check_branch
        %321 = sbr.rel (%p319) target = $region20
      $region19: #{tpu_custom_call.1} parent=11 // pred_region
        _
      $region20: #{tpu_custom_call.1} parent=11 // pred_fallthru
        _
      // Predicated region
      $region21: #{tpu_custom_call.1} parent=11 // pred_check
        %p322 = pneg %p107
      $region22: #{tpu_custom_call.1} parent=11 // pred_check_branch
        %324 = sbr.rel (%p322) target = $region24
      $region23: #{tpu_custom_call.1} parent=11 // pred_region
        _
      $region24: #{tpu_custom_call.1} parent=11 // pred_fallthru
        _
      // Predicated region
      $region25: #{tpu_custom_call.1} parent=11 // pred_check
        %p325 = pneg %p128
      $region26: #{tpu_custom_call.1} parent=11 // pred_check_branch
        %327 = sbr.rel (%p325) target = $region28
      $region27: #{tpu_custom_call.1} parent=11 // pred_region
        _
      $region28: #{tpu_custom_call.1} parent=11 // pred_fallthru
        _
      // Predicated region
      $region29: #{tpu_custom_call.1} parent=11 // pred_check
        %p328 = pneg %p149
      $region30: #{tpu_custom_call.1} parent=11 // pred_check_branch
        %330 = sbr.rel (%p328) target = $region32
      $region31: #{tpu_custom_call.1} parent=11 // pred_region
        _
      $region32: #{tpu_custom_call.1} parent=11 // pred_fallthru
        _
      // Predicated region
      $region33: #{tpu_custom_call.1} parent=11 // pred_check
        %p331 = pneg %p170
      $region34: #{tpu_custom_call.1} parent=11 // pred_check_branch
        %333 = sbr.rel (%p331) target = $region36
      $region35: #{tpu_custom_call.1} parent=11 // pred_region
        _
      $region36: #{tpu_custom_call.1} parent=11 // pred_fallthru
        _
      // Predicated region
      $region37: #{tpu_custom_call.1} parent=11 // pred_check
        %p334 = pneg %p191
      $region38: #{tpu_custom_call.1} parent=11 // pred_check_branch
        %336 = sbr.rel (%p334) target = $region40
      $region39: #{tpu_custom_call.1} parent=11 // pred_region
        _
      $region40: #{tpu_custom_call.1} parent=11 // pred_fallthru
        _
      // Predicated region
      $region41: #{tpu_custom_call.1} parent=11 // pred_check
        %p337 = pneg %p212
      $region42: #{tpu_custom_call.1} parent=11 // pred_check_branch
        %339 = sbr.rel (%p337) target = $region44
      $region43: #{tpu_custom_call.1} parent=11 // pred_region
        _
      $region44: #{tpu_custom_call.1} parent=11 // pred_fallthru
        _
      // Predicated region
      $region45: #{tpu_custom_call.1} parent=11 // pred_check
        %p340 = pneg %p233
      $region46: #{tpu_custom_call.1} parent=11 // pred_check_branch
        %342 = sbr.rel (%p340) target = $region48
      $region47: #{tpu_custom_call.1} parent=11 // pred_region
        _
      $region48: #{tpu_custom_call.1} parent=11 // pred_fallthru
        _
      // Predicated region
      $region49: #{tpu_custom_call.1} parent=11 // pred_check
        %p343 = pneg %p254
      $region50: #{tpu_custom_call.1} parent=11 // pred_check_branch
        %345 = sbr.rel (%p343) target = $region52
      $region51: #{tpu_custom_call.1} parent=11 // pred_region
        _
      $region52: #{tpu_custom_call.1} parent=11 // pred_fallthru
        _
      // Predicated region
      $region53: #{tpu_custom_call.1} parent=11 // pred_check
        %p346 = pneg %p275
      $region54: #{tpu_custom_call.1} parent=11 // pred_check_branch
        %348 = sbr.rel (%p346) target = $region56
      $region55: #{tpu_custom_call.1} parent=11 // pred_region
        _
      $region56: #{tpu_custom_call.1} parent=11 // pred_fallthru
        _
    $region12: #{tpu_custom_call.1} parent=5 // pred_fallthru
      _
    %p349 = scmp.lt.s32.totalorder %s18, 2
    // Predicated region
    $region57: #{tpu_custom_call.1} parent=5 // pred_check
      %p350 = pneg %p349
    $region58: #{tpu_custom_call.1} parent=5 // pred_check_branch
      %352 = sbr.rel (%p350) target = $region60
    $region59: #{tpu_custom_call.1} parent=5 // pred_region
      // Predicated region
      $region61: #{tpu_custom_call.1} parent=59 // pred_check
        %p353 = pneg %p38
      $region62: #{tpu_custom_call.1} parent=59 // pred_check_branch
        %355 = sbr.rel (%p353) target = $region64
      $region63: #{tpu_custom_call.1} parent=59 // pred_region
        %s356 = smul.u32 64, %s18
        %p357 = scmp.lt.s32.totalorder %s356, 127
        %s358 = scalar_select %p357, %s356, 127
        %s359 = smul.addr %s358, 8
        %s360 = scalar_lea.vmem %s0, %s359
        %s361 = smul.u32 64, %s18
      $region64: #{tpu_custom_call.1} parent=59 // pred_fallthru
        _
    $region60: #{tpu_custom_call.1} parent=5 // pred_fallthru
      _
    %p362 = scmp.le.s32.totalorder 1, %s18
    %p363 = scmp.lt.s32.totalorder %s18, 3
    %p364 = pnand %p362, %p363
    %p365 = pneg %p364
    // Predicated region
    $region65: #{tpu_custom_call.1} parent=5 // pred_check
      _
    $region66: #{tpu_custom_call.1} parent=5 // pred_check_branch
      %367 = sbr.rel (%p364) target = $region68
    $region67: #{tpu_custom_call.1} parent=5 // pred_region
      %s368 = ssub.s32 %s18, 1
      %s369 = smul.u32 64, %s23
      %p370 = scmp.lt.s32.totalorder %s369, 127
      %s371 = scalar_select %p370, %s369, 127
      %s372 = smul.addr %s371, 8
      %s373 = scalar_lea.vmem %s0, %s372
      %p374 = pneg %p44
      %p375 = pneg %p41
      %p376 = pneg %p65
      %p377 = pneg %p62
      %p378 = pneg %p86
      %p379 = pneg %p83
      %p380 = pneg %p107
      %p381 = pneg %p104
      %p382 = pneg %p128
      %p383 = pneg %p125
      %p384 = pneg %p149
      %p385 = pneg %p146
      %p386 = pneg %p170
      %p387 = pneg %p167
      %p388 = pneg %p191
      %p389 = pneg %p188
      %p390 = pneg %p212
      %p391 = pneg %p209
      %p392 = pneg %p233
      %p393 = pneg %p230
      %p394 = pneg %p254
      %p395 = pneg %p251
      %p396 = pneg %p275
      %p397 = pneg %p272
      %p398 = pneg %p301
      %p399 = pneg %p298
      %p400 = scmp.lt.s32.totalorder %s23, 1
      %s401 = scalar_select %p400, %s23, 1
      %s402 = smul.addr %s401, 4
      %s403 = smul.addr %s402, 8
      %s404 = scalar_lea.vmem %s12, %s403
      %s405 = smul.u32 64, %s23
      %p406 = scmp.lt.s32.totalorder %s405, 127
      %s407 = scalar_select %p406, %s405, 127
      %s408 = smul.addr %s407, 8
      %s409 = scalar_lea.vmem %s0, %s408
      %s410 = smul.u32 64, %s23
      %p411 = scmp.lt.s32.totalorder %s23, 1
      %s412 = scalar_select %p411, %s23, 1
      %s413 = smul.addr %s412, 4
      %s414 = smul.addr %s413, 8
      %s415 = scalar_lea.vmem %s12, %s414
      %v416 = vld [vmem:[%s409] sm:$0xff]
      %v417 = vld [vmem:[%s409 + $0x8] sm:$0xff]
      %v418 = vld [vmem:[%s409 + $0x10] sm:$0xff]
      %v419 = vld [vmem:[%s409 + $0x18] sm:$0xff]
      %v420 = vld [vmem:[%s409 + $0x20] sm:$0xff]
      %v421 = vld [vmem:[%s409 + $0x28] sm:$0xff]
      %v422 = vld [vmem:[%s409 + $0x30] sm:$0xff]
      %v423 = vld [vmem:[%s409 + $0x38] sm:$0xff]
      %v424 = vld [vmem:[%s409 + $0x40] sm:$0xff]
      %v425 = vld [vmem:[%s409 + $0x48] sm:$0xff]
      %v426 = vld [vmem:[%s409 + $0x50] sm:$0xff]
      %v427 = vld [vmem:[%s409 + $0x58] sm:$0xff]
      %v428 = vld [vmem:[%s409 + $0x60] sm:$0xff]
      %v429 = vld [vmem:[%s409 + $0x68] sm:$0xff]
      %v430 = vld [vmem:[%s409 + $0x70] sm:$0xff]
      %v431 = vld [vmem:[%s409 + $0x78] sm:$0xff]
      %v432 = vld [vmem:[%s409 + $0x80] sm:$0xff]
      %v433 = vld [vmem:[%s409 + $0x88] sm:$0xff]
      %v434 = vld [vmem:[%s409 + $0x90] sm:$0xff]
      %v435 = vld [vmem:[%s409 + $0x98] sm:$0xff]
      %v436 = vld [vmem:[%s409 + $0xa0] sm:$0xff]
      %v437 = vld [vmem:[%s409 + $0xa8] sm:$0xff]
      %v438 = vld [vmem:[%s409 + $0xb0] sm:$0xff]
      %v439 = vld [vmem:[%s409 + $0xb8] sm:$0xff]
      %v440 = vld [vmem:[%s409 + $0xc0] sm:$0xff]
      %v441 = vld [vmem:[%s409 + $0xc8] sm:$0xff]
      %v442 = vld [vmem:[%s409 + $0xd0] sm:$0xff]
      %v443 = vld [vmem:[%s409 + $0xd8] sm:$0xff]
      %v444 = vld [vmem:[%s409 + $0xe0] sm:$0xff]
      %v445 = vld [vmem:[%s409 + $0xe8] sm:$0xff]
      %v446 = vld [vmem:[%s409 + $0xf0] sm:$0xff]
      %v447 = vld [vmem:[%s409 + $0xf8] sm:$0xff]
      %v448 = vld [vmem:[%s409 + $0x100] sm:$0xff]
      %v449 = vld [vmem:[%s409 + $0x108] sm:$0xff]
      %v450 = vld [vmem:[%s409 + $0x110] sm:$0xff]
      %v451 = vld [vmem:[%s409 + $0x118] sm:$0xff]
      %v452 = vld [vmem:[%s409 + $0x120] sm:$0xff]
      %v453 = vld [vmem:[%s409 + $0x128] sm:$0xff]
      %v454 = vld [vmem:[%s409 + $0x130] sm:$0xff]
      %v455 = vld [vmem:[%s409 + $0x138] sm:$0xff]
      %v456 = vld [vmem:[%s409 + $0x140] sm:$0xff]
      %v457 = vld [vmem:[%s409 + $0x148] sm:$0xff]
      %v458 = vld [vmem:[%s409 + $0x150] sm:$0xff]
      %v459 = vld [vmem:[%s409 + $0x158] sm:$0xff]
      %v460 = vld [vmem:[%s409 + $0x160] sm:$0xff]
      %v461 = vld [vmem:[%s409 + $0x168] sm:$0xff]
      %v462 = vld [vmem:[%s409 + $0x170] sm:$0xff]
      %v463 = vld [vmem:[%s409 + $0x178] sm:$0xff]
      %v464 = vld [vmem:[%s409 + $0x180] sm:$0xff]
      %v465 = vld [vmem:[%s409 + $0x188] sm:$0xff]
      %v466 = vld [vmem:[%s409 + $0x190] sm:$0xff]
      %v467 = vld [vmem:[%s409 + $0x198] sm:$0xff]
      %v468 = vld [vmem:[%s409 + $0x1a0] sm:$0xff]
      %v469 = vld [vmem:[%s409 + $0x1a8] sm:$0xff]
      %v470 = vld [vmem:[%s409 + $0x1b0] sm:$0xff]
      %v471 = vld [vmem:[%s409 + $0x1b8] sm:$0xff]
      %v472 = vld [vmem:[%s409 + $0x1c0] sm:$0xff]
      %v473 = vld [vmem:[%s409 + $0x1c8] sm:$0xff]
      %v474 = vld [vmem:[%s409 + $0x1d0] sm:$0xff]
      %v475 = vld [vmem:[%s409 + $0x1d8] sm:$0xff]
      %v476 = vld [vmem:[%s409 + $0x1e0] sm:$0xff]
      %v477 = vld [vmem:[%s409 + $0x1e8] sm:$0xff]
      %v478 = vld [vmem:[%s409 + $0x1f0] sm:$0xff]
      %v479 = vld [vmem:[%s409 + $0x1f8] sm:$0xff]
      %v480 = vld [vmem:[%s2] sm:$0xff]
      %v481 = vld [vmem:[%s2 + $0x8] sm:$0xff]
      %v482 = vld [vmem:[%s3] sm:$0x1]
      %v484 = vperm.slane %v482, 0
      %vm486 = vcmask 130048
      %v488 = vsel %vm486, %v416, 0
      %v491 = vsel %vm486, %v417, 0
      %v494 = vsel %vm486, %v418, 0
      %v497 = vsel %vm486, %v419, 0
      %v500 = vsel %vm486, %v420, 0
      %v503 = vsel %vm486, %v421, 0
      %v506 = vsel %vm486, %v422, 0
      %v509 = vsel %vm486, %v423, 0
      %v512 = vsel %vm486, %v424, 0
      %v515 = vsel %vm486, %v425, 0
      %v518 = vsel %vm486, %v426, 0
      %v521 = vsel %vm486, %v427, 0
      %v524 = vsel %vm486, %v428, 0
      %v527 = vsel %vm486, %v429, 0
      %v530 = vsel %vm486, %v430, 0
      %v533 = vsel %vm486, %v431, 0
      %v536 = vsel %vm486, %v432, 0
      %v539 = vsel %vm486, %v433, 0
      %v542 = vsel %vm486, %v434, 0
      %v545 = vsel %vm486, %v435, 0
      %v548 = vsel %vm486, %v436, 0
      %v551 = vsel %vm486, %v437, 0
      %v554 = vsel %vm486, %v438, 0
      %v557 = vsel %vm486, %v439, 0
      %v560 = vsel %vm486, %v440, 0
      %v563 = vsel %vm486, %v441, 0
      %v566 = vsel %vm486, %v442, 0
      %v569 = vsel %vm486, %v443, 0
      %v572 = vsel %vm486, %v444, 0
      %v575 = vsel %vm486, %v445, 0
      %v578 = vsel %vm486, %v446, 0
      %v581 = vsel %vm486, %v447, 0
      %v584 = vsel %vm486, %v448, 0
      %v587 = vsel %vm486, %v449, 0
      %v590 = vsel %vm486, %v450, 0
      %v593 = vsel %vm486, %v451, 0
      %v596 = vsel %vm486, %v452, 0
      %v599 = vsel %vm486, %v453, 0
      %v602 = vsel %vm486, %v454, 0
      %v605 = vsel %vm486, %v455, 0
      %v608 = vsel %vm486, %v456, 0
      %v611 = vsel %vm486, %v457, 0
      %v614 = vsel %vm486, %v458, 0
      %v617 = vsel %vm486, %v459, 0
      %v620 = vsel %vm486, %v460, 0
      %v623 = vsel %vm486, %v461, 0
      %v626 = vsel %vm486, %v462, 0
      %v629 = vsel %vm486, %v463, 0
      %v632 = vsel %vm486, %v464, 0
      %v635 = vsel %vm486, %v465, 0
      %v638 = vsel %vm486, %v466, 0
      %v641 = vsel %vm486, %v467, 0
      %v644 = vsel %vm486, %v468, 0
      %v647 = vsel %vm486, %v469, 0
      %v650 = vsel %vm486, %v470, 0
      %v653 = vsel %vm486, %v471, 0
      %v656 = vsel %vm486, %v472, 0
      %v659 = vsel %vm486, %v473, 0
      %v662 = vsel %vm486, %v474, 0
      %v665 = vsel %vm486, %v475, 0
      %v668 = vsel %vm486, %v476, 0
      %v671 = vsel %vm486, %v477, 0
      %v674 = vsel %vm486, %v478, 0
      %v677 = vsel %vm486, %v479, 0
      %679 = vmatpush.msra.mxu0 0.0
      %680 = vmatpush.msra.mxu0 0.0
      %681 = vmatpush.msra.mxu0 0.0
      %682 = vmatpush.msra.mxu0 0.0
      %683 = vmatpush.msra.mxu0 0.0
      %684 = vmatpush.msra.mxu0 0.0
      %685 = vmatpush.msra.mxu0 0.0
      %686 = vmatpush.msra.mxu0 0.0
      %687 = vmatpush.msra.mxu0 0.0
      %688 = vmatpush.msra.mxu0 0.0
      %689 = vmatpush.msra.mxu0 0.0
      %690 = vmatpush.msra.mxu0 0.0
      %691 = vmatpush.msra.mxu0 0.0
      %692 = vmatpush.msra.mxu0 0.0
      %693 = vmatpush.msra.mxu0 %v481
      %694 = vmatpush.msra.mxu0 %v480
      %695 = vmatmul.f32.gmra.mxu0 %v488
      %v696 = vpop.f32.mrf.mxu0
      %v697 = vadd.f32 %v484, %v696
      %698 = vmatmul.f32.gmra.mxu0 %v491
      %v699 = vpop.f32.mrf.mxu0
      %v700 = vadd.f32 %v484, %v699
      %701 = vmatmul.f32.gmra.mxu0 %v494
      %v702 = vpop.f32.mrf.mxu0
      %v703 = vadd.f32 %v484, %v702
      %704 = vmatmul.f32.gmra.mxu0 %v497
      %v705 = vpop.f32.mrf.mxu0
      %v706 = vadd.f32 %v484, %v705
      %707 = vmatmul.f32.gmra.mxu0 %v500
      %v708 = vpop.f32.mrf.mxu0
      %v709 = vadd.f32 %v484, %v708
      %710 = vmatmul.f32.gmra.mxu0 %v503
      %v711 = vpop.f32.mrf.mxu0
      %v712 = vadd.f32 %v484, %v711
      %713 = vmatmul.f32.gmra.mxu0 %v506
      %v714 = vpop.f32.mrf.mxu0
      %v715 = vadd.f32 %v484, %v714
      %716 = vmatmul.f32.gmra.mxu0 %v509
      %v717 = vpop.f32.mrf.mxu0
      %v718 = vadd.f32 %v484, %v717
      %719 = vmatmul.f32.gmra.mxu0 %v512
      %v720 = vpop.f32.mrf.mxu0
      %v721 = vadd.f32 %v484, %v720
      %722 = vmatmul.f32.gmra.mxu0 %v515
      %v723 = vpop.f32.mrf.mxu0
      %v724 = vadd.f32 %v484, %v723
      %725 = vmatmul.f32.gmra.mxu0 %v518
      %v726 = vpop.f32.mrf.mxu0
      %v727 = vadd.f32 %v484, %v726
      %728 = vmatmul.f32.gmra.mxu0 %v521
      %v729 = vpop.f32.mrf.mxu0
      %v730 = vadd.f32 %v484, %v729
      %731 = vmatmul.f32.gmra.mxu0 %v524
      %v732 = vpop.f32.mrf.mxu0
      %v733 = vadd.f32 %v484, %v732
      %734 = vmatmul.f32.gmra.mxu0 %v527
      %v735 = vpop.f32.mrf.mxu0
      %v736 = vadd.f32 %v484, %v735
      %737 = vmatmul.f32.gmra.mxu0 %v530
      %v738 = vpop.f32.mrf.mxu0
      %v739 = vadd.f32 %v484, %v738
      %740 = vmatmul.f32.gmra.mxu0 %v533
      %v741 = vpop.f32.mrf.mxu0
      %v742 = vadd.f32 %v484, %v741
      %743 = vmatmul.f32.gmra.mxu0 %v536
      %v744 = vpop.f32.mrf.mxu0
      %v745 = vadd.f32 %v484, %v744
      %746 = vmatmul.f32.gmra.mxu0 %v539
      %v747 = vpop.f32.mrf.mxu0
      %v748 = vadd.f32 %v484, %v747
      %749 = vmatmul.f32.gmra.mxu0 %v542
      %v750 = vpop.f32.mrf.mxu0
      %v751 = vadd.f32 %v484, %v750
      %752 = vmatmul.f32.gmra.mxu0 %v545
      %v753 = vpop.f32.mrf.mxu0
      %v754 = vadd.f32 %v484, %v753
      %755 = vmatmul.f32.gmra.mxu0 %v548
      %v756 = vpop.f32.mrf.mxu0
      %v757 = vadd.f32 %v484, %v756
      %758 = vmatmul.f32.gmra.mxu0 %v551
      %v759 = vpop.f32.mrf.mxu0
      %v760 = vadd.f32 %v484, %v759
      %761 = vmatmul.f32.gmra.mxu0 %v554
      %v762 = vpop.f32.mrf.mxu0
      %v763 = vadd.f32 %v484, %v762
      %764 = vmatmul.f32.gmra.mxu0 %v557
      %v765 = vpop.f32.mrf.mxu0
      %v766 = vadd.f32 %v484, %v765
      %767 = vmatmul.f32.gmra.mxu0 %v560
      %v768 = vpop.f32.mrf.mxu0
      %v769 = vadd.f32 %v484, %v768
      %770 = vmatmul.f32.gmra.mxu0 %v563
      %v771 = vpop.f32.mrf.mxu0
      %v772 = vadd.f32 %v484, %v771
      %773 = vmatmul.f32.gmra.mxu0 %v566
      %v774 = vpop.f32.mrf.mxu0
      %v775 = vadd.f32 %v484, %v774
      %776 = vmatmul.f32.gmra.mxu0 %v569
      %v777 = vpop.f32.mrf.mxu0
      %v778 = vadd.f32 %v484, %v777
      %779 = vmatmul.f32.gmra.mxu0 %v572
      %v780 = vpop.f32.mrf.mxu0
      %v781 = vadd.f32 %v484, %v780
      %782 = vmatmul.f32.gmra.mxu0 %v575
      %v783 = vpop.f32.mrf.mxu0
      %v784 = vadd.f32 %v484, %v783
      %785 = vmatmul.f32.gmra.mxu0 %v578
      %v786 = vpop.f32.mrf.mxu0
      %v787 = vadd.f32 %v484, %v786
      %788 = vmatmul.f32.gmra.mxu0 %v581
      %v789 = vpop.f32.mrf.mxu0
      %v790 = vadd.f32 %v484, %v789
      %791 = vmatmul.f32.gmra.mxu0 %v584
      %v792 = vpop.f32.mrf.mxu0
      %v793 = vadd.f32 %v484, %v792
      %794 = vmatmul.f32.gmra.mxu0 %v587
      %v795 = vpop.f32.mrf.mxu0
      %v796 = vadd.f32 %v484, %v795
      %797 = vmatmul.f32.gmra.mxu0 %v590
      %v798 = vpop.f32.mrf.mxu0
      %v799 = vadd.f32 %v484, %v798
      %800 = vmatmul.f32.gmra.mxu0 %v593
      %v801 = vpop.f32.mrf.mxu0
      %v802 = vadd.f32 %v484, %v801
      %803 = vmatmul.f32.gmra.mxu0 %v596
      %v804 = vpop.f32.mrf.mxu0
      %v805 = vadd.f32 %v484, %v804
      %806 = vmatmul.f32.gmra.mxu0 %v599
      %v807 = vpop.f32.mrf.mxu0
      %v808 = vadd.f32 %v484, %v807
      %809 = vmatmul.f32.gmra.mxu0 %v602
      %v810 = vpop.f32.mrf.mxu0
      %v811 = vadd.f32 %v484, %v810
      %812 = vmatmul.f32.gmra.mxu0 %v605
      %v813 = vpop.f32.mrf.mxu0
      %v814 = vadd.f32 %v484, %v813
      %815 = vmatmul.f32.gmra.mxu0 %v608
      %v816 = vpop.f32.mrf.mxu0
      %v817 = vadd.f32 %v484, %v816
      %818 = vmatmul.f32.gmra.mxu0 %v611
      %v819 = vpop.f32.mrf.mxu0
      %v820 = vadd.f32 %v484, %v819
      %821 = vmatmul.f32.gmra.mxu0 %v614
      %v822 = vpop.f32.mrf.mxu0
      %v823 = vadd.f32 %v484, %v822
      %824 = vmatmul.f32.gmra.mxu0 %v617
      %v825 = vpop.f32.mrf.mxu0
      %v826 = vadd.f32 %v484, %v825
      %827 = vmatmul.f32.gmra.mxu0 %v620
      %v828 = vpop.f32.mrf.mxu0
      %v829 = vadd.f32 %v484, %v828
      %830 = vmatmul.f32.gmra.mxu0 %v623
      %v831 = vpop.f32.mrf.mxu0
      %v832 = vadd.f32 %v484, %v831
      %833 = vmatmul.f32.gmra.mxu0 %v626
      %v834 = vpop.f32.mrf.mxu0
      %v835 = vadd.f32 %v484, %v834
      %836 = vmatmul.f32.gmra.mxu0 %v629
      %v837 = vpop.f32.mrf.mxu0
      %v838 = vadd.f32 %v484, %v837
      %839 = vmatmul.f32.gmra.mxu0 %v632
      %v840 = vpop.f32.mrf.mxu0
      %v841 = vadd.f32 %v484, %v840
      %842 = vmatmul.f32.gmra.mxu0 %v635
      %v843 = vpop.f32.mrf.mxu0
      %v844 = vadd.f32 %v484, %v843
      %845 = vmatmul.f32.gmra.mxu0 %v638
      %v846 = vpop.f32.mrf.mxu0
      %v847 = vadd.f32 %v484, %v846
      %848 = vmatmul.f32.gmra.mxu0 %v641
      %v849 = vpop.f32.mrf.mxu0
      %v850 = vadd.f32 %v484, %v849
      %851 = vmatmul.f32.gmra.mxu0 %v644
      %v852 = vpop.f32.mrf.mxu0
      %v853 = vadd.f32 %v484, %v852
      %854 = vmatmul.f32.gmra.mxu0 %v647
      %v855 = vpop.f32.mrf.mxu0
      %v856 = vadd.f32 %v484, %v855
      %857 = vmatmul.f32.gmra.mxu0 %v650
      %v858 = vpop.f32.mrf.mxu0
      %v859 = vadd.f32 %v484, %v858
      %860 = vmatmul.f32.gmra.mxu0 %v653
      %v861 = vpop.f32.mrf.mxu0
      %v862 = vadd.f32 %v484, %v861
      %863 = vmatmul.f32.gmra.mxu0 %v656
      %v864 = vpop.f32.mrf.mxu0
      %v865 = vadd.f32 %v484, %v864
      %866 = vmatmul.f32.gmra.mxu0 %v659
      %v867 = vpop.f32.mrf.mxu0
      %v868 = vadd.f32 %v484, %v867
      %869 = vmatmul.f32.gmra.mxu0 %v662
      %v870 = vpop.f32.mrf.mxu0
      %v871 = vadd.f32 %v484, %v870
      %872 = vmatmul.f32.gmra.mxu0 %v665
      %v873 = vpop.f32.mrf.mxu0
      %v874 = vadd.f32 %v484, %v873
      %875 = vmatmul.f32.gmra.mxu0 %v668
      %v876 = vpop.f32.mrf.mxu0
      %v877 = vadd.f32 %v484, %v876
      %878 = vmatmul.f32.gmra.mxu0 %v671
      %v879 = vpop.f32.mrf.mxu0
      %v880 = vadd.f32 %v484, %v879
      %881 = vmatmul.f32.gmra.mxu0 %v674
      %v882 = vpop.f32.mrf.mxu0
      %v883 = vadd.f32 %v484, %v882
      %884 = vmatmul.f32.gmra.mxu0 %v677
      %v885 = vpop.f32.mrf.mxu0
      %v886 = vadd.f32 %v484, %v885
      %887 = vdwg.mxu0
      %v888 = vtanh.pop %v697
      %v889 = vtanh.pop %v700
      %v890 = vtanh.pop %v703
      %v891 = vtanh.pop %v706
      %v892 = vtanh.pop %v709
      %v893 = vtanh.pop %v712
      %v894 = vtanh.pop %v715
      %v895 = vtanh.pop %v718
      %v896 = vtanh.pop %v721
      %v897 = vtanh.pop %v724
      %v898 = vtanh.pop %v727
      %v899 = vtanh.pop %v730
      %v900 = vtanh.pop %v733
      %v901 = vtanh.pop %v736
      %v902 = vtanh.pop %v739
      %v903 = vtanh.pop %v742
      %v904 = vtanh.pop %v745
      %v905 = vtanh.pop %v748
      %v906 = vtanh.pop %v751
      %v907 = vtanh.pop %v754
      %v908 = vtanh.pop %v757
      %v909 = vtanh.pop %v760
      %v910 = vtanh.pop %v763
      %v911 = vtanh.pop %v766
      %v912 = vtanh.pop %v769
      %v913 = vtanh.pop %v772
      %v914 = vtanh.pop %v775
      %v915 = vtanh.pop %v778
      %v916 = vtanh.pop %v781
      %v917 = vtanh.pop %v784
      %v918 = vtanh.pop %v787
      %v919 = vtanh.pop %v790
      %v920 = vtanh.pop %v793
      %v921 = vtanh.pop %v796
      %v922 = vtanh.pop %v799
      %v923 = vtanh.pop %v802
      %v924 = vtanh.pop %v805
      %v925 = vtanh.pop %v808
      %v926 = vtanh.pop %v811
      %v927 = vtanh.pop %v814
      %v928 = vtanh.pop %v817
      %v929 = vtanh.pop %v820
      %v930 = vtanh.pop %v823
      %v931 = vtanh.pop %v826
      %v932 = vtanh.pop %v829
      %v933 = vtanh.pop %v832
      %v934 = vtanh.pop %v835
      %v935 = vtanh.pop %v838
      %v936 = vtanh.pop %v841
      %v937 = vtanh.pop %v844
      %v938 = vtanh.pop %v847
      %v939 = vtanh.pop %v850
      %v940 = vtanh.pop %v853
      %v941 = vtanh.pop %v856
      %v942 = vtanh.pop %v859
      %v943 = vtanh.pop %v862
      %v944 = vtanh.pop %v865
      %v945 = vtanh.pop %v868
      %v946 = vtanh.pop %v871
      %v947 = vtanh.pop %v874
      %v948 = vtanh.pop %v877
      %v949 = vtanh.pop %v880
      %v950 = vtanh.pop %v883
      %v951 = vtanh.pop %v886
      %v952 = vld [vmem:[%s4] sm:$0xff]
      %v953 = vld [vmem:[%s4 + $0x8] sm:$0xff]
      %v954 = vld [vmem:[%s4 + $0x10] sm:$0xff]
      %v955 = vld [vmem:[%s4 + $0x18] sm:$0xff]
      %v956 = vld [vmem:[%s4 + $0x20] sm:$0xff]
      %v957 = vld [vmem:[%s4 + $0x28] sm:$0xff]
      %v958 = vld [vmem:[%s4 + $0x30] sm:$0xff]
      %v959 = vld [vmem:[%s4 + $0x38] sm:$0xff]
      %v960 = vld [vmem:[%s5] sm:$0x1]
      %v962 = vperm.slane %v960, 0
      %vm964 = vcmask 523264
      %v966 = vsel %vm964, %v888, 0
      %v969 = vsel %vm964, %v889, 0
      %v972 = vsel %vm964, %v890, 0
      %v975 = vsel %vm964, %v891, 0
      %v978 = vsel %vm964, %v892, 0
      %v981 = vsel %vm964, %v893, 0
      %v984 = vsel %vm964, %v894, 0
      %v987 = vsel %vm964, %v895, 0
      %v990 = vsel %vm964, %v896, 0
      %v993 = vsel %vm964, %v897, 0
      %v996 = vsel %vm964, %v898, 0
      %v999 = vsel %vm964, %v899, 0
      %v1002 = vsel %vm964, %v900, 0
      %v1005 = vsel %vm964, %v901, 0
      %v1008 = vsel %vm964, %v902, 0
      %v1011 = vsel %vm964, %v903, 0
      %v1014 = vsel %vm964, %v904, 0
      %v1017 = vsel %vm964, %v905, 0
      %v1020 = vsel %vm964, %v906, 0
      %v1023 = vsel %vm964, %v907, 0
      %v1026 = vsel %vm964, %v908, 0
      %v1029 = vsel %vm964, %v909, 0
      %v1032 = vsel %vm964, %v910, 0
      %v1035 = vsel %vm964, %v911, 0
      %v1038 = vsel %vm964, %v912, 0
      %v1041 = vsel %vm964, %v913, 0
      %v1044 = vsel %vm964, %v914, 0
      %v1047 = vsel %vm964, %v915, 0
      %v1050 = vsel %vm964, %v916, 0
      %v1053 = vsel %vm964, %v917, 0
      %v1056 = vsel %vm964, %v918, 0
      %v1059 = vsel %vm964, %v919, 0
      %v1062 = vsel %vm964, %v920, 0
      %v1065 = vsel %vm964, %v921, 0
      %v1068 = vsel %vm964, %v922, 0
      %v1071 = vsel %vm964, %v923, 0
      %v1074 = vsel %vm964, %v924, 0
      %v1077 = vsel %vm964, %v925, 0
      %v1080 = vsel %vm964, %v926, 0
      %v1083 = vsel %vm964, %v927, 0
      %v1086 = vsel %vm964, %v928, 0
      %v1089 = vsel %vm964, %v929, 0
      %v1092 = vsel %vm964, %v930, 0
      %v1095 = vsel %vm964, %v931, 0
      %v1098 = vsel %vm964, %v932, 0
      %v1101 = vsel %vm964, %v933, 0
      %v1104 = vsel %vm964, %v934, 0
      %v1107 = vsel %vm964, %v935, 0
      %v1110 = vsel %vm964, %v936, 0
      %v1113 = vsel %vm964, %v937, 0
      %v1116 = vsel %vm964, %v938, 0
      %v1119 = vsel %vm964, %v939, 0
      %v1122 = vsel %vm964, %v940, 0
      %v1125 = vsel %vm964, %v941, 0
      %v1128 = vsel %vm964, %v942, 0
      %v1131 = vsel %vm964, %v943, 0
      %v1134 = vsel %vm964, %v944, 0
      %v1137 = vsel %vm964, %v945, 0
      %v1140 = vsel %vm964, %v946, 0
      %v1143 = vsel %vm964, %v947, 0
      %v1146 = vsel %vm964, %v948, 0
      %v1149 = vsel %vm964, %v949, 0
      %v1152 = vsel %vm964, %v950, 0
      %v1155 = vsel %vm964, %v951, 0
      %1157 = vmatpush.msra.mxu0 0.0
      %1158 = vmatpush.msra.mxu0 0.0
      %1159 = vmatpush.msra.mxu0 0.0
      %1160 = vmatpush.msra.mxu0 0.0
      %1161 = vmatpush.msra.mxu0 0.0
      %1162 = vmatpush.msra.mxu0 0.0
      %1163 = vmatpush.msra.mxu0 0.0
      %1164 = vmatpush.msra.mxu0 0.0
      %1165 = vmatpush.msra.mxu0 %v959
      %1166 = vmatpush.msra.mxu0 %v958
      %1167 = vmatpush.msra.mxu0 %v957
      %1168 = vmatpush.msra.mxu0 %v956
      %1169 = vmatpush.msra.mxu0 %v955
      %1170 = vmatpush.msra.mxu0 %v954
      %1171 = vmatpush.msra.mxu0 %v953
      %1172 = vmatpush.msra.mxu0 %v952
      %1173 = vmatmul.f32.gmra.mxu0 %v966
      %v1174 = vpop.f32.mrf.mxu0
      %v1175 = vadd.f32 %v962, %v1174
      %1176 = vmatmul.f32.gmra.mxu0 %v969
      %v1177 = vpop.f32.mrf.mxu0
      %v1178 = vadd.f32 %v962, %v1177
      %1179 = vmatmul.f32.gmra.mxu0 %v972
      %v1180 = vpop.f32.mrf.mxu0
      %v1181 = vadd.f32 %v962, %v1180
      %1182 = vmatmul.f32.gmra.mxu0 %v975
      %v1183 = vpop.f32.mrf.mxu0
      %v1184 = vadd.f32 %v962, %v1183
      %1185 = vmatmul.f32.gmra.mxu0 %v978
      %v1186 = vpop.f32.mrf.mxu0
      %v1187 = vadd.f32 %v962, %v1186
      %1188 = vmatmul.f32.gmra.mxu0 %v981
      %v1189 = vpop.f32.mrf.mxu0
      %v1190 = vadd.f32 %v962, %v1189
      %1191 = vmatmul.f32.gmra.mxu0 %v984
      %v1192 = vpop.f32.mrf.mxu0
      %v1193 = vadd.f32 %v962, %v1192
      %1194 = vmatmul.f32.gmra.mxu0 %v987
      %v1195 = vpop.f32.mrf.mxu0
      %v1196 = vadd.f32 %v962, %v1195
      %1197 = vmatmul.f32.gmra.mxu0 %v990
      %v1198 = vpop.f32.mrf.mxu0
      %v1199 = vadd.f32 %v962, %v1198
      %1200 = vmatmul.f32.gmra.mxu0 %v993
      %v1201 = vpop.f32.mrf.mxu0
      %v1202 = vadd.f32 %v962, %v1201
      %1203 = vmatmul.f32.gmra.mxu0 %v996
      %v1204 = vpop.f32.mrf.mxu0
      %v1205 = vadd.f32 %v962, %v1204
      %1206 = vmatmul.f32.gmra.mxu0 %v999
      %v1207 = vpop.f32.mrf.mxu0
      %v1208 = vadd.f32 %v962, %v1207
      %1209 = vmatmul.f32.gmra.mxu0 %v1002
      %v1210 = vpop.f32.mrf.mxu0
      %v1211 = vadd.f32 %v962, %v1210
      %1212 = vmatmul.f32.gmra.mxu0 %v1005
      %v1213 = vpop.f32.mrf.mxu0
      %v1214 = vadd.f32 %v962, %v1213
      %1215 = vmatmul.f32.gmra.mxu0 %v1008
      %v1216 = vpop.f32.mrf.mxu0
      %v1217 = vadd.f32 %v962, %v1216
      %1218 = vmatmul.f32.gmra.mxu0 %v1011
      %v1219 = vpop.f32.mrf.mxu0
      %v1220 = vadd.f32 %v962, %v1219
      %1221 = vmatmul.f32.gmra.mxu0 %v1014
      %v1222 = vpop.f32.mrf.mxu0
      %v1223 = vadd.f32 %v962, %v1222
      %1224 = vmatmul.f32.gmra.mxu0 %v1017
      %v1225 = vpop.f32.mrf.mxu0
      %v1226 = vadd.f32 %v962, %v1225
      %1227 = vmatmul.f32.gmra.mxu0 %v1020
      %v1228 = vpop.f32.mrf.mxu0
      %v1229 = vadd.f32 %v962, %v1228
      %1230 = vmatmul.f32.gmra.mxu0 %v1023
      %v1231 = vpop.f32.mrf.mxu0
      %v1232 = vadd.f32 %v962, %v1231
      %1233 = vmatmul.f32.gmra.mxu0 %v1026
      %v1234 = vpop.f32.mrf.mxu0
      %v1235 = vadd.f32 %v962, %v1234
      %1236 = vmatmul.f32.gmra.mxu0 %v1029
      %v1237 = vpop.f32.mrf.mxu0
      %v1238 = vadd.f32 %v962, %v1237
      %1239 = vmatmul.f32.gmra.mxu0 %v1032
      %v1240 = vpop.f32.mrf.mxu0
      %v1241 = vadd.f32 %v962, %v1240
      %1242 = vmatmul.f32.gmra.mxu0 %v1035
      %v1243 = vpop.f32.mrf.mxu0
      %v1244 = vadd.f32 %v962, %v1243
      %1245 = vmatmul.f32.gmra.mxu0 %v1038
      %v1246 = vpop.f32.mrf.mxu0
      %v1247 = vadd.f32 %v962, %v1246
      %1248 = vmatmul.f32.gmra.mxu0 %v1041
      %v1249 = vpop.f32.mrf.mxu0
      %v1250 = vadd.f32 %v962, %v1249
      %1251 = vmatmul.f32.gmra.mxu0 %v1044
      %v1252 = vpop.f32.mrf.mxu0
      %v1253 = vadd.f32 %v962, %v1252
      %1254 = vmatmul.f32.gmra.mxu0 %v1047
      %v1255 = vpop.f32.mrf.mxu0
      %v1256 = vadd.f32 %v962, %v1255
      %1257 = vmatmul.f32.gmra.mxu0 %v1050
      %v1258 = vpop.f32.mrf.mxu0
      %v1259 = vadd.f32 %v962, %v1258
      %1260 = vmatmul.f32.gmra.mxu0 %v1053
      %v1261 = vpop.f32.mrf.mxu0
      %v1262 = vadd.f32 %v962, %v1261
      %1263 = vmatmul.f32.gmra.mxu0 %v1056
      %v1264 = vpop.f32.mrf.mxu0
      %v1265 = vadd.f32 %v962, %v1264
      %1266 = vmatmul.f32.gmra.mxu0 %v1059
      %v1267 = vpop.f32.mrf.mxu0
      %v1268 = vadd.f32 %v962, %v1267
      %1269 = vmatmul.f32.gmra.mxu0 %v1062
      %v1270 = vpop.f32.mrf.mxu0
      %v1271 = vadd.f32 %v962, %v1270
      %1272 = vmatmul.f32.gmra.mxu0 %v1065
      %v1273 = vpop.f32.mrf.mxu0
      %v1274 = vadd.f32 %v962, %v1273
      %1275 = vmatmul.f32.gmra.mxu0 %v1068
      %v1276 = vpop.f32.mrf.mxu0
      %v1277 = vadd.f32 %v962, %v1276
      %1278 = vmatmul.f32.gmra.mxu0 %v1071
      %v1279 = vpop.f32.mrf.mxu0
      %v1280 = vadd.f32 %v962, %v1279
      %1281 = vmatmul.f32.gmra.mxu0 %v1074
      %v1282 = vpop.f32.mrf.mxu0
      %v1283 = vadd.f32 %v962, %v1282
      %1284 = vmatmul.f32.gmra.mxu0 %v1077
      %v1285 = vpop.f32.mrf.mxu0
      %v1286 = vadd.f32 %v962, %v1285
      %1287 = vmatmul.f32.gmra.mxu0 %v1080
      %v1288 = vpop.f32.mrf.mxu0
      %v1289 = vadd.f32 %v962, %v1288
      %1290 = vmatmul.f32.gmra.mxu0 %v1083
      %v1291 = vpop.f32.mrf.mxu0
      %v1292 = vadd.f32 %v962, %v1291
      %1293 = vmatmul.f32.gmra.mxu0 %v1086
      %v1294 = vpop.f32.mrf.mxu0
      %v1295 = vadd.f32 %v962, %v1294
      %1296 = vmatmul.f32.gmra.mxu0 %v1089
      %v1297 = vpop.f32.mrf.mxu0
      %v1298 = vadd.f32 %v962, %v1297
      %1299 = vmatmul.f32.gmra.mxu0 %v1092
      %v1300 = vpop.f32.mrf.mxu0
      %v1301 = vadd.f32 %v962, %v1300
      %1302 = vmatmul.f32.gmra.mxu0 %v1095
      %v1303 = vpop.f32.mrf.mxu0
      %v1304 = vadd.f32 %v962, %v1303
      %1305 = vmatmul.f32.gmra.mxu0 %v1098
      %v1306 = vpop.f32.mrf.mxu0
      %v1307 = vadd.f32 %v962, %v1306
      %1308 = vmatmul.f32.gmra.mxu0 %v1101
      %v1309 = vpop.f32.mrf.mxu0
      %v1310 = vadd.f32 %v962, %v1309
      %1311 = vmatmul.f32.gmra.mxu0 %v1104
      %v1312 = vpop.f32.mrf.mxu0
      %v1313 = vadd.f32 %v962, %v1312
      %1314 = vmatmul.f32.gmra.mxu0 %v1107
      %v1315 = vpop.f32.mrf.mxu0
      %v1316 = vadd.f32 %v962, %v1315
      %1317 = vmatmul.f32.gmra.mxu0 %v1110
      %v1318 = vpop.f32.mrf.mxu0
      %v1319 = vadd.f32 %v962, %v1318
      %1320 = vmatmul.f32.gmra.mxu0 %v1113
      %v1321 = vpop.f32.mrf.mxu0
      %v1322 = vadd.f32 %v962, %v1321
      %1323 = vmatmul.f32.gmra.mxu0 %v1116
      %v1324 = vpop.f32.mrf.mxu0
      %v1325 = vadd.f32 %v962, %v1324
      %1326 = vmatmul.f32.gmra.mxu0 %v1119
      %v1327 = vpop.f32.mrf.mxu0
      %v1328 = vadd.f32 %v962, %v1327
      %1329 = vmatmul.f32.gmra.mxu0 %v1122
      %v1330 = vpop.f32.mrf.mxu0
      %v1331 = vadd.f32 %v962, %v1330
      %1332 = vmatmul.f32.gmra.mxu0 %v1125
      %v1333 = vpop.f32.mrf.mxu0
      %v1334 = vadd.f32 %v962, %v1333
      %1335 = vmatmul.f32.gmra.mxu0 %v1128
      %v1336 = vpop.f32.mrf.mxu0
      %v1337 = vadd.f32 %v962, %v1336
      %1338 = vmatmul.f32.gmra.mxu0 %v1131
      %v1339 = vpop.f32.mrf.mxu0
      %v1340 = vadd.f32 %v962, %v1339
      %1341 = vmatmul.f32.gmra.mxu0 %v1134
      %v1342 = vpop.f32.mrf.mxu0
      %v1343 = vadd.f32 %v962, %v1342
      %1344 = vmatmul.f32.gmra.mxu0 %v1137
      %v1345 = vpop.f32.mrf.mxu0
      %v1346 = vadd.f32 %v962, %v1345
      %1347 = vmatmul.f32.gmra.mxu0 %v1140
      %v1348 = vpop.f32.mrf.mxu0
      %v1349 = vadd.f32 %v962, %v1348
      %1350 = vmatmul.f32.gmra.mxu0 %v1143
      %v1351 = vpop.f32.mrf.mxu0
      %v1352 = vadd.f32 %v962, %v1351
      %1353 = vmatmul.f32.gmra.mxu0 %v1146
      %v1354 = vpop.f32.mrf.mxu0
      %v1355 = vadd.f32 %v962, %v1354
      %1356 = vmatmul.f32.gmra.mxu0 %v1149
      %v1357 = vpop.f32.mrf.mxu0
      %v1358 = vadd.f32 %v962, %v1357
      %1359 = vmatmul.f32.gmra.mxu0 %v1152
      %v1360 = vpop.f32.mrf.mxu0
      %v1361 = vadd.f32 %v962, %v1360
      %1362 = vmatmul.f32.gmra.mxu0 %v1155
      %v1363 = vpop.f32.mrf.mxu0
      %v1364 = vadd.f32 %v962, %v1363
      %1365 = vdwg.mxu0
      %v1366 = vtanh.pop %v1175
      %v1367 = vtanh.pop %v1178
      %v1368 = vtanh.pop %v1181
      %v1369 = vtanh.pop %v1184
      %v1370 = vtanh.pop %v1187
      %v1371 = vtanh.pop %v1190
      %v1372 = vtanh.pop %v1193
      %v1373 = vtanh.pop %v1196
      %v1374 = vtanh.pop %v1199
      %v1375 = vtanh.pop %v1202
      %v1376 = vtanh.pop %v1205
      %v1377 = vtanh.pop %v1208
      %v1378 = vtanh.pop %v1211
      %v1379 = vtanh.pop %v1214
      %v1380 = vtanh.pop %v1217
      %v1381 = vtanh.pop %v1220
      %v1382 = vtanh.pop %v1223
      %v1383 = vtanh.pop %v1226
      %v1384 = vtanh.pop %v1229
      %v1385 = vtanh.pop %v1232
      %v1386 = vtanh.pop %v1235
      %v1387 = vtanh.pop %v1238
      %v1388 = vtanh.pop %v1241
      %v1389 = vtanh.pop %v1244
      %v1390 = vtanh.pop %v1247
      %v1391 = vtanh.pop %v1250
      %v1392 = vtanh.pop %v1253
      %v1393 = vtanh.pop %v1256
      %v1394 = vtanh.pop %v1259
      %v1395 = vtanh.pop %v1262
      %v1396 = vtanh.pop %v1265
      %v1397 = vtanh.pop %v1268
      %v1398 = vtanh.pop %v1271
      %v1399 = vtanh.pop %v1274
      %v1400 = vtanh.pop %v1277
      %v1401 = vtanh.pop %v1280
      %v1402 = vtanh.pop %v1283
      %v1403 = vtanh.pop %v1286
      %v1404 = vtanh.pop %v1289
      %v1405 = vtanh.pop %v1292
      %v1406 = vtanh.pop %v1295
      %v1407 = vtanh.pop %v1298
      %v1408 = vtanh.pop %v1301
      %v1409 = vtanh.pop %v1304
      %v1410 = vtanh.pop %v1307
      %v1411 = vtanh.pop %v1310
      %v1412 = vtanh.pop %v1313
      %v1413 = vtanh.pop %v1316
      %v1414 = vtanh.pop %v1319
      %v1415 = vtanh.pop %v1322
      %v1416 = vtanh.pop %v1325
      %v1417 = vtanh.pop %v1328
      %v1418 = vtanh.pop %v1331
      %v1419 = vtanh.pop %v1334
      %v1420 = vtanh.pop %v1337
      %v1421 = vtanh.pop %v1340
      %v1422 = vtanh.pop %v1343
      %v1423 = vtanh.pop %v1346
      %v1424 = vtanh.pop %v1349
      %v1425 = vtanh.pop %v1352
      %v1426 = vtanh.pop %v1355
      %v1427 = vtanh.pop %v1358
      %v1428 = vtanh.pop %v1361
      %v1429 = vtanh.pop %v1364
      %v1430 = vld [vmem:[%s1] sm:$0xff]
      %v1431 = vld [vmem:[%s1 + $0x8] sm:$0xff]
      %v1432 = vld [vmem:[%s1 + $0x10] sm:$0xff]
      %v1433 = vld [vmem:[%s1 + $0x18] sm:$0xff]
      %v1434 = vld [vmem:[%s1 + $0x20] sm:$0xff]
      %v1435 = vld [vmem:[%s1 + $0x28] sm:$0xff]
      %v1436 = vld [vmem:[%s1 + $0x30] sm:$0xff]
      %v1437 = vld [vmem:[%s1 + $0x38] sm:$0xff]
      %v1438 = vld [vmem:[%s1 + $0x40] sm:$0xff]
      %v1439 = vld [vmem:[%s1 + $0x48] sm:$0xff]
      %v1440 = vld [vmem:[%s1 + $0x50] sm:$0xff]
      %v1441 = vld [vmem:[%s1 + $0x58] sm:$0xff]
      %v1442 = vld [vmem:[%s1 + $0x60] sm:$0xff]
      %v1443 = vld [vmem:[%s1 + $0x68] sm:$0xff]
      %v1444 = vld [vmem:[%s1 + $0x70] sm:$0xff]
      %v1445 = vld [vmem:[%s1 + $0x78] sm:$0xff]
      %v1446 = vld [vmem:[%s1 + $0x80] sm:$0xff]
      %v1447 = vld [vmem:[%s1 + $0x88] sm:$0xff]
      %v1448 = vld [vmem:[%s1 + $0x90] sm:$0xff]
      %v1449 = vld [vmem:[%s1 + $0x98] sm:$0xff]
      %v1450 = vld [vmem:[%s1 + $0xa0] sm:$0xff]
      %v1451 = vld [vmem:[%s1 + $0xa8] sm:$0xff]
      %v1452 = vld [vmem:[%s1 + $0xb0] sm:$0xff]
      %v1453 = vld [vmem:[%s1 + $0xb8] sm:$0xff]
      %v1454 = vld [vmem:[%s1 + $0xc0] sm:$0xff]
      %v1455 = vld [vmem:[%s1 + $0xc8] sm:$0xff]
      %v1456 = vld [vmem:[%s1 + $0xd0] sm:$0xff]
      %v1457 = vld [vmem:[%s1 + $0xd8] sm:$0xff]
      %v1458 = vld [vmem:[%s1 + $0xe0] sm:$0xff]
      %v1459 = vld [vmem:[%s1 + $0xe8] sm:$0xff]
      %v1460 = vld [vmem:[%s1 + $0xf0] sm:$0xff]
      %v1461 = vld [vmem:[%s1 + $0xf8] sm:$0xff]
      %v1462 = vld [vmem:[%s1 + $0x100] sm:$0xff]
      %v1463 = vld [vmem:[%s1 + $0x108] sm:$0xff]
      %v1464 = vld [vmem:[%s1 + $0x110] sm:$0xff]
      %v1465 = vld [vmem:[%s1 + $0x118] sm:$0xff]
      %v1466 = vld [vmem:[%s1 + $0x120] sm:$0xff]
      %v1467 = vld [vmem:[%s1 + $0x128] sm:$0xff]
      %v1468 = vld [vmem:[%s1 + $0x130] sm:$0xff]
      %v1469 = vld [vmem:[%s1 + $0x138] sm:$0xff]
      %v1470 = vld [vmem:[%s1 + $0x140] sm:$0xff]
      %v1471 = vld [vmem:[%s1 + $0x148] sm:$0xff]
      %v1472 = vld [vmem:[%s1 + $0x150] sm:$0xff]
      %v1473 = vld [vmem:[%s1 + $0x158] sm:$0xff]
      %v1474 = vld [vmem:[%s1 + $0x160] sm:$0xff]
      %v1475 = vld [vmem:[%s1 + $0x168] sm:$0xff]
      %v1476 = vld [vmem:[%s1 + $0x170] sm:$0xff]
      %v1477 = vld [vmem:[%s1 + $0x178] sm:$0xff]
      %v1478 = vld [vmem:[%s1 + $0x180] sm:$0xff]
      %v1479 = vld [vmem:[%s1 + $0x188] sm:$0xff]
      %v1480 = vld [vmem:[%s1 + $0x190] sm:$0xff]
      %v1481 = vld [vmem:[%s1 + $0x198] sm:$0xff]
      %v1482 = vld [vmem:[%s1 + $0x1a0] sm:$0xff]
      %v1483 = vld [vmem:[%s1 + $0x1a8] sm:$0xff]
      %v1484 = vld [vmem:[%s1 + $0x1b0] sm:$0xff]
      %v1485 = vld [vmem:[%s1 + $0x1b8] sm:$0xff]
      %v1486 = vld [vmem:[%s1 + $0x1c0] sm:$0xff]
      %v1487 = vld [vmem:[%s1 + $0x1c8] sm:$0xff]
      %v1488 = vld [vmem:[%s1 + $0x1d0] sm:$0xff]
      %v1489 = vld [vmem:[%s1 + $0x1d8] sm:$0xff]
      %v1490 = vld [vmem:[%s1 + $0x1e0] sm:$0xff]
      %v1491 = vld [vmem:[%s1 + $0x1e8] sm:$0xff]
      %v1492 = vld [vmem:[%s1 + $0x1f0] sm:$0xff]
      %v1493 = vld [vmem:[%s1 + $0x1f8] sm:$0xff]
      %v1495 = vsel %vm486, %v1430, 0
      %v1498 = vsel %vm486, %v1431, 0
      %1500 = vmatpush.msra.mxu0 0.0
      %1501 = vmatpush.msra.mxu0 0.0
      %1502 = vmatpush.msra.mxu0 0.0
      %1503 = vmatpush.msra.mxu0 0.0
      %1504 = vmatpush.msra.mxu0 0.0
      %1505 = vmatpush.msra.mxu0 0.0
      %1506 = vmatpush.msra.mxu0 0.0
      %1507 = vmatpush.msra.mxu0 0.0
      %1508 = vmatpush.msra.mxu0 0.0
      %1509 = vmatpush.msra.mxu0 0.0
      %1510 = vmatpush.msra.mxu0 0.0
      %1511 = vmatpush.msra.mxu0 0.0
      %1512 = vmatpush.msra.mxu0 0.0
      %1513 = vmatpush.msra.mxu0 0.0
      %1514 = vmatpush.msra.mxu0 %v1367
      %1515 = vmatpush.msra.mxu0 %v1366
      %1516 = vmatmul.f32.gmra.mxu0 %v1495
      %v1517 = vpop.f32.mrf.mxu0
      %v1518 = vadd.f32 0.0, %v1517
      %1519 = vmatmul.f32.gmra.mxu0 %v1498
      %v1520 = vpop.f32.mrf.mxu0
      %v1521 = vadd.f32 0.0, %v1520
      %1522 = vdwg.mxu0
      %v1524 = vsel %vm486, %v1432, 0
      %v1527 = vsel %vm486, %v1433, 0
      %1529 = vmatpush.msra.mxu0 0.0
      %1530 = vmatpush.msra.mxu0 0.0
      %1531 = vmatpush.msra.mxu0 0.0
      %1532 = vmatpush.msra.mxu0 0.0
      %1533 = vmatpush.msra.mxu0 0.0
      %1534 = vmatpush.msra.mxu0 0.0
      %1535 = vmatpush.msra.mxu0 0.0
      %1536 = vmatpush.msra.mxu0 0.0
      %1537 = vmatpush.msra.mxu0 0.0
      %1538 = vmatpush.msra.mxu0 0.0
      %1539 = vmatpush.msra.mxu0 0.0
      %1540 = vmatpush.msra.mxu0 0.0
      %1541 = vmatpush.msra.mxu0 0.0
      %1542 = vmatpush.msra.mxu0 0.0
      %1543 = vmatpush.msra.mxu0 %v1369
      %1544 = vmatpush.msra.mxu0 %v1368
      %1545 = vmatmul.f32.gmra.mxu0 %v1524
      %v1546 = vpop.f32.mrf.mxu0
      %v1547 = vadd.f32 0.0, %v1546
      %1548 = vmatmul.f32.gmra.mxu0 %v1527
      %v1549 = vpop.f32.mrf.mxu0
      %v1550 = vadd.f32 0.0, %v1549
      %1551 = vdwg.mxu0
      %v1553 = vsel %vm486, %v1434, 0
      %v1556 = vsel %vm486, %v1435, 0
      %1558 = vmatpush.msra.mxu0 0.0
      %1559 = vmatpush.msra.mxu0 0.0
      %1560 = vmatpush.msra.mxu0 0.0
      %1561 = vmatpush.msra.mxu0 0.0
      %1562 = vmatpush.msra.mxu0 0.0
      %1563 = vmatpush.msra.mxu0 0.0
      %1564 = vmatpush.msra.mxu0 0.0
      %1565 = vmatpush.msra.mxu0 0.0
      %1566 = vmatpush.msra.mxu0 0.0
      %1567 = vmatpush.msra.mxu0 0.0
      %1568 = vmatpush.msra.mxu0 0.0
      %1569 = vmatpush.msra.mxu0 0.0
      %1570 = vmatpush.msra.mxu0 0.0
      %1571 = vmatpush.msra.mxu0 0.0
      %1572 = vmatpush.msra.mxu0 %v1371
      %1573 = vmatpush.msra.mxu0 %v1370
      %1574 = vmatmul.f32.gmra.mxu0 %v1553
      %v1575 = vpop.f32.mrf.mxu0
      %v1576 = vadd.f32 0.0, %v1575
      %1577 = vmatmul.f32.gmra.mxu0 %v1556
      %v1578 = vpop.f32.mrf.mxu0
      %v1579 = vadd.f32 0.0, %v1578
      %1580 = vdwg.mxu0
      %v1582 = vsel %vm486, %v1436, 0
      %v1585 = vsel %vm486, %v1437, 0
      %1587 = vmatpush.msra.mxu0 0.0
      %1588 = vmatpush.msra.mxu0 0.0
      %1589 = vmatpush.msra.mxu0 0.0
      %1590 = vmatpush.msra.mxu0 0.0
      %1591 = vmatpush.msra.mxu0 0.0
      %1592 = vmatpush.msra.mxu0 0.0
      %1593 = vmatpush.msra.mxu0 0.0
      %1594 = vmatpush.msra.mxu0 0.0
      %1595 = vmatpush.msra.mxu0 0.0
      %1596 = vmatpush.msra.mxu0 0.0
      %1597 = vmatpush.msra.mxu0 0.0
      %1598 = vmatpush.msra.mxu0 0.0
      %1599 = vmatpush.msra.mxu0 0.0
      %1600 = vmatpush.msra.mxu0 0.0
      %1601 = vmatpush.msra.mxu0 %v1373
      %1602 = vmatpush.msra.mxu0 %v1372
      %1603 = vmatmul.f32.gmra.mxu0 %v1582
      %v1604 = vpop.f32.mrf.mxu0
      %v1605 = vadd.f32 0.0, %v1604
      %1606 = vmatmul.f32.gmra.mxu0 %v1585
      %v1607 = vpop.f32.mrf.mxu0
      %v1608 = vadd.f32 0.0, %v1607
      %1609 = vdwg.mxu0
      %v1611 = vsel %vm486, %v1438, 0
      %v1614 = vsel %vm486, %v1439, 0
      %1616 = vmatpush.msra.mxu0 0.0
      %1617 = vmatpush.msra.mxu0 0.0
      %1618 = vmatpush.msra.mxu0 0.0
      %1619 = vmatpush.msra.mxu0 0.0
      %1620 = vmatpush.msra.mxu0 0.0
      %1621 = vmatpush.msra.mxu0 0.0
      %1622 = vmatpush.msra.mxu0 0.0
      %1623 = vmatpush.msra.mxu0 0.0
      %1624 = vmatpush.msra.mxu0 0.0
      %1625 = vmatpush.msra.mxu0 0.0
      %1626 = vmatpush.msra.mxu0 0.0
      %1627 = vmatpush.msra.mxu0 0.0
      %1628 = vmatpush.msra.mxu0 0.0
      %1629 = vmatpush.msra.mxu0 0.0
      %1630 = vmatpush.msra.mxu0 %v1375
      %1631 = vmatpush.msra.mxu0 %v1374
      %1632 = vmatmul.f32.gmra.mxu0 %v1611
      %v1633 = vpop.f32.mrf.mxu0
      %v1634 = vadd.f32 0.0, %v1633
      %1635 = vmatmul.f32.gmra.mxu0 %v1614
      %v1636 = vpop.f32.mrf.mxu0
      %v1637 = vadd.f32 0.0, %v1636
      %1638 = vdwg.mxu0
      %v1640 = vsel %vm486, %v1440, 0
      %v1643 = vsel %vm486, %v1441, 0
      %1645 = vmatpush.msra.mxu0 0.0
      %1646 = vmatpush.msra.mxu0 0.0
      %1647 = vmatpush.msra.mxu0 0.0
      %1648 = vmatpush.msra.mxu0 0.0
      %1649 = vmatpush.msra.mxu0 0.0
      %1650 = vmatpush.msra.mxu0 0.0
      %1651 = vmatpush.msra.mxu0 0.0
      %1652 = vmatpush.msra.mxu0 0.0
      %1653 = vmatpush.msra.mxu0 0.0
      %1654 = vmatpush.msra.mxu0 0.0
      %1655 = vmatpush.msra.mxu0 0.0
      %1656 = vmatpush.msra.mxu0 0.0
      %1657 = vmatpush.msra.mxu0 0.0
      %1658 = vmatpush.msra.mxu0 0.0
      %1659 = vmatpush.msra.mxu0 %v1377
      %1660 = vmatpush.msra.mxu0 %v1376
      %1661 = vmatmul.f32.gmra.mxu0 %v1640
      %v1662 = vpop.f32.mrf.mxu0
      %v1663 = vadd.f32 0.0, %v1662
      %1664 = vmatmul.f32.gmra.mxu0 %v1643
      %v1665 = vpop.f32.mrf.mxu0
      %v1666 = vadd.f32 0.0, %v1665
      %1667 = vdwg.mxu0
      %v1669 = vsel %vm486, %v1442, 0
      %v1672 = vsel %vm486, %v1443, 0
      %1674 = vmatpush.msra.mxu0 0.0
      %1675 = vmatpush.msra.mxu0 0.0
      %1676 = vmatpush.msra.mxu0 0.0
      %1677 = vmatpush.msra.mxu0 0.0
      %1678 = vmatpush.msra.mxu0 0.0
      %1679 = vmatpush.msra.mxu0 0.0
      %1680 = vmatpush.msra.mxu0 0.0
      %1681 = vmatpush.msra.mxu0 0.0
      %1682 = vmatpush.msra.mxu0 0.0
      %1683 = vmatpush.msra.mxu0 0.0
      %1684 = vmatpush.msra.mxu0 0.0
      %1685 = vmatpush.msra.mxu0 0.0
      %1686 = vmatpush.msra.mxu0 0.0
      %1687 = vmatpush.msra.mxu0 0.0
      %1688 = vmatpush.msra.mxu0 %v1379
      %1689 = vmatpush.msra.mxu0 %v1378
      %1690 = vmatmul.f32.gmra.mxu0 %v1669
      %v1691 = vpop.f32.mrf.mxu0
      %v1692 = vadd.f32 0.0, %v1691
      %1693 = vmatmul.f32.gmra.mxu0 %v1672
      %v1694 = vpop.f32.mrf.mxu0
      %v1695 = vadd.f32 0.0, %v1694
      %1696 = vdwg.mxu0
      %v1698 = vsel %vm486, %v1444, 0
      %v1701 = vsel %vm486, %v1445, 0
      %1703 = vmatpush.msra.mxu0 0.0
      %1704 = vmatpush.msra.mxu0 0.0
      %1705 = vmatpush.msra.mxu0 0.0
      %1706 = vmatpush.msra.mxu0 0.0
      %1707 = vmatpush.msra.mxu0 0.0
      %1708 = vmatpush.msra.mxu0 0.0
      %1709 = vmatpush.msra.mxu0 0.0
      %1710 = vmatpush.msra.mxu0 0.0
      %1711 = vmatpush.msra.mxu0 0.0
      %1712 = vmatpush.msra.mxu0 0.0
      %1713 = vmatpush.msra.mxu0 0.0
      %1714 = vmatpush.msra.mxu0 0.0
      %1715 = vmatpush.msra.mxu0 0.0
      %1716 = vmatpush.msra.mxu0 0.0
      %1717 = vmatpush.msra.mxu0 %v1381
      %1718 = vmatpush.msra.mxu0 %v1380
      %1719 = vmatmul.f32.gmra.mxu0 %v1698
      %v1720 = vpop.f32.mrf.mxu0
      %v1721 = vadd.f32 0.0, %v1720
      %1722 = vmatmul.f32.gmra.mxu0 %v1701
      %v1723 = vpop.f32.mrf.mxu0
      %v1724 = vadd.f32 0.0, %v1723
      %1725 = vdwg.mxu0
      %v1727 = vsel %vm486, %v1446, 0
      %v1730 = vsel %vm486, %v1447, 0
      %1732 = vmatpush.msra.mxu0 0.0
      %1733 = vmatpush.msra.mxu0 0.0
      %1734 = vmatpush.msra.mxu0 0.0
      %1735 = vmatpush.msra.mxu0 0.0
      %1736 = vmatpush.msra.mxu0 0.0
      %1737 = vmatpush.msra.mxu0 0.0
      %1738 = vmatpush.msra.mxu0 0.0
      %1739 = vmatpush.msra.mxu0 0.0
      %1740 = vmatpush.msra.mxu0 0.0
      %1741 = vmatpush.msra.mxu0 0.0
      %1742 = vmatpush.msra.mxu0 0.0
      %1743 = vmatpush.msra.mxu0 0.0
      %1744 = vmatpush.msra.mxu0 0.0
      %1745 = vmatpush.msra.mxu0 0.0
      %1746 = vmatpush.msra.mxu0 %v1383
      %1747 = vmatpush.msra.mxu0 %v1382
      %1748 = vmatmul.f32.gmra.mxu0 %v1727
      %v1749 = vpop.f32.mrf.mxu0
      %v1750 = vadd.f32 0.0, %v1749
      %1751 = vmatmul.f32.gmra.mxu0 %v1730
      %v1752 = vpop.f32.mrf.mxu0
      %v1753 = vadd.f32 0.0, %v1752
      %1754 = vdwg.mxu0
      %v1756 = vsel %vm486, %v1448, 0
      %v1759 = vsel %vm486, %v1449, 0
      %1761 = vmatpush.msra.mxu0 0.0
      %1762 = vmatpush.msra.mxu0 0.0
      %1763 = vmatpush.msra.mxu0 0.0
      %1764 = vmatpush.msra.mxu0 0.0
      %1765 = vmatpush.msra.mxu0 0.0
      %1766 = vmatpush.msra.mxu0 0.0
      %1767 = vmatpush.msra.mxu0 0.0
      %1768 = vmatpush.msra.mxu0 0.0
      %1769 = vmatpush.msra.mxu0 0.0
      %1770 = vmatpush.msra.mxu0 0.0
      %1771 = vmatpush.msra.mxu0 0.0
      %1772 = vmatpush.msra.mxu0 0.0
      %1773 = vmatpush.msra.mxu0 0.0
      %1774 = vmatpush.msra.mxu0 0.0
      %1775 = vmatpush.msra.mxu0 %v1385
      %1776 = vmatpush.msra.mxu0 %v1384
      %1777 = vmatmul.f32.gmra.mxu0 %v1756
      %v1778 = vpop.f32.mrf.mxu0
      %v1779 = vadd.f32 0.0, %v1778
      %1780 = vmatmul.f32.gmra.mxu0 %v1759
      %v1781 = vpop.f32.mrf.mxu0
      %v1782 = vadd.f32 0.0, %v1781
      %1783 = vdwg.mxu0
      %v1785 = vsel %vm486, %v1450, 0
      %v1788 = vsel %vm486, %v1451, 0
      %1790 = vmatpush.msra.mxu0 0.0
      %1791 = vmatpush.msra.mxu0 0.0
      %1792 = vmatpush.msra.mxu0 0.0
      %1793 = vmatpush.msra.mxu0 0.0
      %1794 = vmatpush.msra.mxu0 0.0
      %1795 = vmatpush.msra.mxu0 0.0
      %1796 = vmatpush.msra.mxu0 0.0
      %1797 = vmatpush.msra.mxu0 0.0
      %1798 = vmatpush.msra.mxu0 0.0
      %1799 = vmatpush.msra.mxu0 0.0
      %1800 = vmatpush.msra.mxu0 0.0
      %1801 = vmatpush.msra.mxu0 0.0
      %1802 = vmatpush.msra.mxu0 0.0
      %1803 = vmatpush.msra.mxu0 0.0
      %1804 = vmatpush.msra.mxu0 %v1387
      %1805 = vmatpush.msra.mxu0 %v1386
      %1806 = vmatmul.f32.gmra.mxu0 %v1785
      %v1807 = vpop.f32.mrf.mxu0
      %v1808 = vadd.f32 0.0, %v1807
      %1809 = vmatmul.f32.gmra.mxu0 %v1788
      %v1810 = vpop.f32.mrf.mxu0
      %v1811 = vadd.f32 0.0, %v1810
      %1812 = vdwg.mxu0
      %v1814 = vsel %vm486, %v1452, 0
      %v1817 = vsel %vm486, %v1453, 0
      %1819 = vmatpush.msra.mxu0 0.0
      %1820 = vmatpush.msra.mxu0 0.0
      %1821 = vmatpush.msra.mxu0 0.0
      %1822 = vmatpush.msra.mxu0 0.0
      %1823 = vmatpush.msra.mxu0 0.0
      %1824 = vmatpush.msra.mxu0 0.0
      %1825 = vmatpush.msra.mxu0 0.0
      %1826 = vmatpush.msra.mxu0 0.0
      %1827 = vmatpush.msra.mxu0 0.0
      %1828 = vmatpush.msra.mxu0 0.0
      %1829 = vmatpush.msra.mxu0 0.0
      %1830 = vmatpush.msra.mxu0 0.0
      %1831 = vmatpush.msra.mxu0 0.0
      %1832 = vmatpush.msra.mxu0 0.0
      %1833 = vmatpush.msra.mxu0 %v1389
      %1834 = vmatpush.msra.mxu0 %v1388
      %1835 = vmatmul.f32.gmra.mxu0 %v1814
      %v1836 = vpop.f32.mrf.mxu0
      %v1837 = vadd.f32 0.0, %v1836
      %1838 = vmatmul.f32.gmra.mxu0 %v1817
      %v1839 = vpop.f32.mrf.mxu0
      %v1840 = vadd.f32 0.0, %v1839
      %1841 = vdwg.mxu0
      %v1843 = vsel %vm486, %v1454, 0
      %v1846 = vsel %vm486, %v1455, 0
      %1848 = vmatpush.msra.mxu0 0.0
      %1849 = vmatpush.msra.mxu0 0.0
      %1850 = vmatpush.msra.mxu0 0.0
      %1851 = vmatpush.msra.mxu0 0.0
      %1852 = vmatpush.msra.mxu0 0.0
      %1853 = vmatpush.msra.mxu0 0.0
      %1854 = vmatpush.msra.mxu0 0.0
      %1855 = vmatpush.msra.mxu0 0.0
      %1856 = vmatpush.msra.mxu0 0.0
      %1857 = vmatpush.msra.mxu0 0.0
      %1858 = vmatpush.msra.mxu0 0.0
      %1859 = vmatpush.msra.mxu0 0.0
      %1860 = vmatpush.msra.mxu0 0.0
      %1861 = vmatpush.msra.mxu0 0.0
      %1862 = vmatpush.msra.mxu0 %v1391
      %1863 = vmatpush.msra.mxu0 %v1390
      %1864 = vmatmul.f32.gmra.mxu0 %v1843
      %v1865 = vpop.f32.mrf.mxu0
      %v1866 = vadd.f32 0.0, %v1865
      %1867 = vmatmul.f32.gmra.mxu0 %v1846
      %v1868 = vpop.f32.mrf.mxu0
      %v1869 = vadd.f32 0.0, %v1868
      %1870 = vdwg.mxu0
      %v1872 = vsel %vm486, %v1456, 0
      %v1875 = vsel %vm486, %v1457, 0
      %1877 = vmatpush.msra.mxu0 0.0
      %1878 = vmatpush.msra.mxu0 0.0
      %1879 = vmatpush.msra.mxu0 0.0
      %1880 = vmatpush.msra.mxu0 0.0
      %1881 = vmatpush.msra.mxu0 0.0
      %1882 = vmatpush.msra.mxu0 0.0
      %1883 = vmatpush.msra.mxu0 0.0
      %1884 = vmatpush.msra.mxu0 0.0
      %1885 = vmatpush.msra.mxu0 0.0
      %1886 = vmatpush.msra.mxu0 0.0
      %1887 = vmatpush.msra.mxu0 0.0
      %1888 = vmatpush.msra.mxu0 0.0
      %1889 = vmatpush.msra.mxu0 0.0
      %1890 = vmatpush.msra.mxu0 0.0
      %1891 = vmatpush.msra.mxu0 %v1393
      %1892 = vmatpush.msra.mxu0 %v1392
      %1893 = vmatmul.f32.gmra.mxu0 %v1872
      %v1894 = vpop.f32.mrf.mxu0
      %v1895 = vadd.f32 0.0, %v1894
      %1896 = vmatmul.f32.gmra.mxu0 %v1875
      %v1897 = vpop.f32.mrf.mxu0
      %v1898 = vadd.f32 0.0, %v1897
      %1899 = vdwg.mxu0
      %v1901 = vsel %vm486, %v1458, 0
      %v1904 = vsel %vm486, %v1459, 0
      %1906 = vmatpush.msra.mxu0 0.0
      %1907 = vmatpush.msra.mxu0 0.0
      %1908 = vmatpush.msra.mxu0 0.0
      %1909 = vmatpush.msra.mxu0 0.0
      %1910 = vmatpush.msra.mxu0 0.0
      %1911 = vmatpush.msra.mxu0 0.0
      %1912 = vmatpush.msra.mxu0 0.0
      %1913 = vmatpush.msra.mxu0 0.0
      %1914 = vmatpush.msra.mxu0 0.0
      %1915 = vmatpush.msra.mxu0 0.0
      %1916 = vmatpush.msra.mxu0 0.0
      %1917 = vmatpush.msra.mxu0 0.0
      %1918 = vmatpush.msra.mxu0 0.0
      %1919 = vmatpush.msra.mxu0 0.0
      %1920 = vmatpush.msra.mxu0 %v1395
      %1921 = vmatpush.msra.mxu0 %v1394
      %1922 = vmatmul.f32.gmra.mxu0 %v1901
      %v1923 = vpop.f32.mrf.mxu0
      %v1924 = vadd.f32 0.0, %v1923
      %1925 = vmatmul.f32.gmra.mxu0 %v1904
      %v1926 = vpop.f32.mrf.mxu0
      %v1927 = vadd.f32 0.0, %v1926
      %1928 = vdwg.mxu0
      %v1930 = vsel %vm486, %v1460, 0
      %v1933 = vsel %vm486, %v1461, 0
      %1935 = vmatpush.msra.mxu0 0.0
      %1936 = vmatpush.msra.mxu0 0.0
      %1937 = vmatpush.msra.mxu0 0.0
      %1938 = vmatpush.msra.mxu0 0.0
      %1939 = vmatpush.msra.mxu0 0.0
      %1940 = vmatpush.msra.mxu0 0.0
      %1941 = vmatpush.msra.mxu0 0.0
      %1942 = vmatpush.msra.mxu0 0.0
      %1943 = vmatpush.msra.mxu0 0.0
      %1944 = vmatpush.msra.mxu0 0.0
      %1945 = vmatpush.msra.mxu0 0.0
      %1946 = vmatpush.msra.mxu0 0.0
      %1947 = vmatpush.msra.mxu0 0.0
      %1948 = vmatpush.msra.mxu0 0.0
      %1949 = vmatpush.msra.mxu0 %v1397
      %1950 = vmatpush.msra.mxu0 %v1396
      %1951 = vmatmul.f32.gmra.mxu0 %v1930
      %v1952 = vpop.f32.mrf.mxu0
      %v1953 = vadd.f32 0.0, %v1952
      %1954 = vmatmul.f32.gmra.mxu0 %v1933
      %v1955 = vpop.f32.mrf.mxu0
      %v1956 = vadd.f32 0.0, %v1955
      %1957 = vdwg.mxu0
      %v1959 = vsel %vm486, %v1462, 0
      %v1962 = vsel %vm486, %v1463, 0
      %1964 = vmatpush.msra.mxu0 0.0
      %1965 = vmatpush.msra.mxu0 0.0
      %1966 = vmatpush.msra.mxu0 0.0
      %1967 = vmatpush.msra.mxu0 0.0
      %1968 = vmatpush.msra.mxu0 0.0
      %1969 = vmatpush.msra.mxu0 0.0
      %1970 = vmatpush.msra.mxu0 0.0
      %1971 = vmatpush.msra.mxu0 0.0
      %1972 = vmatpush.msra.mxu0 0.0
      %1973 = vmatpush.msra.mxu0 0.0
      %1974 = vmatpush.msra.mxu0 0.0
      %1975 = vmatpush.msra.mxu0 0.0
      %1976 = vmatpush.msra.mxu0 0.0
      %1977 = vmatpush.msra.mxu0 0.0
      %1978 = vmatpush.msra.mxu0 %v1399
      %1979 = vmatpush.msra.mxu0 %v1398
      %1980 = vmatmul.f32.gmra.mxu0 %v1959
      %v1981 = vpop.f32.mrf.mxu0
      %v1982 = vadd.f32 0.0, %v1981
      %1983 = vmatmul.f32.gmra.mxu0 %v1962
      %v1984 = vpop.f32.mrf.mxu0
      %v1985 = vadd.f32 0.0, %v1984
      %1986 = vdwg.mxu0
      %v1988 = vsel %vm486, %v1464, 0
      %v1991 = vsel %vm486, %v1465, 0
      %1993 = vmatpush.msra.mxu0 0.0
      %1994 = vmatpush.msra.mxu0 0.0
      %1995 = vmatpush.msra.mxu0 0.0
      %1996 = vmatpush.msra.mxu0 0.0
      %1997 = vmatpush.msra.mxu0 0.0
      %1998 = vmatpush.msra.mxu0 0.0
      %1999 = vmatpush.msra.mxu0 0.0
      %2000 = vmatpush.msra.mxu0 0.0
      %2001 = vmatpush.msra.mxu0 0.0
      %2002 = vmatpush.msra.mxu0 0.0
      %2003 = vmatpush.msra.mxu0 0.0
      %2004 = vmatpush.msra.mxu0 0.0
      %2005 = vmatpush.msra.mxu0 0.0
      %2006 = vmatpush.msra.mxu0 0.0
      %2007 = vmatpush.msra.mxu0 %v1401
      %2008 = vmatpush.msra.mxu0 %v1400
      %2009 = vmatmul.f32.gmra.mxu0 %v1988
      %v2010 = vpop.f32.mrf.mxu0
      %v2011 = vadd.f32 0.0, %v2010
      %2012 = vmatmul.f32.gmra.mxu0 %v1991
      %v2013 = vpop.f32.mrf.mxu0
      %v2014 = vadd.f32 0.0, %v2013
      %2015 = vdwg.mxu0
      %v2017 = vsel %vm486, %v1466, 0
      %v2020 = vsel %vm486, %v1467, 0
      %2022 = vmatpush.msra.mxu0 0.0
      %2023 = vmatpush.msra.mxu0 0.0
      %2024 = vmatpush.msra.mxu0 0.0
      %2025 = vmatpush.msra.mxu0 0.0
      %2026 = vmatpush.msra.mxu0 0.0
      %2027 = vmatpush.msra.mxu0 0.0
      %2028 = vmatpush.msra.mxu0 0.0
      %2029 = vmatpush.msra.mxu0 0.0
      %2030 = vmatpush.msra.mxu0 0.0
      %2031 = vmatpush.msra.mxu0 0.0
      %2032 = vmatpush.msra.mxu0 0.0
      %2033 = vmatpush.msra.mxu0 0.0
      %2034 = vmatpush.msra.mxu0 0.0
      %2035 = vmatpush.msra.mxu0 0.0
      %2036 = vmatpush.msra.mxu0 %v1403
      %2037 = vmatpush.msra.mxu0 %v1402
      %2038 = vmatmul.f32.gmra.mxu0 %v2017
      %v2039 = vpop.f32.mrf.mxu0
      %v2040 = vadd.f32 0.0, %v2039
      %2041 = vmatmul.f32.gmra.mxu0 %v2020
      %v2042 = vpop.f32.mrf.mxu0
      %v2043 = vadd.f32 0.0, %v2042
      %2044 = vdwg.mxu0
      %v2046 = vsel %vm486, %v1468, 0
      %v2049 = vsel %vm486, %v1469, 0
      %2051 = vmatpush.msra.mxu0 0.0
      %2052 = vmatpush.msra.mxu0 0.0
      %2053 = vmatpush.msra.mxu0 0.0
      %2054 = vmatpush.msra.mxu0 0.0
      %2055 = vmatpush.msra.mxu0 0.0
      %2056 = vmatpush.msra.mxu0 0.0
      %2057 = vmatpush.msra.mxu0 0.0
      %2058 = vmatpush.msra.mxu0 0.0
      %2059 = vmatpush.msra.mxu0 0.0
      %2060 = vmatpush.msra.mxu0 0.0
      %2061 = vmatpush.msra.mxu0 0.0
      %2062 = vmatpush.msra.mxu0 0.0
      %2063 = vmatpush.msra.mxu0 0.0
      %2064 = vmatpush.msra.mxu0 0.0
      %2065 = vmatpush.msra.mxu0 %v1405
      %2066 = vmatpush.msra.mxu0 %v1404
      %2067 = vmatmul.f32.gmra.mxu0 %v2046
      %v2068 = vpop.f32.mrf.mxu0
      %v2069 = vadd.f32 0.0, %v2068
      %2070 = vmatmul.f32.gmra.mxu0 %v2049
      %v2071 = vpop.f32.mrf.mxu0
      %v2072 = vadd.f32 0.0, %v2071
      %2073 = vdwg.mxu0
      %v2075 = vsel %vm486, %v1470, 0
      %v2078 = vsel %vm486, %v1471, 0
      %2080 = vmatpush.msra.mxu0 0.0
      %2081 = vmatpush.msra.mxu0 0.0
      %2082 = vmatpush.msra.mxu0 0.0
      %2083 = vmatpush.msra.mxu0 0.0
      %2084 = vmatpush.msra.mxu0 0.0
      %2085 = vmatpush.msra.mxu0 0.0
      %2086 = vmatpush.msra.mxu0 0.0
      %2087 = vmatpush.msra.mxu0 0.0
      %2088 = vmatpush.msra.mxu0 0.0
      %2089 = vmatpush.msra.mxu0 0.0
      %2090 = vmatpush.msra.mxu0 0.0
      %2091 = vmatpush.msra.mxu0 0.0
      %2092 = vmatpush.msra.mxu0 0.0
      %2093 = vmatpush.msra.mxu0 0.0
      %2094 = vmatpush.msra.mxu0 %v1407
      %2095 = vmatpush.msra.mxu0 %v1406
      %2096 = vmatmul.f32.gmra.mxu0 %v2075
      %v2097 = vpop.f32.mrf.mxu0
      %v2098 = vadd.f32 0.0, %v2097
      %2099 = vmatmul.f32.gmra.mxu0 %v2078
      %v2100 = vpop.f32.mrf.mxu0
      %v2101 = vadd.f32 0.0, %v2100
      %2102 = vdwg.mxu0
      %v2104 = vsel %vm486, %v1472, 0
      %v2107 = vsel %vm486, %v1473, 0
      %2109 = vmatpush.msra.mxu0 0.0
      %2110 = vmatpush.msra.mxu0 0.0
      %2111 = vmatpush.msra.mxu0 0.0
      %2112 = vmatpush.msra.mxu0 0.0
      %2113 = vmatpush.msra.mxu0 0.0
      %2114 = vmatpush.msra.mxu0 0.0
      %2115 = vmatpush.msra.mxu0 0.0
      %2116 = vmatpush.msra.mxu0 0.0
      %2117 = vmatpush.msra.mxu0 0.0
      %2118 = vmatpush.msra.mxu0 0.0
      %2119 = vmatpush.msra.mxu0 0.0
      %2120 = vmatpush.msra.mxu0 0.0
      %2121 = vmatpush.msra.mxu0 0.0
      %2122 = vmatpush.msra.mxu0 0.0
      %2123 = vmatpush.msra.mxu0 %v1409
      %2124 = vmatpush.msra.mxu0 %v1408
      %2125 = vmatmul.f32.gmra.mxu0 %v2104
      %v2126 = vpop.f32.mrf.mxu0
      %v2127 = vadd.f32 0.0, %v2126
      %2128 = vmatmul.f32.gmra.mxu0 %v2107
      %v2129 = vpop.f32.mrf.mxu0
      %v2130 = vadd.f32 0.0, %v2129
      %2131 = vdwg.mxu0
      %v2133 = vsel %vm486, %v1474, 0
      %v2136 = vsel %vm486, %v1475, 0
      %2138 = vmatpush.msra.mxu0 0.0
      %2139 = vmatpush.msra.mxu0 0.0
      %2140 = vmatpush.msra.mxu0 0.0
      %2141 = vmatpush.msra.mxu0 0.0
      %2142 = vmatpush.msra.mxu0 0.0
      %2143 = vmatpush.msra.mxu0 0.0
      %2144 = vmatpush.msra.mxu0 0.0
      %2145 = vmatpush.msra.mxu0 0.0
      %2146 = vmatpush.msra.mxu0 0.0
      %2147 = vmatpush.msra.mxu0 0.0
      %2148 = vmatpush.msra.mxu0 0.0
      %2149 = vmatpush.msra.mxu0 0.0
      %2150 = vmatpush.msra.mxu0 0.0
      %2151 = vmatpush.msra.mxu0 0.0
      %2152 = vmatpush.msra.mxu0 %v1411
      %2153 = vmatpush.msra.mxu0 %v1410
      %2154 = vmatmul.f32.gmra.mxu0 %v2133
      %v2155 = vpop.f32.mrf.mxu0
      %v2156 = vadd.f32 0.0, %v2155
      %2157 = vmatmul.f32.gmra.mxu0 %v2136
      %v2158 = vpop.f32.mrf.mxu0
      %v2159 = vadd.f32 0.0, %v2158
      %2160 = vdwg.mxu0
      %v2162 = vsel %vm486, %v1476, 0
      %v2165 = vsel %vm486, %v1477, 0
      %2167 = vmatpush.msra.mxu0 0.0
      %2168 = vmatpush.msra.mxu0 0.0
      %2169 = vmatpush.msra.mxu0 0.0
      %2170 = vmatpush.msra.mxu0 0.0
      %2171 = vmatpush.msra.mxu0 0.0
      %2172 = vmatpush.msra.mxu0 0.0
      %2173 = vmatpush.msra.mxu0 0.0
      %2174 = vmatpush.msra.mxu0 0.0
      %2175 = vmatpush.msra.mxu0 0.0
      %2176 = vmatpush.msra.mxu0 0.0
      %2177 = vmatpush.msra.mxu0 0.0
      %2178 = vmatpush.msra.mxu0 0.0
      %2179 = vmatpush.msra.mxu0 0.0
      %2180 = vmatpush.msra.mxu0 0.0
      %2181 = vmatpush.msra.mxu0 %v1413
      %2182 = vmatpush.msra.mxu0 %v1412
      %2183 = vmatmul.f32.gmra.mxu0 %v2162
      %v2184 = vpop.f32.mrf.mxu0
      %v2185 = vadd.f32 0.0, %v2184
      %2186 = vmatmul.f32.gmra.mxu0 %v2165
      %v2187 = vpop.f32.mrf.mxu0
      %v2188 = vadd.f32 0.0, %v2187
      %2189 = vdwg.mxu0
      %v2191 = vsel %vm486, %v1478, 0
      %v2194 = vsel %vm486, %v1479, 0
      %2196 = vmatpush.msra.mxu0 0.0
      %2197 = vmatpush.msra.mxu0 0.0
      %2198 = vmatpush.msra.mxu0 0.0
      %2199 = vmatpush.msra.mxu0 0.0
      %2200 = vmatpush.msra.mxu0 0.0
      %2201 = vmatpush.msra.mxu0 0.0
      %2202 = vmatpush.msra.mxu0 0.0
      %2203 = vmatpush.msra.mxu0 0.0
      %2204 = vmatpush.msra.mxu0 0.0
      %2205 = vmatpush.msra.mxu0 0.0
      %2206 = vmatpush.msra.mxu0 0.0
      %2207 = vmatpush.msra.mxu0 0.0
      %2208 = vmatpush.msra.mxu0 0.0
      %2209 = vmatpush.msra.mxu0 0.0
      %2210 = vmatpush.msra.mxu0 %v1415
      %2211 = vmatpush.msra.mxu0 %v1414
      %2212 = vmatmul.f32.gmra.mxu0 %v2191
      %v2213 = vpop.f32.mrf.mxu0
      %v2214 = vadd.f32 0.0, %v2213
      %2215 = vmatmul.f32.gmra.mxu0 %v2194
      %v2216 = vpop.f32.mrf.mxu0
      %v2217 = vadd.f32 0.0, %v2216
      %2218 = vdwg.mxu0
      %v2220 = vsel %vm486, %v1480, 0
      %v2223 = vsel %vm486, %v1481, 0
      %2225 = vmatpush.msra.mxu0 0.0
      %2226 = vmatpush.msra.mxu0 0.0
      %2227 = vmatpush.msra.mxu0 0.0
      %2228 = vmatpush.msra.mxu0 0.0
      %2229 = vmatpush.msra.mxu0 0.0
      %2230 = vmatpush.msra.mxu0 0.0
      %2231 = vmatpush.msra.mxu0 0.0
      %2232 = vmatpush.msra.mxu0 0.0
      %2233 = vmatpush.msra.mxu0 0.0
      %2234 = vmatpush.msra.mxu0 0.0
      %2235 = vmatpush.msra.mxu0 0.0
      %2236 = vmatpush.msra.mxu0 0.0
      %2237 = vmatpush.msra.mxu0 0.0
      %2238 = vmatpush.msra.mxu0 0.0
      %2239 = vmatpush.msra.mxu0 %v1417
      %2240 = vmatpush.msra.mxu0 %v1416
      %2241 = vmatmul.f32.gmra.mxu0 %v2220
      %v2242 = vpop.f32.mrf.mxu0
      %v2243 = vadd.f32 0.0, %v2242
      %2244 = vmatmul.f32.gmra.mxu0 %v2223
      %v2245 = vpop.f32.mrf.mxu0
      %v2246 = vadd.f32 0.0, %v2245
      %2247 = vdwg.mxu0
      %v2249 = vsel %vm486, %v1482, 0
      %v2252 = vsel %vm486, %v1483, 0
      %2254 = vmatpush.msra.mxu0 0.0
      %2255 = vmatpush.msra.mxu0 0.0
      %2256 = vmatpush.msra.mxu0 0.0
      %2257 = vmatpush.msra.mxu0 0.0
      %2258 = vmatpush.msra.mxu0 0.0
      %2259 = vmatpush.msra.mxu0 0.0
      %2260 = vmatpush.msra.mxu0 0.0
      %2261 = vmatpush.msra.mxu0 0.0
      %2262 = vmatpush.msra.mxu0 0.0
      %2263 = vmatpush.msra.mxu0 0.0
      %2264 = vmatpush.msra.mxu0 0.0
      %2265 = vmatpush.msra.mxu0 0.0
      %2266 = vmatpush.msra.mxu0 0.0
      %2267 = vmatpush.msra.mxu0 0.0
      %2268 = vmatpush.msra.mxu0 %v1419
      %2269 = vmatpush.msra.mxu0 %v1418
      %2270 = vmatmul.f32.gmra.mxu0 %v2249
      %v2271 = vpop.f32.mrf.mxu0
      %v2272 = vadd.f32 0.0, %v2271
      %2273 = vmatmul.f32.gmra.mxu0 %v2252
      %v2274 = vpop.f32.mrf.mxu0
      %v2275 = vadd.f32 0.0, %v2274
      %2276 = vdwg.mxu0
      %v2278 = vsel %vm486, %v1484, 0
      %v2281 = vsel %vm486, %v1485, 0
      %2283 = vmatpush.msra.mxu0 0.0
      %2284 = vmatpush.msra.mxu0 0.0
      %2285 = vmatpush.msra.mxu0 0.0
      %2286 = vmatpush.msra.mxu0 0.0
      %2287 = vmatpush.msra.mxu0 0.0
      %2288 = vmatpush.msra.mxu0 0.0
      %2289 = vmatpush.msra.mxu0 0.0
      %2290 = vmatpush.msra.mxu0 0.0
      %2291 = vmatpush.msra.mxu0 0.0
      %2292 = vmatpush.msra.mxu0 0.0
      %2293 = vmatpush.msra.mxu0 0.0
      %2294 = vmatpush.msra.mxu0 0.0
      %2295 = vmatpush.msra.mxu0 0.0
      %2296 = vmatpush.msra.mxu0 0.0
      %2297 = vmatpush.msra.mxu0 %v1421
      %2298 = vmatpush.msra.mxu0 %v1420
      %2299 = vmatmul.f32.gmra.mxu0 %v2278
      %v2300 = vpop.f32.mrf.mxu0
      %v2301 = vadd.f32 0.0, %v2300
      %2302 = vmatmul.f32.gmra.mxu0 %v2281
      %v2303 = vpop.f32.mrf.mxu0
      %v2304 = vadd.f32 0.0, %v2303
      %2305 = vdwg.mxu0
      %v2307 = vsel %vm486, %v1486, 0
      %v2310 = vsel %vm486, %v1487, 0
      %2312 = vmatpush.msra.mxu0 0.0
      %2313 = vmatpush.msra.mxu0 0.0
      %2314 = vmatpush.msra.mxu0 0.0
      %2315 = vmatpush.msra.mxu0 0.0
      %2316 = vmatpush.msra.mxu0 0.0
      %2317 = vmatpush.msra.mxu0 0.0
      %2318 = vmatpush.msra.mxu0 0.0
      %2319 = vmatpush.msra.mxu0 0.0
      %2320 = vmatpush.msra.mxu0 0.0
      %2321 = vmatpush.msra.mxu0 0.0
      %2322 = vmatpush.msra.mxu0 0.0
      %2323 = vmatpush.msra.mxu0 0.0
      %2324 = vmatpush.msra.mxu0 0.0
      %2325 = vmatpush.msra.mxu0 0.0
      %2326 = vmatpush.msra.mxu0 %v1423
      %2327 = vmatpush.msra.mxu0 %v1422
      %2328 = vmatmul.f32.gmra.mxu0 %v2307
      %v2329 = vpop.f32.mrf.mxu0
      %v2330 = vadd.f32 0.0, %v2329
      %2331 = vmatmul.f32.gmra.mxu0 %v2310
      %v2332 = vpop.f32.mrf.mxu0
      %v2333 = vadd.f32 0.0, %v2332
      %2334 = vdwg.mxu0
      %v2336 = vsel %vm486, %v1488, 0
      %v2339 = vsel %vm486, %v1489, 0
      %2341 = vmatpush.msra.mxu0 0.0
      %2342 = vmatpush.msra.mxu0 0.0
      %2343 = vmatpush.msra.mxu0 0.0
      %2344 = vmatpush.msra.mxu0 0.0
      %2345 = vmatpush.msra.mxu0 0.0
      %2346 = vmatpush.msra.mxu0 0.0
      %2347 = vmatpush.msra.mxu0 0.0
      %2348 = vmatpush.msra.mxu0 0.0
      %2349 = vmatpush.msra.mxu0 0.0
      %2350 = vmatpush.msra.mxu0 0.0
      %2351 = vmatpush.msra.mxu0 0.0
      %2352 = vmatpush.msra.mxu0 0.0
      %2353 = vmatpush.msra.mxu0 0.0
      %2354 = vmatpush.msra.mxu0 0.0
      %2355 = vmatpush.msra.mxu0 %v1425
      %2356 = vmatpush.msra.mxu0 %v1424
      %2357 = vmatmul.f32.gmra.mxu0 %v2336
      %v2358 = vpop.f32.mrf.mxu0
      %v2359 = vadd.f32 0.0, %v2358
      %2360 = vmatmul.f32.gmra.mxu0 %v2339
      %v2361 = vpop.f32.mrf.mxu0
      %v2362 = vadd.f32 0.0, %v2361
      %2363 = vdwg.mxu0
      %v2365 = vsel %vm486, %v1490, 0
      %v2368 = vsel %vm486, %v1491, 0
      %2370 = vmatpush.msra.mxu0 0.0
      %2371 = vmatpush.msra.mxu0 0.0
      %2372 = vmatpush.msra.mxu0 0.0
      %2373 = vmatpush.msra.mxu0 0.0
      %2374 = vmatpush.msra.mxu0 0.0
      %2375 = vmatpush.msra.mxu0 0.0
      %2376 = vmatpush.msra.mxu0 0.0
      %2377 = vmatpush.msra.mxu0 0.0
      %2378 = vmatpush.msra.mxu0 0.0
      %2379 = vmatpush.msra.mxu0 0.0
      %2380 = vmatpush.msra.mxu0 0.0
      %2381 = vmatpush.msra.mxu0 0.0
      %2382 = vmatpush.msra.mxu0 0.0
      %2383 = vmatpush.msra.mxu0 0.0
      %2384 = vmatpush.msra.mxu0 %v1427
      %2385 = vmatpush.msra.mxu0 %v1426
      %2386 = vmatmul.f32.gmra.mxu0 %v2365
      %v2387 = vpop.f32.mrf.mxu0
      %v2388 = vadd.f32 0.0, %v2387
      %2389 = vmatmul.f32.gmra.mxu0 %v2368
      %v2390 = vpop.f32.mrf.mxu0
      %v2391 = vadd.f32 0.0, %v2390
      %2392 = vdwg.mxu0
      %v2394 = vsel %vm486, %v1492, 0
      %v2397 = vsel %vm486, %v1493, 0
      %2399 = vmatpush.msra.mxu0 0.0
      %2400 = vmatpush.msra.mxu0 0.0
      %2401 = vmatpush.msra.mxu0 0.0
      %2402 = vmatpush.msra.mxu0 0.0
      %2403 = vmatpush.msra.mxu0 0.0
      %2404 = vmatpush.msra.mxu0 0.0
      %2405 = vmatpush.msra.mxu0 0.0
      %2406 = vmatpush.msra.mxu0 0.0
      %2407 = vmatpush.msra.mxu0 0.0
      %2408 = vmatpush.msra.mxu0 0.0
      %2409 = vmatpush.msra.mxu0 0.0
      %2410 = vmatpush.msra.mxu0 0.0
      %2411 = vmatpush.msra.mxu0 0.0
      %2412 = vmatpush.msra.mxu0 0.0
      %2413 = vmatpush.msra.mxu0 %v1429
      %2414 = vmatpush.msra.mxu0 %v1428
      %2415 = vmatmul.f32.gmra.mxu0 %v2394
      %v2416 = vpop.f32.mrf.mxu0
      %v2417 = vadd.f32 0.0, %v2416
      %2418 = vmatmul.f32.gmra.mxu0 %v2397
      %v2419 = vpop.f32.mrf.mxu0
      %v2420 = vadd.f32 0.0, %v2419
      %2421 = vdwg.mxu0
      %v2422 = vld [vmem:[%s6] sm:$0xff]
      %v2423 = vld [vmem:[%s6 + $0x8] sm:$0xff]
      %v2424 = vld [vmem:[%s6 + $0x10] sm:$0xff]
      %v2425 = vld [vmem:[%s6 + $0x18] sm:$0xff]
      %v2426 = vld [vmem:[%s6 + $0x20] sm:$0xff]
      %v2427 = vld [vmem:[%s6 + $0x28] sm:$0xff]
      %v2428 = vld [vmem:[%s6 + $0x30] sm:$0xff]
      %v2429 = vld [vmem:[%s6 + $0x38] sm:$0xff]
      %v2430 = vld [vmem:[%s7] sm:$0x1]
      %v2432 = vperm.slane %v2430, 0
      %v2435 = vsel %vm964, %v1518, 0
      %v2438 = vsel %vm964, %v1521, 0
      %v2441 = vsel %vm964, %v1547, 0
      %v2444 = vsel %vm964, %v1550, 0
      %v2447 = vsel %vm964, %v1576, 0
      %v2450 = vsel %vm964, %v1579, 0
      %v2453 = vsel %vm964, %v1605, 0
      %v2456 = vsel %vm964, %v1608, 0
      %v2459 = vsel %vm964, %v1634, 0
      %v2462 = vsel %vm964, %v1637, 0
      %v2465 = vsel %vm964, %v1663, 0
      %v2468 = vsel %vm964, %v1666, 0
      %v2471 = vsel %vm964, %v1692, 0
      %v2474 = vsel %vm964, %v1695, 0
      %v2477 = vsel %vm964, %v1721, 0
      %v2480 = vsel %vm964, %v1724, 0
      %v2483 = vsel %vm964, %v1750, 0
      %v2486 = vsel %vm964, %v1753, 0
      %v2489 = vsel %vm964, %v1779, 0
      %v2492 = vsel %vm964, %v1782, 0
      %v2495 = vsel %vm964, %v1808, 0
      %v2498 = vsel %vm964, %v1811, 0
      %v2501 = vsel %vm964, %v1837, 0
      %v2504 = vsel %vm964, %v1840, 0
      %v2507 = vsel %vm964, %v1866, 0
      %v2510 = vsel %vm964, %v1869, 0
      %v2513 = vsel %vm964, %v1895, 0
      %v2516 = vsel %vm964, %v1898, 0
      %v2519 = vsel %vm964, %v1924, 0
      %v2522 = vsel %vm964, %v1927, 0
      %v2525 = vsel %vm964, %v1953, 0
      %v2528 = vsel %vm964, %v1956, 0
      %v2531 = vsel %vm964, %v1982, 0
      %v2534 = vsel %vm964, %v1985, 0
      %v2537 = vsel %vm964, %v2011, 0
      %v2540 = vsel %vm964, %v2014, 0
      %v2543 = vsel %vm964, %v2040, 0
      %v2546 = vsel %vm964, %v2043, 0
      %v2549 = vsel %vm964, %v2069, 0
      %v2552 = vsel %vm964, %v2072, 0
      %v2555 = vsel %vm964, %v2098, 0
      %v2558 = vsel %vm964, %v2101, 0
      %v2561 = vsel %vm964, %v2127, 0
      %v2564 = vsel %vm964, %v2130, 0
      %v2567 = vsel %vm964, %v2156, 0
      %v2570 = vsel %vm964, %v2159, 0
      %v2573 = vsel %vm964, %v2185, 0
      %v2576 = vsel %vm964, %v2188, 0
      %v2579 = vsel %vm964, %v2214, 0
      %v2582 = vsel %vm964, %v2217, 0
      %v2585 = vsel %vm964, %v2243, 0
      %v2588 = vsel %vm964, %v2246, 0
      %v2591 = vsel %vm964, %v2272, 0
      %v2594 = vsel %vm964, %v2275, 0
      %v2597 = vsel %vm964, %v2301, 0
      %v2600 = vsel %vm964, %v2304, 0
      %v2603 = vsel %vm964, %v2330, 0
      %v2606 = vsel %vm964, %v2333, 0
      %v2609 = vsel %vm964, %v2359, 0
      %v2612 = vsel %vm964, %v2362, 0
      %v2615 = vsel %vm964, %v2388, 0
      %v2618 = vsel %vm964, %v2391, 0
      %v2621 = vsel %vm964, %v2417, 0
      %v2624 = vsel %vm964, %v2420, 0
      %2626 = vmatpush.msra.mxu0 0.0
      %2627 = vmatpush.msra.mxu0 0.0
      %2628 = vmatpush.msra.mxu0 0.0
      %2629 = vmatpush.msra.mxu0 0.0
      %2630 = vmatpush.msra.mxu0 0.0
      %2631 = vmatpush.msra.mxu0 0.0
      %2632 = vmatpush.msra.mxu0 0.0
      %2633 = vmatpush.msra.mxu0 0.0
      %2634 = vmatpush.msra.mxu0 %v2429
      %2635 = vmatpush.msra.mxu0 %v2428
      %2636 = vmatpush.msra.mxu0 %v2427
      %2637 = vmatpush.msra.mxu0 %v2426
      %2638 = vmatpush.msra.mxu0 %v2425
      %2639 = vmatpush.msra.mxu0 %v2424
      %2640 = vmatpush.msra.mxu0 %v2423
      %2641 = vmatpush.msra.mxu0 %v2422
      %2642 = vmatmul.f32.gmra.mxu0 %v2435
      %v2643 = vpop.f32.mrf.mxu0
      %v2644 = vadd.f32 %v2432, %v2643
      %2645 = vmatmul.f32.gmra.mxu0 %v2438
      %v2646 = vpop.f32.mrf.mxu0
      %v2647 = vadd.f32 %v2432, %v2646
      %2648 = vmatmul.f32.gmra.mxu0 %v2441
      %v2649 = vpop.f32.mrf.mxu0
      %v2650 = vadd.f32 %v2432, %v2649
      %2651 = vmatmul.f32.gmra.mxu0 %v2444
      %v2652 = vpop.f32.mrf.mxu0
      %v2653 = vadd.f32 %v2432, %v2652
      %2654 = vmatmul.f32.gmra.mxu0 %v2447
      %v2655 = vpop.f32.mrf.mxu0
      %v2656 = vadd.f32 %v2432, %v2655
      %2657 = vmatmul.f32.gmra.mxu0 %v2450
      %v2658 = vpop.f32.mrf.mxu0
      %v2659 = vadd.f32 %v2432, %v2658
      %2660 = vmatmul.f32.gmra.mxu0 %v2453
      %v2661 = vpop.f32.mrf.mxu0
      %v2662 = vadd.f32 %v2432, %v2661
      %2663 = vmatmul.f32.gmra.mxu0 %v2456
      %v2664 = vpop.f32.mrf.mxu0
      %v2665 = vadd.f32 %v2432, %v2664
      %2666 = vmatmul.f32.gmra.mxu0 %v2459
      %v2667 = vpop.f32.mrf.mxu0
      %v2668 = vadd.f32 %v2432, %v2667
      %2669 = vmatmul.f32.gmra.mxu0 %v2462
      %v2670 = vpop.f32.mrf.mxu0
      %v2671 = vadd.f32 %v2432, %v2670
      %2672 = vmatmul.f32.gmra.mxu0 %v2465
      %v2673 = vpop.f32.mrf.mxu0
      %v2674 = vadd.f32 %v2432, %v2673
      %2675 = vmatmul.f32.gmra.mxu0 %v2468
      %v2676 = vpop.f32.mrf.mxu0
      %v2677 = vadd.f32 %v2432, %v2676
      %2678 = vmatmul.f32.gmra.mxu0 %v2471
      %v2679 = vpop.f32.mrf.mxu0
      %v2680 = vadd.f32 %v2432, %v2679
      %2681 = vmatmul.f32.gmra.mxu0 %v2474
      %v2682 = vpop.f32.mrf.mxu0
      %v2683 = vadd.f32 %v2432, %v2682
      %2684 = vmatmul.f32.gmra.mxu0 %v2477
      %v2685 = vpop.f32.mrf.mxu0
      %v2686 = vadd.f32 %v2432, %v2685
      %2687 = vmatmul.f32.gmra.mxu0 %v2480
      %v2688 = vpop.f32.mrf.mxu0
      %v2689 = vadd.f32 %v2432, %v2688
      %2690 = vmatmul.f32.gmra.mxu0 %v2483
      %v2691 = vpop.f32.mrf.mxu0
      %v2692 = vadd.f32 %v2432, %v2691
      %2693 = vmatmul.f32.gmra.mxu0 %v2486
      %v2694 = vpop.f32.mrf.mxu0
      %v2695 = vadd.f32 %v2432, %v2694
      %2696 = vmatmul.f32.gmra.mxu0 %v2489
      %v2697 = vpop.f32.mrf.mxu0
      %v2698 = vadd.f32 %v2432, %v2697
      %2699 = vmatmul.f32.gmra.mxu0 %v2492
      %v2700 = vpop.f32.mrf.mxu0
      %v2701 = vadd.f32 %v2432, %v2700
      %2702 = vmatmul.f32.gmra.mxu0 %v2495
      %v2703 = vpop.f32.mrf.mxu0
      %v2704 = vadd.f32 %v2432, %v2703
      %2705 = vmatmul.f32.gmra.mxu0 %v2498
      %v2706 = vpop.f32.mrf.mxu0
      %v2707 = vadd.f32 %v2432, %v2706
      %2708 = vmatmul.f32.gmra.mxu0 %v2501
      %v2709 = vpop.f32.mrf.mxu0
      %v2710 = vadd.f32 %v2432, %v2709
      %2711 = vmatmul.f32.gmra.mxu0 %v2504
      %v2712 = vpop.f32.mrf.mxu0
      %v2713 = vadd.f32 %v2432, %v2712
      %2714 = vmatmul.f32.gmra.mxu0 %v2507
      %v2715 = vpop.f32.mrf.mxu0
      %v2716 = vadd.f32 %v2432, %v2715
      %2717 = vmatmul.f32.gmra.mxu0 %v2510
      %v2718 = vpop.f32.mrf.mxu0
      %v2719 = vadd.f32 %v2432, %v2718
      %2720 = vmatmul.f32.gmra.mxu0 %v2513
      %v2721 = vpop.f32.mrf.mxu0
      %v2722 = vadd.f32 %v2432, %v2721
      %2723 = vmatmul.f32.gmra.mxu0 %v2516
      %v2724 = vpop.f32.mrf.mxu0
      %v2725 = vadd.f32 %v2432, %v2724
      %2726 = vmatmul.f32.gmra.mxu0 %v2519
      %v2727 = vpop.f32.mrf.mxu0
      %v2728 = vadd.f32 %v2432, %v2727
      %2729 = vmatmul.f32.gmra.mxu0 %v2522
      %v2730 = vpop.f32.mrf.mxu0
      %v2731 = vadd.f32 %v2432, %v2730
      %2732 = vmatmul.f32.gmra.mxu0 %v2525
      %v2733 = vpop.f32.mrf.mxu0
      %v2734 = vadd.f32 %v2432, %v2733
      %2735 = vmatmul.f32.gmra.mxu0 %v2528
      %v2736 = vpop.f32.mrf.mxu0
      %v2737 = vadd.f32 %v2432, %v2736
      %2738 = vmatmul.f32.gmra.mxu0 %v2531
      %v2739 = vpop.f32.mrf.mxu0
      %v2740 = vadd.f32 %v2432, %v2739
      %2741 = vmatmul.f32.gmra.mxu0 %v2534
      %v2742 = vpop.f32.mrf.mxu0
      %v2743 = vadd.f32 %v2432, %v2742
      %2744 = vmatmul.f32.gmra.mxu0 %v2537
      %v2745 = vpop.f32.mrf.mxu0
      %v2746 = vadd.f32 %v2432, %v2745
      %2747 = vmatmul.f32.gmra.mxu0 %v2540
      %v2748 = vpop.f32.mrf.mxu0
      %v2749 = vadd.f32 %v2432, %v2748
      %2750 = vmatmul.f32.gmra.mxu0 %v2543
      %v2751 = vpop.f32.mrf.mxu0
      %v2752 = vadd.f32 %v2432, %v2751
      %2753 = vmatmul.f32.gmra.mxu0 %v2546
      %v2754 = vpop.f32.mrf.mxu0
      %v2755 = vadd.f32 %v2432, %v2754
      %2756 = vmatmul.f32.gmra.mxu0 %v2549
      %v2757 = vpop.f32.mrf.mxu0
      %v2758 = vadd.f32 %v2432, %v2757
      %2759 = vmatmul.f32.gmra.mxu0 %v2552
      %v2760 = vpop.f32.mrf.mxu0
      %v2761 = vadd.f32 %v2432, %v2760
      %2762 = vmatmul.f32.gmra.mxu0 %v2555
      %v2763 = vpop.f32.mrf.mxu0
      %v2764 = vadd.f32 %v2432, %v2763
      %2765 = vmatmul.f32.gmra.mxu0 %v2558
      %v2766 = vpop.f32.mrf.mxu0
      %v2767 = vadd.f32 %v2432, %v2766
      %2768 = vmatmul.f32.gmra.mxu0 %v2561
      %v2769 = vpop.f32.mrf.mxu0
      %v2770 = vadd.f32 %v2432, %v2769
      %2771 = vmatmul.f32.gmra.mxu0 %v2564
      %v2772 = vpop.f32.mrf.mxu0
      %v2773 = vadd.f32 %v2432, %v2772
      %2774 = vmatmul.f32.gmra.mxu0 %v2567
      %v2775 = vpop.f32.mrf.mxu0
      %v2776 = vadd.f32 %v2432, %v2775
      %2777 = vmatmul.f32.gmra.mxu0 %v2570
      %v2778 = vpop.f32.mrf.mxu0
      %v2779 = vadd.f32 %v2432, %v2778
      %2780 = vmatmul.f32.gmra.mxu0 %v2573
      %v2781 = vpop.f32.mrf.mxu0
      %v2782 = vadd.f32 %v2432, %v2781
      %2783 = vmatmul.f32.gmra.mxu0 %v2576
      %v2784 = vpop.f32.mrf.mxu0
      %v2785 = vadd.f32 %v2432, %v2784
      %2786 = vmatmul.f32.gmra.mxu0 %v2579
      %v2787 = vpop.f32.mrf.mxu0
      %v2788 = vadd.f32 %v2432, %v2787
      %2789 = vmatmul.f32.gmra.mxu0 %v2582
      %v2790 = vpop.f32.mrf.mxu0
      %v2791 = vadd.f32 %v2432, %v2790
      %2792 = vmatmul.f32.gmra.mxu0 %v2585
      %v2793 = vpop.f32.mrf.mxu0
      %v2794 = vadd.f32 %v2432, %v2793
      %2795 = vmatmul.f32.gmra.mxu0 %v2588
      %v2796 = vpop.f32.mrf.mxu0
      %v2797 = vadd.f32 %v2432, %v2796
      %2798 = vmatmul.f32.gmra.mxu0 %v2591
      %v2799 = vpop.f32.mrf.mxu0
      %v2800 = vadd.f32 %v2432, %v2799
      %2801 = vmatmul.f32.gmra.mxu0 %v2594
      %v2802 = vpop.f32.mrf.mxu0
      %v2803 = vadd.f32 %v2432, %v2802
      %2804 = vmatmul.f32.gmra.mxu0 %v2597
      %v2805 = vpop.f32.mrf.mxu0
      %v2806 = vadd.f32 %v2432, %v2805
      %2807 = vmatmul.f32.gmra.mxu0 %v2600
      %v2808 = vpop.f32.mrf.mxu0
      %v2809 = vadd.f32 %v2432, %v2808
      %2810 = vmatmul.f32.gmra.mxu0 %v2603
      %v2811 = vpop.f32.mrf.mxu0
      %v2812 = vadd.f32 %v2432, %v2811
      %2813 = vmatmul.f32.gmra.mxu0 %v2606
      %v2814 = vpop.f32.mrf.mxu0
      %v2815 = vadd.f32 %v2432, %v2814
      %2816 = vmatmul.f32.gmra.mxu0 %v2609
      %v2817 = vpop.f32.mrf.mxu0
      %v2818 = vadd.f32 %v2432, %v2817
      %2819 = vmatmul.f32.gmra.mxu0 %v2612
      %v2820 = vpop.f32.mrf.mxu0
      %v2821 = vadd.f32 %v2432, %v2820
      %2822 = vmatmul.f32.gmra.mxu0 %v2615
      %v2823 = vpop.f32.mrf.mxu0
      %v2824 = vadd.f32 %v2432, %v2823
      %2825 = vmatmul.f32.gmra.mxu0 %v2618
      %v2826 = vpop.f32.mrf.mxu0
      %v2827 = vadd.f32 %v2432, %v2826
      %2828 = vmatmul.f32.gmra.mxu0 %v2621
      %v2829 = vpop.f32.mrf.mxu0
      %v2830 = vadd.f32 %v2432, %v2829
      %2831 = vmatmul.f32.gmra.mxu0 %v2624
      %v2832 = vpop.f32.mrf.mxu0
      %v2833 = vadd.f32 %v2432, %v2832
      %2834 = vdwg.mxu0
      %2835 = vmatpush.msra.mxu0 0.0
      %2836 = vmatpush.msra.mxu0 0.0
      %2837 = vmatpush.msra.mxu0 0.0
      %2838 = vmatpush.msra.mxu0 0.0
      %2839 = vmatpush.msra.mxu0 0.0
      %2840 = vmatpush.msra.mxu0 0.0
      %2841 = vmatpush.msra.mxu0 0.0
      %2842 = vmatpush.msra.mxu0 0.0
      %2843 = vmatpush.msra.mxu0 0.0
      %2844 = vmatpush.msra.mxu0 0.0
      %2845 = vmatpush.msra.mxu0 0.0
      %2846 = vmatpush.msra.mxu0 0.0
      %2847 = vmatpush.msra.mxu0 0.0
      %2848 = vmatpush.msra.mxu0 0.0
      %2849 = vmatpush.msra.mxu0 %v2647
      %2850 = vmatpush.msra.mxu0 %v2644
      %2851 = vmatmul.f32.gmra.mxu0 %v1495
      %v2852 = vpop.f32.mrf.mxu0
      %v2853 = vadd.f32 0.0, %v2852
      %2854 = vmatmul.f32.gmra.mxu0 %v1498
      %v2855 = vpop.f32.mrf.mxu0
      %v2856 = vadd.f32 0.0, %v2855
      %2857 = vdwg.mxu0
      %2858 = vmatpush.msra.mxu0 0.0
      %2859 = vmatpush.msra.mxu0 0.0
      %2860 = vmatpush.msra.mxu0 0.0
      %2861 = vmatpush.msra.mxu0 0.0
      %2862 = vmatpush.msra.mxu0 0.0
      %2863 = vmatpush.msra.mxu0 0.0
      %2864 = vmatpush.msra.mxu0 0.0
      %2865 = vmatpush.msra.mxu0 0.0
      %2866 = vmatpush.msra.mxu0 0.0
      %2867 = vmatpush.msra.mxu0 0.0
      %2868 = vmatpush.msra.mxu0 0.0
      %2869 = vmatpush.msra.mxu0 0.0
      %2870 = vmatpush.msra.mxu0 0.0
      %2871 = vmatpush.msra.mxu0 0.0
      %2872 = vmatpush.msra.mxu0 %v2653
      %2873 = vmatpush.msra.mxu0 %v2650
      %2874 = vmatmul.f32.gmra.mxu0 %v1524
      %v2875 = vpop.f32.mrf.mxu0
      %v2876 = vadd.f32 0.0, %v2875
      %2877 = vmatmul.f32.gmra.mxu0 %v1527
      %v2878 = vpop.f32.mrf.mxu0
      %v2879 = vadd.f32 0.0, %v2878
      %2880 = vdwg.mxu0
      %2881 = vmatpush.msra.mxu0 0.0
      %2882 = vmatpush.msra.mxu0 0.0
      %2883 = vmatpush.msra.mxu0 0.0
      %2884 = vmatpush.msra.mxu0 0.0
      %2885 = vmatpush.msra.mxu0 0.0
      %2886 = vmatpush.msra.mxu0 0.0
      %2887 = vmatpush.msra.mxu0 0.0
      %2888 = vmatpush.msra.mxu0 0.0
      %2889 = vmatpush.msra.mxu0 0.0
      %2890 = vmatpush.msra.mxu0 0.0
      %2891 = vmatpush.msra.mxu0 0.0
      %2892 = vmatpush.msra.mxu0 0.0
      %2893 = vmatpush.msra.mxu0 0.0
      %2894 = vmatpush.msra.mxu0 0.0
      %2895 = vmatpush.msra.mxu0 %v2659
      %2896 = vmatpush.msra.mxu0 %v2656
      %2897 = vmatmul.f32.gmra.mxu0 %v1553
      %v2898 = vpop.f32.mrf.mxu0
      %v2899 = vadd.f32 0.0, %v2898
      %2900 = vmatmul.f32.gmra.mxu0 %v1556
      %v2901 = vpop.f32.mrf.mxu0
      %v2902 = vadd.f32 0.0, %v2901
      %2903 = vdwg.mxu0
      %2904 = vmatpush.msra.mxu0 0.0
      %2905 = vmatpush.msra.mxu0 0.0
      %2906 = vmatpush.msra.mxu0 0.0
      %2907 = vmatpush.msra.mxu0 0.0
      %2908 = vmatpush.msra.mxu0 0.0
      %2909 = vmatpush.msra.mxu0 0.0
      %2910 = vmatpush.msra.mxu0 0.0
      %2911 = vmatpush.msra.mxu0 0.0
      %2912 = vmatpush.msra.mxu0 0.0
      %2913 = vmatpush.msra.mxu0 0.0
      %2914 = vmatpush.msra.mxu0 0.0
      %2915 = vmatpush.msra.mxu0 0.0
      %2916 = vmatpush.msra.mxu0 0.0
      %2917 = vmatpush.msra.mxu0 0.0
      %2918 = vmatpush.msra.mxu0 %v2665
      %2919 = vmatpush.msra.mxu0 %v2662
      %2920 = vmatmul.f32.gmra.mxu0 %v1582
      %v2921 = vpop.f32.mrf.mxu0
      %v2922 = vadd.f32 0.0, %v2921
      %2923 = vmatmul.f32.gmra.mxu0 %v1585
      %v2924 = vpop.f32.mrf.mxu0
      %v2925 = vadd.f32 0.0, %v2924
      %2926 = vdwg.mxu0
      %2927 = vmatpush.msra.mxu0 0.0
      %2928 = vmatpush.msra.mxu0 0.0
      %2929 = vmatpush.msra.mxu0 0.0
      %2930 = vmatpush.msra.mxu0 0.0
      %2931 = vmatpush.msra.mxu0 0.0
      %2932 = vmatpush.msra.mxu0 0.0
      %2933 = vmatpush.msra.mxu0 0.0
      %2934 = vmatpush.msra.mxu0 0.0
      %2935 = vmatpush.msra.mxu0 0.0
      %2936 = vmatpush.msra.mxu0 0.0
      %2937 = vmatpush.msra.mxu0 0.0
      %2938 = vmatpush.msra.mxu0 0.0
      %2939 = vmatpush.msra.mxu0 0.0
      %2940 = vmatpush.msra.mxu0 0.0
      %2941 = vmatpush.msra.mxu0 %v2671
      %2942 = vmatpush.msra.mxu0 %v2668
      %2943 = vmatmul.f32.gmra.mxu0 %v1611
      %v2944 = vpop.f32.mrf.mxu0
      %v2945 = vadd.f32 0.0, %v2944
      %2946 = vmatmul.f32.gmra.mxu0 %v1614
      %v2947 = vpop.f32.mrf.mxu0
      %v2948 = vadd.f32 0.0, %v2947
      %2949 = vdwg.mxu0
      %2950 = vmatpush.msra.mxu0 0.0
      %2951 = vmatpush.msra.mxu0 0.0
      %2952 = vmatpush.msra.mxu0 0.0
      %2953 = vmatpush.msra.mxu0 0.0
      %2954 = vmatpush.msra.mxu0 0.0
      %2955 = vmatpush.msra.mxu0 0.0
      %2956 = vmatpush.msra.mxu0 0.0
      %2957 = vmatpush.msra.mxu0 0.0
      %2958 = vmatpush.msra.mxu0 0.0
      %2959 = vmatpush.msra.mxu0 0.0
      %2960 = vmatpush.msra.mxu0 0.0
      %2961 = vmatpush.msra.mxu0 0.0
      %2962 = vmatpush.msra.mxu0 0.0
      %2963 = vmatpush.msra.mxu0 0.0
      %2964 = vmatpush.msra.mxu0 %v2677
      %2965 = vmatpush.msra.mxu0 %v2674
      %2966 = vmatmul.f32.gmra.mxu0 %v1640
      %v2967 = vpop.f32.mrf.mxu0
      %v2968 = vadd.f32 0.0, %v2967
      %2969 = vmatmul.f32.gmra.mxu0 %v1643
      %v2970 = vpop.f32.mrf.mxu0
      %v2971 = vadd.f32 0.0, %v2970
      %2972 = vdwg.mxu0
      %2973 = vmatpush.msra.mxu0 0.0
      %2974 = vmatpush.msra.mxu0 0.0
      %2975 = vmatpush.msra.mxu0 0.0
      %2976 = vmatpush.msra.mxu0 0.0
      %2977 = vmatpush.msra.mxu0 0.0
      %2978 = vmatpush.msra.mxu0 0.0
      %2979 = vmatpush.msra.mxu0 0.0
      %2980 = vmatpush.msra.mxu0 0.0
      %2981 = vmatpush.msra.mxu0 0.0
      %2982 = vmatpush.msra.mxu0 0.0
      %2983 = vmatpush.msra.mxu0 0.0
      %2984 = vmatpush.msra.mxu0 0.0
      %2985 = vmatpush.msra.mxu0 0.0
      %2986 = vmatpush.msra.mxu0 0.0
      %2987 = vmatpush.msra.mxu0 %v2683
      %2988 = vmatpush.msra.mxu0 %v2680
      %2989 = vmatmul.f32.gmra.mxu0 %v1669
      %v2990 = vpop.f32.mrf.mxu0
      %v2991 = vadd.f32 0.0, %v2990
      %2992 = vmatmul.f32.gmra.mxu0 %v1672
      %v2993 = vpop.f32.mrf.mxu0
      %v2994 = vadd.f32 0.0, %v2993
      %2995 = vdwg.mxu0
      %2996 = vmatpush.msra.mxu0 0.0
      %2997 = vmatpush.msra.mxu0 0.0
      %2998 = vmatpush.msra.mxu0 0.0
      %2999 = vmatpush.msra.mxu0 0.0
      %3000 = vmatpush.msra.mxu0 0.0
      %3001 = vmatpush.msra.mxu0 0.0
      %3002 = vmatpush.msra.mxu0 0.0
      %3003 = vmatpush.msra.mxu0 0.0
      %3004 = vmatpush.msra.mxu0 0.0
      %3005 = vmatpush.msra.mxu0 0.0
      %3006 = vmatpush.msra.mxu0 0.0
      %3007 = vmatpush.msra.mxu0 0.0
      %3008 = vmatpush.msra.mxu0 0.0
      %3009 = vmatpush.msra.mxu0 0.0
      %3010 = vmatpush.msra.mxu0 %v2689
      %3011 = vmatpush.msra.mxu0 %v2686
      %3012 = vmatmul.f32.gmra.mxu0 %v1698
      %v3013 = vpop.f32.mrf.mxu0
      %v3014 = vadd.f32 0.0, %v3013
      %3015 = vmatmul.f32.gmra.mxu0 %v1701
      %v3016 = vpop.f32.mrf.mxu0
      %v3017 = vadd.f32 0.0, %v3016
      %3018 = vdwg.mxu0
      %3019 = vmatpush.msra.mxu0 0.0
      %3020 = vmatpush.msra.mxu0 0.0
      %3021 = vmatpush.msra.mxu0 0.0
      %3022 = vmatpush.msra.mxu0 0.0
      %3023 = vmatpush.msra.mxu0 0.0
      %3024 = vmatpush.msra.mxu0 0.0
      %3025 = vmatpush.msra.mxu0 0.0
      %3026 = vmatpush.msra.mxu0 0.0
      %3027 = vmatpush.msra.mxu0 0.0
      %3028 = vmatpush.msra.mxu0 0.0
      %3029 = vmatpush.msra.mxu0 0.0
      %3030 = vmatpush.msra.mxu0 0.0
      %3031 = vmatpush.msra.mxu0 0.0
      %3032 = vmatpush.msra.mxu0 0.0
      %3033 = vmatpush.msra.mxu0 %v2695
      %3034 = vmatpush.msra.mxu0 %v2692
      %3035 = vmatmul.f32.gmra.mxu0 %v1727
      %v3036 = vpop.f32.mrf.mxu0
      %v3037 = vadd.f32 0.0, %v3036
      %3038 = vmatmul.f32.gmra.mxu0 %v1730
      %v3039 = vpop.f32.mrf.mxu0
      %v3040 = vadd.f32 0.0, %v3039
      %3041 = vdwg.mxu0
      %3042 = vmatpush.msra.mxu0 0.0
      %3043 = vmatpush.msra.mxu0 0.0
      %3044 = vmatpush.msra.mxu0 0.0
      %3045 = vmatpush.msra.mxu0 0.0
      %3046 = vmatpush.msra.mxu0 0.0
      %3047 = vmatpush.msra.mxu0 0.0
      %3048 = vmatpush.msra.mxu0 0.0
      %3049 = vmatpush.msra.mxu0 0.0
      %3050 = vmatpush.msra.mxu0 0.0
      %3051 = vmatpush.msra.mxu0 0.0
      %3052 = vmatpush.msra.mxu0 0.0
      %3053 = vmatpush.msra.mxu0 0.0
      %3054 = vmatpush.msra.mxu0 0.0
      %3055 = vmatpush.msra.mxu0 0.0
      %3056 = vmatpush.msra.mxu0 %v2701
      %3057 = vmatpush.msra.mxu0 %v2698
      %3058 = vmatmul.f32.gmra.mxu0 %v1756
      %v3059 = vpop.f32.mrf.mxu0
      %v3060 = vadd.f32 0.0, %v3059
      %3061 = vmatmul.f32.gmra.mxu0 %v1759
      %v3062 = vpop.f32.mrf.mxu0
      %v3063 = vadd.f32 0.0, %v3062
      %3064 = vdwg.mxu0
      %3065 = vmatpush.msra.mxu0 0.0
      %3066 = vmatpush.msra.mxu0 0.0
      %3067 = vmatpush.msra.mxu0 0.0
      %3068 = vmatpush.msra.mxu0 0.0
      %3069 = vmatpush.msra.mxu0 0.0
      %3070 = vmatpush.msra.mxu0 0.0
      %3071 = vmatpush.msra.mxu0 0.0
      %3072 = vmatpush.msra.mxu0 0.0
      %3073 = vmatpush.msra.mxu0 0.0
      %3074 = vmatpush.msra.mxu0 0.0
      %3075 = vmatpush.msra.mxu0 0.0
      %3076 = vmatpush.msra.mxu0 0.0
      %3077 = vmatpush.msra.mxu0 0.0
      %3078 = vmatpush.msra.mxu0 0.0
      %3079 = vmatpush.msra.mxu0 %v2707
      %3080 = vmatpush.msra.mxu0 %v2704
      %3081 = vmatmul.f32.gmra.mxu0 %v1785
      %v3082 = vpop.f32.mrf.mxu0
      %v3083 = vadd.f32 0.0, %v3082
      %3084 = vmatmul.f32.gmra.mxu0 %v1788
      %v3085 = vpop.f32.mrf.mxu0
      %v3086 = vadd.f32 0.0, %v3085
      %3087 = vdwg.mxu0
      %3088 = vmatpush.msra.mxu0 0.0
      %3089 = vmatpush.msra.mxu0 0.0
      %3090 = vmatpush.msra.mxu0 0.0
      %3091 = vmatpush.msra.mxu0 0.0
      %3092 = vmatpush.msra.mxu0 0.0
      %3093 = vmatpush.msra.mxu0 0.0
      %3094 = vmatpush.msra.mxu0 0.0
      %3095 = vmatpush.msra.mxu0 0.0
      %3096 = vmatpush.msra.mxu0 0.0
      %3097 = vmatpush.msra.mxu0 0.0
      %3098 = vmatpush.msra.mxu0 0.0
      %3099 = vmatpush.msra.mxu0 0.0
      %3100 = vmatpush.msra.mxu0 0.0
      %3101 = vmatpush.msra.mxu0 0.0
      %3102 = vmatpush.msra.mxu0 %v2713
      %3103 = vmatpush.msra.mxu0 %v2710
      %3104 = vmatmul.f32.gmra.mxu0 %v1814
      %v3105 = vpop.f32.mrf.mxu0
      %v3106 = vadd.f32 0.0, %v3105
      %3107 = vmatmul.f32.gmra.mxu0 %v1817
      %v3108 = vpop.f32.mrf.mxu0
      %v3109 = vadd.f32 0.0, %v3108
      %3110 = vdwg.mxu0
      %3111 = vmatpush.msra.mxu0 0.0
      %3112 = vmatpush.msra.mxu0 0.0
      %3113 = vmatpush.msra.mxu0 0.0
      %3114 = vmatpush.msra.mxu0 0.0
      %3115 = vmatpush.msra.mxu0 0.0
      %3116 = vmatpush.msra.mxu0 0.0
      %3117 = vmatpush.msra.mxu0 0.0
      %3118 = vmatpush.msra.mxu0 0.0
      %3119 = vmatpush.msra.mxu0 0.0
      %3120 = vmatpush.msra.mxu0 0.0
      %3121 = vmatpush.msra.mxu0 0.0
      %3122 = vmatpush.msra.mxu0 0.0
      %3123 = vmatpush.msra.mxu0 0.0
      %3124 = vmatpush.msra.mxu0 0.0
      %3125 = vmatpush.msra.mxu0 %v2719
      %3126 = vmatpush.msra.mxu0 %v2716
      %3127 = vmatmul.f32.gmra.mxu0 %v1843
      %v3128 = vpop.f32.mrf.mxu0
      %v3129 = vadd.f32 0.0, %v3128
      %3130 = vmatmul.f32.gmra.mxu0 %v1846
      %v3131 = vpop.f32.mrf.mxu0
      %v3132 = vadd.f32 0.0, %v3131
      %3133 = vdwg.mxu0
      %3134 = vmatpush.msra.mxu0 0.0
      %3135 = vmatpush.msra.mxu0 0.0
      %3136 = vmatpush.msra.mxu0 0.0
      %3137 = vmatpush.msra.mxu0 0.0
      %3138 = vmatpush.msra.mxu0 0.0
      %3139 = vmatpush.msra.mxu0 0.0
      %3140 = vmatpush.msra.mxu0 0.0
      %3141 = vmatpush.msra.mxu0 0.0
      %3142 = vmatpush.msra.mxu0 0.0
      %3143 = vmatpush.msra.mxu0 0.0
      %3144 = vmatpush.msra.mxu0 0.0
      %3145 = vmatpush.msra.mxu0 0.0
      %3146 = vmatpush.msra.mxu0 0.0
      %3147 = vmatpush.msra.mxu0 0.0
      %3148 = vmatpush.msra.mxu0 %v2725
      %3149 = vmatpush.msra.mxu0 %v2722
      %3150 = vmatmul.f32.gmra.mxu0 %v1872
      %v3151 = vpop.f32.mrf.mxu0
      %v3152 = vadd.f32 0.0, %v3151
      %3153 = vmatmul.f32.gmra.mxu0 %v1875
      %v3154 = vpop.f32.mrf.mxu0
      %v3155 = vadd.f32 0.0, %v3154
      %3156 = vdwg.mxu0
      %3157 = vmatpush.msra.mxu0 0.0
      %3158 = vmatpush.msra.mxu0 0.0
      %3159 = vmatpush.msra.mxu0 0.0
      %3160 = vmatpush.msra.mxu0 0.0
      %3161 = vmatpush.msra.mxu0 0.0
      %3162 = vmatpush.msra.mxu0 0.0
      %3163 = vmatpush.msra.mxu0 0.0
      %3164 = vmatpush.msra.mxu0 0.0
      %3165 = vmatpush.msra.mxu0 0.0
      %3166 = vmatpush.msra.mxu0 0.0
      %3167 = vmatpush.msra.mxu0 0.0
      %3168 = vmatpush.msra.mxu0 0.0
      %3169 = vmatpush.msra.mxu0 0.0
      %3170 = vmatpush.msra.mxu0 0.0
      %3171 = vmatpush.msra.mxu0 %v2731
      %3172 = vmatpush.msra.mxu0 %v2728
      %3173 = vmatmul.f32.gmra.mxu0 %v1901
      %v3174 = vpop.f32.mrf.mxu0
      %v3175 = vadd.f32 0.0, %v3174
      %3176 = vmatmul.f32.gmra.mxu0 %v1904
      %v3177 = vpop.f32.mrf.mxu0
      %v3178 = vadd.f32 0.0, %v3177
      %3179 = vdwg.mxu0
      %3180 = vmatpush.msra.mxu0 0.0
      %3181 = vmatpush.msra.mxu0 0.0
      %3182 = vmatpush.msra.mxu0 0.0
      %3183 = vmatpush.msra.mxu0 0.0
      %3184 = vmatpush.msra.mxu0 0.0
      %3185 = vmatpush.msra.mxu0 0.0
      %3186 = vmatpush.msra.mxu0 0.0
      %3187 = vmatpush.msra.mxu0 0.0
      %3188 = vmatpush.msra.mxu0 0.0
      %3189 = vmatpush.msra.mxu0 0.0
      %3190 = vmatpush.msra.mxu0 0.0
      %3191 = vmatpush.msra.mxu0 0.0
      %3192 = vmatpush.msra.mxu0 0.0
      %3193 = vmatpush.msra.mxu0 0.0
      %3194 = vmatpush.msra.mxu0 %v2737
      %3195 = vmatpush.msra.mxu0 %v2734
      %3196 = vmatmul.f32.gmra.mxu0 %v1930
      %v3197 = vpop.f32.mrf.mxu0
      %v3198 = vadd.f32 0.0, %v3197
      %3199 = vmatmul.f32.gmra.mxu0 %v1933
      %v3200 = vpop.f32.mrf.mxu0
      %v3201 = vadd.f32 0.0, %v3200
      %3202 = vdwg.mxu0
      %3203 = vmatpush.msra.mxu0 0.0
      %3204 = vmatpush.msra.mxu0 0.0
      %3205 = vmatpush.msra.mxu0 0.0
      %3206 = vmatpush.msra.mxu0 0.0
      %3207 = vmatpush.msra.mxu0 0.0
      %3208 = vmatpush.msra.mxu0 0.0
      %3209 = vmatpush.msra.mxu0 0.0
      %3210 = vmatpush.msra.mxu0 0.0
      %3211 = vmatpush.msra.mxu0 0.0
      %3212 = vmatpush.msra.mxu0 0.0
      %3213 = vmatpush.msra.mxu0 0.0
      %3214 = vmatpush.msra.mxu0 0.0
      %3215 = vmatpush.msra.mxu0 0.0
      %3216 = vmatpush.msra.mxu0 0.0
      %3217 = vmatpush.msra.mxu0 %v2743
      %3218 = vmatpush.msra.mxu0 %v2740
      %3219 = vmatmul.f32.gmra.mxu0 %v1959
      %v3220 = vpop.f32.mrf.mxu0
      %v3221 = vadd.f32 0.0, %v3220
      %3222 = vmatmul.f32.gmra.mxu0 %v1962
      %v3223 = vpop.f32.mrf.mxu0
      %v3224 = vadd.f32 0.0, %v3223
      %3225 = vdwg.mxu0
      %3226 = vmatpush.msra.mxu0 0.0
      %3227 = vmatpush.msra.mxu0 0.0
      %3228 = vmatpush.msra.mxu0 0.0
      %3229 = vmatpush.msra.mxu0 0.0
      %3230 = vmatpush.msra.mxu0 0.0
      %3231 = vmatpush.msra.mxu0 0.0
      %3232 = vmatpush.msra.mxu0 0.0
      %3233 = vmatpush.msra.mxu0 0.0
      %3234 = vmatpush.msra.mxu0 0.0
      %3235 = vmatpush.msra.mxu0 0.0
      %3236 = vmatpush.msra.mxu0 0.0
      %3237 = vmatpush.msra.mxu0 0.0
      %3238 = vmatpush.msra.mxu0 0.0
      %3239 = vmatpush.msra.mxu0 0.0
      %3240 = vmatpush.msra.mxu0 %v2749
      %3241 = vmatpush.msra.mxu0 %v2746
      %3242 = vmatmul.f32.gmra.mxu0 %v1988
      %v3243 = vpop.f32.mrf.mxu0
      %v3244 = vadd.f32 0.0, %v3243
      %3245 = vmatmul.f32.gmra.mxu0 %v1991
      %v3246 = vpop.f32.mrf.mxu0
      %v3247 = vadd.f32 0.0, %v3246
      %3248 = vdwg.mxu0
      %3249 = vmatpush.msra.mxu0 0.0
      %3250 = vmatpush.msra.mxu0 0.0
      %3251 = vmatpush.msra.mxu0 0.0
      %3252 = vmatpush.msra.mxu0 0.0
      %3253 = vmatpush.msra.mxu0 0.0
      %3254 = vmatpush.msra.mxu0 0.0
      %3255 = vmatpush.msra.mxu0 0.0
      %3256 = vmatpush.msra.mxu0 0.0
      %3257 = vmatpush.msra.mxu0 0.0
      %3258 = vmatpush.msra.mxu0 0.0
      %3259 = vmatpush.msra.mxu0 0.0
      %3260 = vmatpush.msra.mxu0 0.0
      %3261 = vmatpush.msra.mxu0 0.0
      %3262 = vmatpush.msra.mxu0 0.0
      %3263 = vmatpush.msra.mxu0 %v2755
      %3264 = vmatpush.msra.mxu0 %v2752
      %3265 = vmatmul.f32.gmra.mxu0 %v2017
      %v3266 = vpop.f32.mrf.mxu0
      %v3267 = vadd.f32 0.0, %v3266
      %3268 = vmatmul.f32.gmra.mxu0 %v2020
      %v3269 = vpop.f32.mrf.mxu0
      %v3270 = vadd.f32 0.0, %v3269
      %3271 = vdwg.mxu0
      %3272 = vmatpush.msra.mxu0 0.0
      %3273 = vmatpush.msra.mxu0 0.0
      %3274 = vmatpush.msra.mxu0 0.0
      %3275 = vmatpush.msra.mxu0 0.0
      %3276 = vmatpush.msra.mxu0 0.0
      %3277 = vmatpush.msra.mxu0 0.0
      %3278 = vmatpush.msra.mxu0 0.0
      %3279 = vmatpush.msra.mxu0 0.0
      %3280 = vmatpush.msra.mxu0 0.0
      %3281 = vmatpush.msra.mxu0 0.0
      %3282 = vmatpush.msra.mxu0 0.0
      %3283 = vmatpush.msra.mxu0 0.0
      %3284 = vmatpush.msra.mxu0 0.0
      %3285 = vmatpush.msra.mxu0 0.0
      %3286 = vmatpush.msra.mxu0 %v2761
      %3287 = vmatpush.msra.mxu0 %v2758
      %3288 = vmatmul.f32.gmra.mxu0 %v2046
      %v3289 = vpop.f32.mrf.mxu0
      %v3290 = vadd.f32 0.0, %v3289
      %3291 = vmatmul.f32.gmra.mxu0 %v2049
      %v3292 = vpop.f32.mrf.mxu0
      %v3293 = vadd.f32 0.0, %v3292
      %3294 = vdwg.mxu0
      %3295 = vmatpush.msra.mxu0 0.0
      %3296 = vmatpush.msra.mxu0 0.0
      %3297 = vmatpush.msra.mxu0 0.0
      %3298 = vmatpush.msra.mxu0 0.0
      %3299 = vmatpush.msra.mxu0 0.0
      %3300 = vmatpush.msra.mxu0 0.0
      %3301 = vmatpush.msra.mxu0 0.0
      %3302 = vmatpush.msra.mxu0 0.0
      %3303 = vmatpush.msra.mxu0 0.0
      %3304 = vmatpush.msra.mxu0 0.0
      %3305 = vmatpush.msra.mxu0 0.0
      %3306 = vmatpush.msra.mxu0 0.0
      %3307 = vmatpush.msra.mxu0 0.0
      %3308 = vmatpush.msra.mxu0 0.0
      %3309 = vmatpush.msra.mxu0 %v2767
      %3310 = vmatpush.msra.mxu0 %v2764
      %3311 = vmatmul.f32.gmra.mxu0 %v2075
      %v3312 = vpop.f32.mrf.mxu0
      %v3313 = vadd.f32 0.0, %v3312
      %3314 = vmatmul.f32.gmra.mxu0 %v2078
      %v3315 = vpop.f32.mrf.mxu0
      %v3316 = vadd.f32 0.0, %v3315
      %3317 = vdwg.mxu0
      %3318 = vmatpush.msra.mxu0 0.0
      %3319 = vmatpush.msra.mxu0 0.0
      %3320 = vmatpush.msra.mxu0 0.0
      %3321 = vmatpush.msra.mxu0 0.0
      %3322 = vmatpush.msra.mxu0 0.0
      %3323 = vmatpush.msra.mxu0 0.0
      %3324 = vmatpush.msra.mxu0 0.0
      %3325 = vmatpush.msra.mxu0 0.0
      %3326 = vmatpush.msra.mxu0 0.0
      %3327 = vmatpush.msra.mxu0 0.0
      %3328 = vmatpush.msra.mxu0 0.0
      %3329 = vmatpush.msra.mxu0 0.0
      %3330 = vmatpush.msra.mxu0 0.0
      %3331 = vmatpush.msra.mxu0 0.0
      %3332 = vmatpush.msra.mxu0 %v2773
      %3333 = vmatpush.msra.mxu0 %v2770
      %3334 = vmatmul.f32.gmra.mxu0 %v2104
      %v3335 = vpop.f32.mrf.mxu0
      %v3336 = vadd.f32 0.0, %v3335
      %3337 = vmatmul.f32.gmra.mxu0 %v2107
      %v3338 = vpop.f32.mrf.mxu0
      %v3339 = vadd.f32 0.0, %v3338
      %3340 = vdwg.mxu0
      %3341 = vmatpush.msra.mxu0 0.0
      %3342 = vmatpush.msra.mxu0 0.0
      %3343 = vmatpush.msra.mxu0 0.0
      %3344 = vmatpush.msra.mxu0 0.0
      %3345 = vmatpush.msra.mxu0 0.0
      %3346 = vmatpush.msra.mxu0 0.0
      %3347 = vmatpush.msra.mxu0 0.0
      %3348 = vmatpush.msra.mxu0 0.0
      %3349 = vmatpush.msra.mxu0 0.0
      %3350 = vmatpush.msra.mxu0 0.0
      %3351 = vmatpush.msra.mxu0 0.0
      %3352 = vmatpush.msra.mxu0 0.0
      %3353 = vmatpush.msra.mxu0 0.0
      %3354 = vmatpush.msra.mxu0 0.0
      %3355 = vmatpush.msra.mxu0 %v2779
      %3356 = vmatpush.msra.mxu0 %v2776
      %3357 = vmatmul.f32.gmra.mxu0 %v2133
      %v3358 = vpop.f32.mrf.mxu0
      %v3359 = vadd.f32 0.0, %v3358
      %3360 = vmatmul.f32.gmra.mxu0 %v2136
      %v3361 = vpop.f32.mrf.mxu0
      %v3362 = vadd.f32 0.0, %v3361
      %3363 = vdwg.mxu0
      %3364 = vmatpush.msra.mxu0 0.0
      %3365 = vmatpush.msra.mxu0 0.0
      %3366 = vmatpush.msra.mxu0 0.0
      %3367 = vmatpush.msra.mxu0 0.0
      %3368 = vmatpush.msra.mxu0 0.0
      %3369 = vmatpush.msra.mxu0 0.0
      %3370 = vmatpush.msra.mxu0 0.0
      %3371 = vmatpush.msra.mxu0 0.0
      %3372 = vmatpush.msra.mxu0 0.0
      %3373 = vmatpush.msra.mxu0 0.0
      %3374 = vmatpush.msra.mxu0 0.0
      %3375 = vmatpush.msra.mxu0 0.0
      %3376 = vmatpush.msra.mxu0 0.0
      %3377 = vmatpush.msra.mxu0 0.0
      %3378 = vmatpush.msra.mxu0 %v2785
      %3379 = vmatpush.msra.mxu0 %v2782
      %3380 = vmatmul.f32.gmra.mxu0 %v2162
      %v3381 = vpop.f32.mrf.mxu0
      %v3382 = vadd.f32 0.0, %v3381
      %3383 = vmatmul.f32.gmra.mxu0 %v2165
      %v3384 = vpop.f32.mrf.mxu0
      %v3385 = vadd.f32 0.0, %v3384
      %3386 = vdwg.mxu0
      %3387 = vmatpush.msra.mxu0 0.0
      %3388 = vmatpush.msra.mxu0 0.0
      %3389 = vmatpush.msra.mxu0 0.0
      %3390 = vmatpush.msra.mxu0 0.0
      %3391 = vmatpush.msra.mxu0 0.0
      %3392 = vmatpush.msra.mxu0 0.0
      %3393 = vmatpush.msra.mxu0 0.0
      %3394 = vmatpush.msra.mxu0 0.0
      %3395 = vmatpush.msra.mxu0 0.0
      %3396 = vmatpush.msra.mxu0 0.0
      %3397 = vmatpush.msra.mxu0 0.0
      %3398 = vmatpush.msra.mxu0 0.0
      %3399 = vmatpush.msra.mxu0 0.0
      %3400 = vmatpush.msra.mxu0 0.0
      %3401 = vmatpush.msra.mxu0 %v2791
      %3402 = vmatpush.msra.mxu0 %v2788
      %3403 = vmatmul.f32.gmra.mxu0 %v2191
      %v3404 = vpop.f32.mrf.mxu0
      %v3405 = vadd.f32 0.0, %v3404
      %3406 = vmatmul.f32.gmra.mxu0 %v2194
      %v3407 = vpop.f32.mrf.mxu0
      %v3408 = vadd.f32 0.0, %v3407
      %3409 = vdwg.mxu0
      %3410 = vmatpush.msra.mxu0 0.0
      %3411 = vmatpush.msra.mxu0 0.0
      %3412 = vmatpush.msra.mxu0 0.0
      %3413 = vmatpush.msra.mxu0 0.0
      %3414 = vmatpush.msra.mxu0 0.0
      %3415 = vmatpush.msra.mxu0 0.0
      %3416 = vmatpush.msra.mxu0 0.0
      %3417 = vmatpush.msra.mxu0 0.0
      %3418 = vmatpush.msra.mxu0 0.0
      %3419 = vmatpush.msra.mxu0 0.0
      %3420 = vmatpush.msra.mxu0 0.0
      %3421 = vmatpush.msra.mxu0 0.0
      %3422 = vmatpush.msra.mxu0 0.0
      %3423 = vmatpush.msra.mxu0 0.0
      %3424 = vmatpush.msra.mxu0 %v2797
      %3425 = vmatpush.msra.mxu0 %v2794
      %3426 = vmatmul.f32.gmra.mxu0 %v2220
      %v3427 = vpop.f32.mrf.mxu0
      %v3428 = vadd.f32 0.0, %v3427
      %3429 = vmatmul.f32.gmra.mxu0 %v2223
      %v3430 = vpop.f32.mrf.mxu0
      %v3431 = vadd.f32 0.0, %v3430
      %3432 = vdwg.mxu0
      %3433 = vmatpush.msra.mxu0 0.0
      %3434 = vmatpush.msra.mxu0 0.0
      %3435 = vmatpush.msra.mxu0 0.0
      %3436 = vmatpush.msra.mxu0 0.0
      %3437 = vmatpush.msra.mxu0 0.0
      %3438 = vmatpush.msra.mxu0 0.0
      %3439 = vmatpush.msra.mxu0 0.0
      %3440 = vmatpush.msra.mxu0 0.0
      %3441 = vmatpush.msra.mxu0 0.0
      %3442 = vmatpush.msra.mxu0 0.0
      %3443 = vmatpush.msra.mxu0 0.0
      %3444 = vmatpush.msra.mxu0 0.0
      %3445 = vmatpush.msra.mxu0 0.0
      %3446 = vmatpush.msra.mxu0 0.0
      %3447 = vmatpush.msra.mxu0 %v2803
      %3448 = vmatpush.msra.mxu0 %v2800
      %3449 = vmatmul.f32.gmra.mxu0 %v2249
      %v3450 = vpop.f32.mrf.mxu0
      %v3451 = vadd.f32 0.0, %v3450
      %3452 = vmatmul.f32.gmra.mxu0 %v2252
      %v3453 = vpop.f32.mrf.mxu0
      %v3454 = vadd.f32 0.0, %v3453
      %3455 = vdwg.mxu0
      %3456 = vmatpush.msra.mxu0 0.0
      %3457 = vmatpush.msra.mxu0 0.0
      %3458 = vmatpush.msra.mxu0 0.0
      %3459 = vmatpush.msra.mxu0 0.0
      %3460 = vmatpush.msra.mxu0 0.0
      %3461 = vmatpush.msra.mxu0 0.0
      %3462 = vmatpush.msra.mxu0 0.0
      %3463 = vmatpush.msra.mxu0 0.0
      %3464 = vmatpush.msra.mxu0 0.0
      %3465 = vmatpush.msra.mxu0 0.0
      %3466 = vmatpush.msra.mxu0 0.0
      %3467 = vmatpush.msra.mxu0 0.0
      %3468 = vmatpush.msra.mxu0 0.0
      %3469 = vmatpush.msra.mxu0 0.0
      %3470 = vmatpush.msra.mxu0 %v2809
      %3471 = vmatpush.msra.mxu0 %v2806
      %3472 = vmatmul.f32.gmra.mxu0 %v2278
      %v3473 = vpop.f32.mrf.mxu0
      %v3474 = vadd.f32 0.0, %v3473
      %3475 = vmatmul.f32.gmra.mxu0 %v2281
      %v3476 = vpop.f32.mrf.mxu0
      %v3477 = vadd.f32 0.0, %v3476
      %3478 = vdwg.mxu0
      %3479 = vmatpush.msra.mxu0 0.0
      %3480 = vmatpush.msra.mxu0 0.0
      %3481 = vmatpush.msra.mxu0 0.0
      %3482 = vmatpush.msra.mxu0 0.0
      %3483 = vmatpush.msra.mxu0 0.0
      %3484 = vmatpush.msra.mxu0 0.0
      %3485 = vmatpush.msra.mxu0 0.0
      %3486 = vmatpush.msra.mxu0 0.0
      %3487 = vmatpush.msra.mxu0 0.0
      %3488 = vmatpush.msra.mxu0 0.0
      %3489 = vmatpush.msra.mxu0 0.0
      %3490 = vmatpush.msra.mxu0 0.0
      %3491 = vmatpush.msra.mxu0 0.0
      %3492 = vmatpush.msra.mxu0 0.0
      %3493 = vmatpush.msra.mxu0 %v2815
      %3494 = vmatpush.msra.mxu0 %v2812
      %3495 = vmatmul.f32.gmra.mxu0 %v2307
      %v3496 = vpop.f32.mrf.mxu0
      %v3497 = vadd.f32 0.0, %v3496
      %3498 = vmatmul.f32.gmra.mxu0 %v2310
      %v3499 = vpop.f32.mrf.mxu0
      %v3500 = vadd.f32 0.0, %v3499
      %3501 = vdwg.mxu0
      %3502 = vmatpush.msra.mxu0 0.0
      %3503 = vmatpush.msra.mxu0 0.0
      %3504 = vmatpush.msra.mxu0 0.0
      %3505 = vmatpush.msra.mxu0 0.0
      %3506 = vmatpush.msra.mxu0 0.0
      %3507 = vmatpush.msra.mxu0 0.0
      %3508 = vmatpush.msra.mxu0 0.0
      %3509 = vmatpush.msra.mxu0 0.0
      %3510 = vmatpush.msra.mxu0 0.0
      %3511 = vmatpush.msra.mxu0 0.0
      %3512 = vmatpush.msra.mxu0 0.0
      %3513 = vmatpush.msra.mxu0 0.0
      %3514 = vmatpush.msra.mxu0 0.0
      %3515 = vmatpush.msra.mxu0 0.0
      %3516 = vmatpush.msra.mxu0 %v2821
      %3517 = vmatpush.msra.mxu0 %v2818
      %3518 = vmatmul.f32.gmra.mxu0 %v2336
      %v3519 = vpop.f32.mrf.mxu0
      %v3520 = vadd.f32 0.0, %v3519
      %3521 = vmatmul.f32.gmra.mxu0 %v2339
      %v3522 = vpop.f32.mrf.mxu0
      %v3523 = vadd.f32 0.0, %v3522
      %3524 = vdwg.mxu0
      %3525 = vmatpush.msra.mxu0 0.0
      %3526 = vmatpush.msra.mxu0 0.0
      %3527 = vmatpush.msra.mxu0 0.0
      %3528 = vmatpush.msra.mxu0 0.0
      %3529 = vmatpush.msra.mxu0 0.0
      %3530 = vmatpush.msra.mxu0 0.0
      %3531 = vmatpush.msra.mxu0 0.0
      %3532 = vmatpush.msra.mxu0 0.0
      %3533 = vmatpush.msra.mxu0 0.0
      %3534 = vmatpush.msra.mxu0 0.0
      %3535 = vmatpush.msra.mxu0 0.0
      %3536 = vmatpush.msra.mxu0 0.0
      %3537 = vmatpush.msra.mxu0 0.0
      %3538 = vmatpush.msra.mxu0 0.0
      %3539 = vmatpush.msra.mxu0 %v2827
      %3540 = vmatpush.msra.mxu0 %v2824
      %3541 = vmatmul.f32.gmra.mxu0 %v2365
      %v3542 = vpop.f32.mrf.mxu0
      %v3543 = vadd.f32 0.0, %v3542
      %3544 = vmatmul.f32.gmra.mxu0 %v2368
      %v3545 = vpop.f32.mrf.mxu0
      %v3546 = vadd.f32 0.0, %v3545
      %3547 = vdwg.mxu0
      %3548 = vmatpush.msra.mxu0 0.0
      %3549 = vmatpush.msra.mxu0 0.0
      %3550 = vmatpush.msra.mxu0 0.0
      %3551 = vmatpush.msra.mxu0 0.0
      %3552 = vmatpush.msra.mxu0 0.0
      %3553 = vmatpush.msra.mxu0 0.0
      %3554 = vmatpush.msra.mxu0 0.0
      %3555 = vmatpush.msra.mxu0 0.0
      %3556 = vmatpush.msra.mxu0 0.0
      %3557 = vmatpush.msra.mxu0 0.0
      %3558 = vmatpush.msra.mxu0 0.0
      %3559 = vmatpush.msra.mxu0 0.0
      %3560 = vmatpush.msra.mxu0 0.0
      %3561 = vmatpush.msra.mxu0 0.0
      %3562 = vmatpush.msra.mxu0 %v2833
      %3563 = vmatpush.msra.mxu0 %v2830
      %3564 = vmatmul.f32.gmra.mxu0 %v2394
      %v3565 = vpop.f32.mrf.mxu0
      %v3566 = vadd.f32 0.0, %v3565
      %3567 = vmatmul.f32.gmra.mxu0 %v2397
      %v3568 = vpop.f32.mrf.mxu0
      %v3569 = vadd.f32 0.0, %v3568
      %3570 = vdwg.mxu0
      %v3571 = vld [vmem:[%s8] sm:$0xff]
      %v3572 = vld [vmem:[%s8 + $0x8] sm:$0xff]
      %v3573 = vld [vmem:[%s8 + $0x10] sm:$0xff]
      %v3574 = vld [vmem:[%s8 + $0x18] sm:$0xff]
      %v3575 = vld [vmem:[%s8 + $0x20] sm:$0xff]
      %v3576 = vld [vmem:[%s8 + $0x28] sm:$0xff]
      %v3577 = vld [vmem:[%s8 + $0x30] sm:$0xff]
      %v3578 = vld [vmem:[%s8 + $0x38] sm:$0xff]
      %v3579 = vld [vmem:[%s9] sm:$0x1]
      %v3581 = vperm.slane %v3579, 0
      %v3584 = vsel %vm964, %v2853, 0
      %v3587 = vsel %vm964, %v2856, 0
      %v3590 = vsel %vm964, %v2876, 0
      %v3593 = vsel %vm964, %v2879, 0
      %v3596 = vsel %vm964, %v2899, 0
      %v3599 = vsel %vm964, %v2902, 0
      %v3602 = vsel %vm964, %v2922, 0
      %v3605 = vsel %vm964, %v2925, 0
      %v3608 = vsel %vm964, %v2945, 0
      %v3611 = vsel %vm964, %v2948, 0
      %v3614 = vsel %vm964, %v2968, 0
      %v3617 = vsel %vm964, %v2971, 0
      %v3620 = vsel %vm964, %v2991, 0
      %v3623 = vsel %vm964, %v2994, 0
      %v3626 = vsel %vm964, %v3014, 0
      %v3629 = vsel %vm964, %v3017, 0
      %v3632 = vsel %vm964, %v3037, 0
      %v3635 = vsel %vm964, %v3040, 0
      %v3638 = vsel %vm964, %v3060, 0
      %v3641 = vsel %vm964, %v3063, 0
      %v3644 = vsel %vm964, %v3083, 0
      %v3647 = vsel %vm964, %v3086, 0
      %v3650 = vsel %vm964, %v3106, 0
      %v3653 = vsel %vm964, %v3109, 0
      %v3656 = vsel %vm964, %v3129, 0
      %v3659 = vsel %vm964, %v3132, 0
      %v3662 = vsel %vm964, %v3152, 0
      %v3665 = vsel %vm964, %v3155, 0
      %v3668 = vsel %vm964, %v3175, 0
      %v3671 = vsel %vm964, %v3178, 0
      %v3674 = vsel %vm964, %v3198, 0
      %v3677 = vsel %vm964, %v3201, 0
      %v3680 = vsel %vm964, %v3221, 0
      %v3683 = vsel %vm964, %v3224, 0
      %v3686 = vsel %vm964, %v3244, 0
      %v3689 = vsel %vm964, %v3247, 0
      %v3692 = vsel %vm964, %v3267, 0
      %v3695 = vsel %vm964, %v3270, 0
      %v3698 = vsel %vm964, %v3290, 0
      %v3701 = vsel %vm964, %v3293, 0
      %v3704 = vsel %vm964, %v3313, 0
      %v3707 = vsel %vm964, %v3316, 0
      %v3710 = vsel %vm964, %v3336, 0
      %v3713 = vsel %vm964, %v3339, 0
      %v3716 = vsel %vm964, %v3359, 0
      %v3719 = vsel %vm964, %v3362, 0
      %v3722 = vsel %vm964, %v3382, 0
      %v3725 = vsel %vm964, %v3385, 0
      %v3728 = vsel %vm964, %v3405, 0
      %v3731 = vsel %vm964, %v3408, 0
      %v3734 = vsel %vm964, %v3428, 0
      %v3737 = vsel %vm964, %v3431, 0
      %v3740 = vsel %vm964, %v3451, 0
      %v3743 = vsel %vm964, %v3454, 0
      %v3746 = vsel %vm964, %v3474, 0
      %v3749 = vsel %vm964, %v3477, 0
      %v3752 = vsel %vm964, %v3497, 0
      %v3755 = vsel %vm964, %v3500, 0
      %v3758 = vsel %vm964, %v3520, 0
      %v3761 = vsel %vm964, %v3523, 0
      %v3764 = vsel %vm964, %v3543, 0
      %v3767 = vsel %vm964, %v3546, 0
      %v3770 = vsel %vm964, %v3566, 0
      %v3773 = vsel %vm964, %v3569, 0
      %3775 = vmatpush.msra.mxu0 0.0
      %3776 = vmatpush.msra.mxu0 0.0
      %3777 = vmatpush.msra.mxu0 0.0
      %3778 = vmatpush.msra.mxu0 0.0
      %3779 = vmatpush.msra.mxu0 0.0
      %3780 = vmatpush.msra.mxu0 0.0
      %3781 = vmatpush.msra.mxu0 0.0
      %3782 = vmatpush.msra.mxu0 0.0
      %3783 = vmatpush.msra.mxu0 %v3578
      %3784 = vmatpush.msra.mxu0 %v3577
      %3785 = vmatpush.msra.mxu0 %v3576
      %3786 = vmatpush.msra.mxu0 %v3575
      %3787 = vmatpush.msra.mxu0 %v3574
      %3788 = vmatpush.msra.mxu0 %v3573
      %3789 = vmatpush.msra.mxu0 %v3572
      %3790 = vmatpush.msra.mxu0 %v3571
      %3791 = vmatmul.f32.gmra.mxu0 %v3584
      %v3792 = vpop.f32.mrf.mxu0
      %v3793 = vadd.f32 %v3581, %v3792
      %3794 = vmatmul.f32.gmra.mxu0 %v3587
      %v3795 = vpop.f32.mrf.mxu0
      %v3796 = vadd.f32 %v3581, %v3795
      %3797 = vmatmul.f32.gmra.mxu0 %v3590
      %v3798 = vpop.f32.mrf.mxu0
      %v3799 = vadd.f32 %v3581, %v3798
      %3800 = vmatmul.f32.gmra.mxu0 %v3593
      %v3801 = vpop.f32.mrf.mxu0
      %v3802 = vadd.f32 %v3581, %v3801
      %3803 = vmatmul.f32.gmra.mxu0 %v3596
      %v3804 = vpop.f32.mrf.mxu0
      %v3805 = vadd.f32 %v3581, %v3804
      %3806 = vmatmul.f32.gmra.mxu0 %v3599
      %v3807 = vpop.f32.mrf.mxu0
      %v3808 = vadd.f32 %v3581, %v3807
      %3809 = vmatmul.f32.gmra.mxu0 %v3602
      %v3810 = vpop.f32.mrf.mxu0
      %v3811 = vadd.f32 %v3581, %v3810
      %3812 = vmatmul.f32.gmra.mxu0 %v3605
      %v3813 = vpop.f32.mrf.mxu0
      %v3814 = vadd.f32 %v3581, %v3813
      %3815 = vmatmul.f32.gmra.mxu0 %v3608
      %v3816 = vpop.f32.mrf.mxu0
      %v3817 = vadd.f32 %v3581, %v3816
      %3818 = vmatmul.f32.gmra.mxu0 %v3611
      %v3819 = vpop.f32.mrf.mxu0
      %v3820 = vadd.f32 %v3581, %v3819
      %3821 = vmatmul.f32.gmra.mxu0 %v3614
      %v3822 = vpop.f32.mrf.mxu0
      %v3823 = vadd.f32 %v3581, %v3822
      %3824 = vmatmul.f32.gmra.mxu0 %v3617
      %v3825 = vpop.f32.mrf.mxu0
      %v3826 = vadd.f32 %v3581, %v3825
      %3827 = vmatmul.f32.gmra.mxu0 %v3620
      %v3828 = vpop.f32.mrf.mxu0
      %v3829 = vadd.f32 %v3581, %v3828
      %3830 = vmatmul.f32.gmra.mxu0 %v3623
      %v3831 = vpop.f32.mrf.mxu0
      %v3832 = vadd.f32 %v3581, %v3831
      %3833 = vmatmul.f32.gmra.mxu0 %v3626
      %v3834 = vpop.f32.mrf.mxu0
      %v3835 = vadd.f32 %v3581, %v3834
      %3836 = vmatmul.f32.gmra.mxu0 %v3629
      %v3837 = vpop.f32.mrf.mxu0
      %v3838 = vadd.f32 %v3581, %v3837
      %3839 = vmatmul.f32.gmra.mxu0 %v3632
      %v3840 = vpop.f32.mrf.mxu0
      %v3841 = vadd.f32 %v3581, %v3840
      %3842 = vmatmul.f32.gmra.mxu0 %v3635
      %v3843 = vpop.f32.mrf.mxu0
      %v3844 = vadd.f32 %v3581, %v3843
      %3845 = vmatmul.f32.gmra.mxu0 %v3638
      %v3846 = vpop.f32.mrf.mxu0
      %v3847 = vadd.f32 %v3581, %v3846
      %3848 = vmatmul.f32.gmra.mxu0 %v3641
      %v3849 = vpop.f32.mrf.mxu0
      %v3850 = vadd.f32 %v3581, %v3849
      %3851 = vmatmul.f32.gmra.mxu0 %v3644
      %v3852 = vpop.f32.mrf.mxu0
      %v3853 = vadd.f32 %v3581, %v3852
      %3854 = vmatmul.f32.gmra.mxu0 %v3647
      %v3855 = vpop.f32.mrf.mxu0
      %v3856 = vadd.f32 %v3581, %v3855
      %3857 = vmatmul.f32.gmra.mxu0 %v3650
      %v3858 = vpop.f32.mrf.mxu0
      %v3859 = vadd.f32 %v3581, %v3858
      %3860 = vmatmul.f32.gmra.mxu0 %v3653
      %v3861 = vpop.f32.mrf.mxu0
      %v3862 = vadd.f32 %v3581, %v3861
      %3863 = vmatmul.f32.gmra.mxu0 %v3656
      %v3864 = vpop.f32.mrf.mxu0
      %v3865 = vadd.f32 %v3581, %v3864
      %3866 = vmatmul.f32.gmra.mxu0 %v3659
      %v3867 = vpop.f32.mrf.mxu0
      %v3868 = vadd.f32 %v3581, %v3867
      %3869 = vmatmul.f32.gmra.mxu0 %v3662
      %v3870 = vpop.f32.mrf.mxu0
      %v3871 = vadd.f32 %v3581, %v3870
      %3872 = vmatmul.f32.gmra.mxu0 %v3665
      %v3873 = vpop.f32.mrf.mxu0
      %v3874 = vadd.f32 %v3581, %v3873
      %3875 = vmatmul.f32.gmra.mxu0 %v3668
      %v3876 = vpop.f32.mrf.mxu0
      %v3877 = vadd.f32 %v3581, %v3876
      %3878 = vmatmul.f32.gmra.mxu0 %v3671
      %v3879 = vpop.f32.mrf.mxu0
      %v3880 = vadd.f32 %v3581, %v3879
      %3881 = vmatmul.f32.gmra.mxu0 %v3674
      %v3882 = vpop.f32.mrf.mxu0
      %v3883 = vadd.f32 %v3581, %v3882
      %3884 = vmatmul.f32.gmra.mxu0 %v3677
      %v3885 = vpop.f32.mrf.mxu0
      %v3886 = vadd.f32 %v3581, %v3885
      %3887 = vmatmul.f32.gmra.mxu0 %v3680
      %v3888 = vpop.f32.mrf.mxu0
      %v3889 = vadd.f32 %v3581, %v3888
      %3890 = vmatmul.f32.gmra.mxu0 %v3683
      %v3891 = vpop.f32.mrf.mxu0
      %v3892 = vadd.f32 %v3581, %v3891
      %3893 = vmatmul.f32.gmra.mxu0 %v3686
      %v3894 = vpop.f32.mrf.mxu0
      %v3895 = vadd.f32 %v3581, %v3894
      %3896 = vmatmul.f32.gmra.mxu0 %v3689
      %v3897 = vpop.f32.mrf.mxu0
      %v3898 = vadd.f32 %v3581, %v3897
      %3899 = vmatmul.f32.gmra.mxu0 %v3692
      %v3900 = vpop.f32.mrf.mxu0
      %v3901 = vadd.f32 %v3581, %v3900
      %3902 = vmatmul.f32.gmra.mxu0 %v3695
      %v3903 = vpop.f32.mrf.mxu0
      %v3904 = vadd.f32 %v3581, %v3903
      %3905 = vmatmul.f32.gmra.mxu0 %v3698
      %v3906 = vpop.f32.mrf.mxu0
      %v3907 = vadd.f32 %v3581, %v3906
      %3908 = vmatmul.f32.gmra.mxu0 %v3701
      %v3909 = vpop.f32.mrf.mxu0
      %v3910 = vadd.f32 %v3581, %v3909
      %3911 = vmatmul.f32.gmra.mxu0 %v3704
      %v3912 = vpop.f32.mrf.mxu0
      %v3913 = vadd.f32 %v3581, %v3912
      %3914 = vmatmul.f32.gmra.mxu0 %v3707
      %v3915 = vpop.f32.mrf.mxu0
      %v3916 = vadd.f32 %v3581, %v3915
      %3917 = vmatmul.f32.gmra.mxu0 %v3710
      %v3918 = vpop.f32.mrf.mxu0
      %v3919 = vadd.f32 %v3581, %v3918
      %3920 = vmatmul.f32.gmra.mxu0 %v3713
      %v3921 = vpop.f32.mrf.mxu0
      %v3922 = vadd.f32 %v3581, %v3921
      %3923 = vmatmul.f32.gmra.mxu0 %v3716
      %v3924 = vpop.f32.mrf.mxu0
      %v3925 = vadd.f32 %v3581, %v3924
      %3926 = vmatmul.f32.gmra.mxu0 %v3719
      %v3927 = vpop.f32.mrf.mxu0
      %v3928 = vadd.f32 %v3581, %v3927
      %3929 = vmatmul.f32.gmra.mxu0 %v3722
      %v3930 = vpop.f32.mrf.mxu0
      %v3931 = vadd.f32 %v3581, %v3930
      %3932 = vmatmul.f32.gmra.mxu0 %v3725
      %v3933 = vpop.f32.mrf.mxu0
      %v3934 = vadd.f32 %v3581, %v3933
      %3935 = vmatmul.f32.gmra.mxu0 %v3728
      %v3936 = vpop.f32.mrf.mxu0
      %v3937 = vadd.f32 %v3581, %v3936
      %3938 = vmatmul.f32.gmra.mxu0 %v3731
      %v3939 = vpop.f32.mrf.mxu0
      %v3940 = vadd.f32 %v3581, %v3939
      %3941 = vmatmul.f32.gmra.mxu0 %v3734
      %v3942 = vpop.f32.mrf.mxu0
      %v3943 = vadd.f32 %v3581, %v3942
      %3944 = vmatmul.f32.gmra.mxu0 %v3737
      %v3945 = vpop.f32.mrf.mxu0
      %v3946 = vadd.f32 %v3581, %v3945
      %3947 = vmatmul.f32.gmra.mxu0 %v3740
      %v3948 = vpop.f32.mrf.mxu0
      %v3949 = vadd.f32 %v3581, %v3948
      %3950 = vmatmul.f32.gmra.mxu0 %v3743
      %v3951 = vpop.f32.mrf.mxu0
      %v3952 = vadd.f32 %v3581, %v3951
      %3953 = vmatmul.f32.gmra.mxu0 %v3746
      %v3954 = vpop.f32.mrf.mxu0
      %v3955 = vadd.f32 %v3581, %v3954
      %3956 = vmatmul.f32.gmra.mxu0 %v3749
      %v3957 = vpop.f32.mrf.mxu0
      %v3958 = vadd.f32 %v3581, %v3957
      %3959 = vmatmul.f32.gmra.mxu0 %v3752
      %v3960 = vpop.f32.mrf.mxu0
      %v3961 = vadd.f32 %v3581, %v3960
      %3962 = vmatmul.f32.gmra.mxu0 %v3755
      %v3963 = vpop.f32.mrf.mxu0
      %v3964 = vadd.f32 %v3581, %v3963
      %3965 = vmatmul.f32.gmra.mxu0 %v3758
      %v3966 = vpop.f32.mrf.mxu0
      %v3967 = vadd.f32 %v3581, %v3966
      %3968 = vmatmul.f32.gmra.mxu0 %v3761
      %v3969 = vpop.f32.mrf.mxu0
      %v3970 = vadd.f32 %v3581, %v3969
      %3971 = vmatmul.f32.gmra.mxu0 %v3764
      %v3972 = vpop.f32.mrf.mxu0
      %v3973 = vadd.f32 %v3581, %v3972
      %3974 = vmatmul.f32.gmra.mxu0 %v3767
      %v3975 = vpop.f32.mrf.mxu0
      %v3976 = vadd.f32 %v3581, %v3975
      %3977 = vmatmul.f32.gmra.mxu0 %v3770
      %v3978 = vpop.f32.mrf.mxu0
      %v3979 = vadd.f32 %v3581, %v3978
      %3980 = vmatmul.f32.gmra.mxu0 %v3773
      %v3981 = vpop.f32.mrf.mxu0
      %v3982 = vadd.f32 %v3581, %v3981
      %3983 = vdwg.mxu0
      %v3984 = vld [vmem:[%s10] sm:$0xff]
      %v3985 = vld [vmem:[%s10 + $0x8] sm:$0xff]
      %v3986 = vmul.f32 %v3793, %v3984
      %v3987 = vmul.f32 %v3796, %v3985
      %v3988 = vmul.f32 %v3799, %v3984
      %v3989 = vmul.f32 %v3802, %v3985
      %v3990 = vmul.f32 %v3805, %v3984
      %v3991 = vmul.f32 %v3808, %v3985
      %v3992 = vmul.f32 %v3811, %v3984
      %v3993 = vmul.f32 %v3814, %v3985
      %v3994 = vmul.f32 %v3817, %v3984
      %v3995 = vmul.f32 %v3820, %v3985
      %v3996 = vmul.f32 %v3823, %v3984
      %v3997 = vmul.f32 %v3826, %v3985
      %v3998 = vmul.f32 %v3829, %v3984
      %v3999 = vmul.f32 %v3832, %v3985
      %v4000 = vmul.f32 %v3835, %v3984
      %v4001 = vmul.f32 %v3838, %v3985
      %v4002 = vmul.f32 %v3841, %v3984
      %v4003 = vmul.f32 %v3844, %v3985
      %v4004 = vmul.f32 %v3847, %v3984
      %v4005 = vmul.f32 %v3850, %v3985
      %v4006 = vmul.f32 %v3853, %v3984
      %v4007 = vmul.f32 %v3856, %v3985
      %v4008 = vmul.f32 %v3859, %v3984
      %v4009 = vmul.f32 %v3862, %v3985
      %v4010 = vmul.f32 %v3865, %v3984
      %v4011 = vmul.f32 %v3868, %v3985
      %v4012 = vmul.f32 %v3871, %v3984
      %v4013 = vmul.f32 %v3874, %v3985
      %v4014 = vmul.f32 %v3877, %v3984
      %v4015 = vmul.f32 %v3880, %v3985
      %v4016 = vmul.f32 %v3883, %v3984
      %v4017 = vmul.f32 %v3886, %v3985
      %v4018 = vmul.f32 %v3889, %v3984
      %v4019 = vmul.f32 %v3892, %v3985
      %v4020 = vmul.f32 %v3895, %v3984
      %v4021 = vmul.f32 %v3898, %v3985
      %v4022 = vmul.f32 %v3901, %v3984
      %v4023 = vmul.f32 %v3904, %v3985
      %v4024 = vmul.f32 %v3907, %v3984
      %v4025 = vmul.f32 %v3910, %v3985
      %v4026 = vmul.f32 %v3913, %v3984
      %v4027 = vmul.f32 %v3916, %v3985
      %v4028 = vmul.f32 %v3919, %v3984
      %v4029 = vmul.f32 %v3922, %v3985
      %v4030 = vmul.f32 %v3925, %v3984
      %v4031 = vmul.f32 %v3928, %v3985
      %v4032 = vmul.f32 %v3931, %v3984
      %v4033 = vmul.f32 %v3934, %v3985
      %v4034 = vmul.f32 %v3937, %v3984
      %v4035 = vmul.f32 %v3940, %v3985
      %v4036 = vmul.f32 %v3943, %v3984
      %v4037 = vmul.f32 %v3946, %v3985
      %v4038 = vmul.f32 %v3949, %v3984
      %v4039 = vmul.f32 %v3952, %v3985
      %v4040 = vmul.f32 %v3955, %v3984
      %v4041 = vmul.f32 %v3958, %v3985
      %v4042 = vmul.f32 %v3961, %v3984
      %v4043 = vmul.f32 %v3964, %v3985
      %v4044 = vmul.f32 %v3967, %v3984
      %v4045 = vmul.f32 %v3970, %v3985
      %v4046 = vmul.f32 %v3973, %v3984
      %v4047 = vmul.f32 %v3976, %v3985
      %v4048 = vmul.f32 %v3979, %v3984
      %v4049 = vmul.f32 %v3982, %v3985
      %vm4050 = vcmask 261120
      %v4051 = vsel %vm4050, %v3986, 0.0
      %4052 = vadd.xlane.f32.xlu0 %v4051
      %v4053 = vpop.xlane.xlu0 %4052
      %v4054 = vsel %vm4050, %v3987, 0.0
      %4055 = vadd.xlane.f32.xlu0 %v4054
      %v4056 = vpop.xlane.xlu0 %4055
      %v4057 = vsel %vm4050, %v3988, 0.0
      %4058 = vadd.xlane.f32.xlu0 %v4057
      %v4059 = vpop.xlane.xlu0 %4058
      %v4060 = vsel %vm4050, %v3989, 0.0
      %4061 = vadd.xlane.f32.xlu0 %v4060
      %v4062 = vpop.xlane.xlu0 %4061
      %v4063 = vsel %vm4050, %v3990, 0.0
      %4064 = vadd.xlane.f32.xlu0 %v4063
      %v4065 = vpop.xlane.xlu0 %4064
      %v4066 = vsel %vm4050, %v3991, 0.0
      %4067 = vadd.xlane.f32.xlu0 %v4066
      %v4068 = vpop.xlane.xlu0 %4067
      %v4069 = vsel %vm4050, %v3992, 0.0
      %4070 = vadd.xlane.f32.xlu0 %v4069
      %v4071 = vpop.xlane.xlu0 %4070
      %v4072 = vsel %vm4050, %v3993, 0.0
      %4073 = vadd.xlane.f32.xlu0 %v4072
      %v4074 = vpop.xlane.xlu0 %4073
      %v4075 = vsel %vm4050, %v3994, 0.0
      %4076 = vadd.xlane.f32.xlu0 %v4075
      %v4077 = vpop.xlane.xlu0 %4076
      %v4078 = vsel %vm4050, %v3995, 0.0
      %4079 = vadd.xlane.f32.xlu0 %v4078
      %v4080 = vpop.xlane.xlu0 %4079
      %v4081 = vsel %vm4050, %v3996, 0.0
      %4082 = vadd.xlane.f32.xlu0 %v4081
      %v4083 = vpop.xlane.xlu0 %4082
      %v4084 = vsel %vm4050, %v3997, 0.0
      %4085 = vadd.xlane.f32.xlu0 %v4084
      %v4086 = vpop.xlane.xlu0 %4085
      %v4087 = vsel %vm4050, %v3998, 0.0
      %4088 = vadd.xlane.f32.xlu0 %v4087
      %v4089 = vpop.xlane.xlu0 %4088
      %v4090 = vsel %vm4050, %v3999, 0.0
      %4091 = vadd.xlane.f32.xlu0 %v4090
      %v4092 = vpop.xlane.xlu0 %4091
      %v4093 = vsel %vm4050, %v4000, 0.0
      %4094 = vadd.xlane.f32.xlu0 %v4093
      %v4095 = vpop.xlane.xlu0 %4094
      %v4096 = vsel %vm4050, %v4001, 0.0
      %4097 = vadd.xlane.f32.xlu0 %v4096
      %v4098 = vpop.xlane.xlu0 %4097
      %v4099 = vsel %vm4050, %v4002, 0.0
      %4100 = vadd.xlane.f32.xlu0 %v4099
      %v4101 = vpop.xlane.xlu0 %4100
      %v4102 = vsel %vm4050, %v4003, 0.0
      %4103 = vadd.xlane.f32.xlu0 %v4102
      %v4104 = vpop.xlane.xlu0 %4103
      %v4105 = vsel %vm4050, %v4004, 0.0
      %4106 = vadd.xlane.f32.xlu0 %v4105
      %v4107 = vpop.xlane.xlu0 %4106
      %v4108 = vsel %vm4050, %v4005, 0.0
      %4109 = vadd.xlane.f32.xlu0 %v4108
      %v4110 = vpop.xlane.xlu0 %4109
      %v4111 = vsel %vm4050, %v4006, 0.0
      %4112 = vadd.xlane.f32.xlu0 %v4111
      %v4113 = vpop.xlane.xlu0 %4112
      %v4114 = vsel %vm4050, %v4007, 0.0
      %4115 = vadd.xlane.f32.xlu0 %v4114
      %v4116 = vpop.xlane.xlu0 %4115
      %v4117 = vsel %vm4050, %v4008, 0.0
      %4118 = vadd.xlane.f32.xlu0 %v4117
      %v4119 = vpop.xlane.xlu0 %4118
      %v4120 = vsel %vm4050, %v4009, 0.0
      %4121 = vadd.xlane.f32.xlu0 %v4120
      %v4122 = vpop.xlane.xlu0 %4121
      %v4123 = vsel %vm4050, %v4010, 0.0
      %4124 = vadd.xlane.f32.xlu0 %v4123
      %v4125 = vpop.xlane.xlu0 %4124
      %v4126 = vsel %vm4050, %v4011, 0.0
      %4127 = vadd.xlane.f32.xlu0 %v4126
      %v4128 = vpop.xlane.xlu0 %4127
      %v4129 = vsel %vm4050, %v4012, 0.0
      %4130 = vadd.xlane.f32.xlu0 %v4129
      %v4131 = vpop.xlane.xlu0 %4130
      %v4132 = vsel %vm4050, %v4013, 0.0
      %4133 = vadd.xlane.f32.xlu0 %v4132
      %v4134 = vpop.xlane.xlu0 %4133
      %v4135 = vsel %vm4050, %v4014, 0.0
      %4136 = vadd.xlane.f32.xlu0 %v4135
      %v4137 = vpop.xlane.xlu0 %4136
      %v4138 = vsel %vm4050, %v4015, 0.0
      %4139 = vadd.xlane.f32.xlu0 %v4138
      %v4140 = vpop.xlane.xlu0 %4139
      %v4141 = vsel %vm4050, %v4016, 0.0
      %4142 = vadd.xlane.f32.xlu0 %v4141
      %v4143 = vpop.xlane.xlu0 %4142
      %v4144 = vsel %vm4050, %v4017, 0.0
      %4145 = vadd.xlane.f32.xlu0 %v4144
      %v4146 = vpop.xlane.xlu0 %4145
      %v4147 = vsel %vm4050, %v4018, 0.0
      %4148 = vadd.xlane.f32.xlu0 %v4147
      %v4149 = vpop.xlane.xlu0 %4148
      %v4150 = vsel %vm4050, %v4019, 0.0
      %4151 = vadd.xlane.f32.xlu0 %v4150
      %v4152 = vpop.xlane.xlu0 %4151
      %v4153 = vsel %vm4050, %v4020, 0.0
      %4154 = vadd.xlane.f32.xlu0 %v4153
      %v4155 = vpop.xlane.xlu0 %4154
      %v4156 = vsel %vm4050, %v4021, 0.0
      %4157 = vadd.xlane.f32.xlu0 %v4156
      %v4158 = vpop.xlane.xlu0 %4157
      %v4159 = vsel %vm4050, %v4022, 0.0
      %4160 = vadd.xlane.f32.xlu0 %v4159
      %v4161 = vpop.xlane.xlu0 %4160
      %v4162 = vsel %vm4050, %v4023, 0.0
      %4163 = vadd.xlane.f32.xlu0 %v4162
      %v4164 = vpop.xlane.xlu0 %4163
      %v4165 = vsel %vm4050, %v4024, 0.0
      %4166 = vadd.xlane.f32.xlu0 %v4165
      %v4167 = vpop.xlane.xlu0 %4166
      %v4168 = vsel %vm4050, %v4025, 0.0
      %4169 = vadd.xlane.f32.xlu0 %v4168
      %v4170 = vpop.xlane.xlu0 %4169
      %v4171 = vsel %vm4050, %v4026, 0.0
      %4172 = vadd.xlane.f32.xlu0 %v4171
      %v4173 = vpop.xlane.xlu0 %4172
      %v4174 = vsel %vm4050, %v4027, 0.0
      %4175 = vadd.xlane.f32.xlu0 %v4174
      %v4176 = vpop.xlane.xlu0 %4175
      %v4177 = vsel %vm4050, %v4028, 0.0
      %4178 = vadd.xlane.f32.xlu0 %v4177
      %v4179 = vpop.xlane.xlu0 %4178
      %v4180 = vsel %vm4050, %v4029, 0.0
      %4181 = vadd.xlane.f32.xlu0 %v4180
      %v4182 = vpop.xlane.xlu0 %4181
      %v4183 = vsel %vm4050, %v4030, 0.0
      %4184 = vadd.xlane.f32.xlu0 %v4183
      %v4185 = vpop.xlane.xlu0 %4184
      %v4186 = vsel %vm4050, %v4031, 0.0
      %4187 = vadd.xlane.f32.xlu0 %v4186
      %v4188 = vpop.xlane.xlu0 %4187
      %v4189 = vsel %vm4050, %v4032, 0.0
      %4190 = vadd.xlane.f32.xlu0 %v4189
      %v4191 = vpop.xlane.xlu0 %4190
      %v4192 = vsel %vm4050, %v4033, 0.0
      %4193 = vadd.xlane.f32.xlu0 %v4192
      %v4194 = vpop.xlane.xlu0 %4193
      %v4195 = vsel %vm4050, %v4034, 0.0
      %4196 = vadd.xlane.f32.xlu0 %v4195
      %v4197 = vpop.xlane.xlu0 %4196
      %v4198 = vsel %vm4050, %v4035, 0.0
      %4199 = vadd.xlane.f32.xlu0 %v4198
      %v4200 = vpop.xlane.xlu0 %4199
      %v4201 = vsel %vm4050, %v4036, 0.0
      %4202 = vadd.xlane.f32.xlu0 %v4201
      %v4203 = vpop.xlane.xlu0 %4202
      %v4204 = vsel %vm4050, %v4037, 0.0
      %4205 = vadd.xlane.f32.xlu0 %v4204
      %v4206 = vpop.xlane.xlu0 %4205
      %v4207 = vsel %vm4050, %v4038, 0.0
      %4208 = vadd.xlane.f32.xlu0 %v4207
      %v4209 = vpop.xlane.xlu0 %4208
      %v4210 = vsel %vm4050, %v4039, 0.0
      %4211 = vadd.xlane.f32.xlu0 %v4210
      %v4212 = vpop.xlane.xlu0 %4211
      %v4213 = vsel %vm4050, %v4040, 0.0
      %4214 = vadd.xlane.f32.xlu0 %v4213
      %v4215 = vpop.xlane.xlu0 %4214
      %v4216 = vsel %vm4050, %v4041, 0.0
      %4217 = vadd.xlane.f32.xlu0 %v4216
      %v4218 = vpop.xlane.xlu0 %4217
      %v4219 = vsel %vm4050, %v4042, 0.0
      %4220 = vadd.xlane.f32.xlu0 %v4219
      %v4221 = vpop.xlane.xlu0 %4220
      %v4222 = vsel %vm4050, %v4043, 0.0
      %4223 = vadd.xlane.f32.xlu0 %v4222
      %v4224 = vpop.xlane.xlu0 %4223
      %v4225 = vsel %vm4050, %v4044, 0.0
      %4226 = vadd.xlane.f32.xlu0 %v4225
      %v4227 = vpop.xlane.xlu0 %4226
      %v4228 = vsel %vm4050, %v4045, 0.0
      %4229 = vadd.xlane.f32.xlu0 %v4228
      %v4230 = vpop.xlane.xlu0 %4229
      %v4231 = vsel %vm4050, %v4046, 0.0
      %4232 = vadd.xlane.f32.xlu0 %v4231
      %v4233 = vpop.xlane.xlu0 %4232
      %v4234 = vsel %vm4050, %v4047, 0.0
      %4235 = vadd.xlane.f32.xlu0 %v4234
      %v4236 = vpop.xlane.xlu0 %4235
      %v4237 = vsel %vm4050, %v4048, 0.0
      %4238 = vadd.xlane.f32.xlu0 %v4237
      %v4239 = vpop.xlane.xlu0 %4238
      %v4240 = vsel %vm4050, %v4049, 0.0
      %4241 = vadd.xlane.f32.xlu0 %v4240
      %v4242 = vpop.xlane.xlu0 %4241
      %v4307 = vlaneseq
      %v4308 = vand.u32 %v4307, 127
      %v4309 = vperm.slane %v4053, %v4308
      %v4310 = vadd.s32 %v4308, 4294967288
      %v4311 = vperm.slane %v4056, %v4310
      %vm4312 = vcmask 130112
      %v4313 = vsel %vm4312, %v4311, %v4309
      %v4314 = vperm.slane %v4059, %v4308
      %v4315 = vperm.slane %v4062, %v4310
      %v4316 = vsel %vm4312, %v4315, %v4314
      %v4317 = vperm.slane %v4065, %v4308
      %v4318 = vperm.slane %v4068, %v4310
      %v4319 = vsel %vm4312, %v4318, %v4317
      %v4320 = vperm.slane %v4071, %v4308
      %v4321 = vperm.slane %v4074, %v4310
      %v4322 = vsel %vm4312, %v4321, %v4320
      %v4323 = vperm.slane %v4077, %v4308
      %v4324 = vperm.slane %v4080, %v4310
      %v4325 = vsel %vm4312, %v4324, %v4323
      %v4326 = vperm.slane %v4083, %v4308
      %v4327 = vperm.slane %v4086, %v4310
      %v4328 = vsel %vm4312, %v4327, %v4326
      %v4329 = vperm.slane %v4089, %v4308
      %v4330 = vperm.slane %v4092, %v4310
      %v4331 = vsel %vm4312, %v4330, %v4329
      %v4332 = vperm.slane %v4095, %v4308
      %v4333 = vperm.slane %v4098, %v4310
      %v4334 = vsel %vm4312, %v4333, %v4332
      %v4335 = vperm.slane %v4101, %v4308
      %v4336 = vperm.slane %v4104, %v4310
      %v4337 = vsel %vm4312, %v4336, %v4335
      %v4338 = vperm.slane %v4107, %v4308
      %v4339 = vperm.slane %v4110, %v4310
      %v4340 = vsel %vm4312, %v4339, %v4338
      %v4341 = vperm.slane %v4113, %v4308
      %v4342 = vperm.slane %v4116, %v4310
      %v4343 = vsel %vm4312, %v4342, %v4341
      %v4344 = vperm.slane %v4119, %v4308
      %v4345 = vperm.slane %v4122, %v4310
      %v4346 = vsel %vm4312, %v4345, %v4344
      %v4347 = vperm.slane %v4125, %v4308
      %v4348 = vperm.slane %v4128, %v4310
      %v4349 = vsel %vm4312, %v4348, %v4347
      %v4350 = vperm.slane %v4131, %v4308
      %v4351 = vperm.slane %v4134, %v4310
      %v4352 = vsel %vm4312, %v4351, %v4350
      %v4353 = vperm.slane %v4137, %v4308
      %v4354 = vperm.slane %v4140, %v4310
      %v4355 = vsel %vm4312, %v4354, %v4353
      %v4356 = vperm.slane %v4143, %v4308
      %v4357 = vperm.slane %v4146, %v4310
      %v4358 = vsel %vm4312, %v4357, %v4356
      %v4359 = vperm.slane %v4149, %v4308
      %v4360 = vperm.slane %v4152, %v4310
      %v4361 = vsel %vm4312, %v4360, %v4359
      %v4362 = vperm.slane %v4155, %v4308
      %v4363 = vperm.slane %v4158, %v4310
      %v4364 = vsel %vm4312, %v4363, %v4362
      %v4365 = vperm.slane %v4161, %v4308
      %v4366 = vperm.slane %v4164, %v4310
      %v4367 = vsel %vm4312, %v4366, %v4365
      %v4368 = vperm.slane %v4167, %v4308
      %v4369 = vperm.slane %v4170, %v4310
      %v4370 = vsel %vm4312, %v4369, %v4368
      %v4371 = vperm.slane %v4173, %v4308
      %v4372 = vperm.slane %v4176, %v4310
      %v4373 = vsel %vm4312, %v4372, %v4371
      %v4374 = vperm.slane %v4179, %v4308
      %v4375 = vperm.slane %v4182, %v4310
      %v4376 = vsel %vm4312, %v4375, %v4374
      %v4377 = vperm.slane %v4185, %v4308
      %v4378 = vperm.slane %v4188, %v4310
      %v4379 = vsel %vm4312, %v4378, %v4377
      %v4380 = vperm.slane %v4191, %v4308
      %v4381 = vperm.slane %v4194, %v4310
      %v4382 = vsel %vm4312, %v4381, %v4380
      %v4383 = vperm.slane %v4197, %v4308
      %v4384 = vperm.slane %v4200, %v4310
      %v4385 = vsel %vm4312, %v4384, %v4383
      %v4386 = vperm.slane %v4203, %v4308
      %v4387 = vperm.slane %v4206, %v4310
      %v4388 = vsel %vm4312, %v4387, %v4386
      %v4389 = vperm.slane %v4209, %v4308
      %v4390 = vperm.slane %v4212, %v4310
      %v4391 = vsel %vm4312, %v4390, %v4389
      %v4392 = vperm.slane %v4215, %v4308
      %v4393 = vperm.slane %v4218, %v4310
      %v4394 = vsel %vm4312, %v4393, %v4392
      %v4395 = vperm.slane %v4221, %v4308
      %v4396 = vperm.slane %v4224, %v4310
      %v4397 = vsel %vm4312, %v4396, %v4395
      %v4398 = vperm.slane %v4227, %v4308
      %v4399 = vperm.slane %v4230, %v4310
      %v4400 = vsel %vm4312, %v4399, %v4398
      %v4401 = vperm.slane %v4233, %v4308
      %v4402 = vperm.slane %v4236, %v4310
      %v4403 = vsel %vm4312, %v4402, %v4401
      %v4404 = vperm.slane %v4239, %v4308
      %v4405 = vperm.slane %v4242, %v4310
      %v4406 = vsel %vm4312, %v4405, %v4404
      %vm4407 = vcmask 1041409
      %v4408 = vsel %vm4407, %v4316, %v4313
      %vm4409 = vcmask 1042434
      %v4410 = vsel %vm4409, %v4319, %v4408
      %vm4411 = vcmask 1043459
      %v4412 = vsel %vm4411, %v4322, %v4410
      %vm4413 = vcmask 1044484
      %v4414 = vsel %vm4413, %v4325, %v4412
      %vm4415 = vcmask 1045509
      %v4416 = vsel %vm4415, %v4328, %v4414
      %vm4417 = vcmask 1046534
      %v4418 = vsel %vm4417, %v4331, %v4416
      %vm4419 = vcmask 1047559
      %v4420 = vsel %vm4419, %v4334, %v4418
      %v4421 = vsel %vm4407, %v4340, %v4337
      %v4422 = vsel %vm4409, %v4343, %v4421
      %v4423 = vsel %vm4411, %v4346, %v4422
      %v4424 = vsel %vm4413, %v4349, %v4423
      %v4425 = vsel %vm4415, %v4352, %v4424
      %v4426 = vsel %vm4417, %v4355, %v4425
      %v4427 = vsel %vm4419, %v4358, %v4426
      %v4428 = vsel %vm4407, %v4364, %v4361
      %v4429 = vsel %vm4409, %v4367, %v4428
      %v4430 = vsel %vm4411, %v4370, %v4429
      %v4431 = vsel %vm4413, %v4373, %v4430
      %v4432 = vsel %vm4415, %v4376, %v4431
      %v4433 = vsel %vm4417, %v4379, %v4432
      %v4434 = vsel %vm4419, %v4382, %v4433
      %v4435 = vsel %vm4407, %v4388, %v4385
      %v4436 = vsel %vm4409, %v4391, %v4435
      %v4437 = vsel %vm4411, %v4394, %v4436
      %v4438 = vsel %vm4413, %v4397, %v4437
      %v4439 = vsel %vm4415, %v4400, %v4438
      %v4440 = vsel %vm4417, %v4403, %v4439
      %v4441 = vsel %vm4419, %v4406, %v4440
      %v4446 = vsel %vm486, %v4420, 0.0
      %4447 = vadd.xlane.f32.xlu0 %v4446
      %v4448 = vpop.xlane.xlu0 %4447
      %v4449 = vsel %vm486, %v4427, 0.0
      %4450 = vadd.xlane.f32.xlu0 %v4449
      %v4451 = vpop.xlane.xlu0 %4450
      %v4452 = vsel %vm486, %v4434, 0.0
      %4453 = vadd.xlane.f32.xlu0 %v4452
      %v4454 = vpop.xlane.xlu0 %4453
      %v4455 = vsel %vm486, %v4441, 0.0
      %4456 = vadd.xlane.f32.xlu0 %v4455
      %v4457 = vpop.xlane.xlu0 %4456
      %s4458 = scalar_lea.vmem %s10, 16
      %v4459 = vld [vmem:[%s4458] sm:$0xff]
      %v4460 = vld [vmem:[%s4458 + $0x8] sm:$0xff]
      %v4461 = vmul.f32 %v3793, %v4459
      %v4462 = vmul.f32 %v3796, %v4460
      %v4463 = vmul.f32 %v3799, %v4459
      %v4464 = vmul.f32 %v3802, %v4460
      %v4465 = vmul.f32 %v3805, %v4459
      %v4466 = vmul.f32 %v3808, %v4460
      %v4467 = vmul.f32 %v3811, %v4459
      %v4468 = vmul.f32 %v3814, %v4460
      %v4469 = vmul.f32 %v3817, %v4459
      %v4470 = vmul.f32 %v3820, %v4460
      %v4471 = vmul.f32 %v3823, %v4459
      %v4472 = vmul.f32 %v3826, %v4460
      %v4473 = vmul.f32 %v3829, %v4459
      %v4474 = vmul.f32 %v3832, %v4460
      %v4475 = vmul.f32 %v3835, %v4459
      %v4476 = vmul.f32 %v3838, %v4460
      %v4477 = vmul.f32 %v3841, %v4459
      %v4478 = vmul.f32 %v3844, %v4460
      %v4479 = vmul.f32 %v3847, %v4459
      %v4480 = vmul.f32 %v3850, %v4460
      %v4481 = vmul.f32 %v3853, %v4459
      %v4482 = vmul.f32 %v3856, %v4460
      %v4483 = vmul.f32 %v3859, %v4459
      %v4484 = vmul.f32 %v3862, %v4460
      %v4485 = vmul.f32 %v3865, %v4459
      %v4486 = vmul.f32 %v3868, %v4460
      %v4487 = vmul.f32 %v3871, %v4459
      %v4488 = vmul.f32 %v3874, %v4460
      %v4489 = vmul.f32 %v3877, %v4459
      %v4490 = vmul.f32 %v3880, %v4460
      %v4491 = vmul.f32 %v3883, %v4459
      %v4492 = vmul.f32 %v3886, %v4460
      %v4493 = vmul.f32 %v3889, %v4459
      %v4494 = vmul.f32 %v3892, %v4460
      %v4495 = vmul.f32 %v3895, %v4459
      %v4496 = vmul.f32 %v3898, %v4460
      %v4497 = vmul.f32 %v3901, %v4459
      %v4498 = vmul.f32 %v3904, %v4460
      %v4499 = vmul.f32 %v3907, %v4459
      %v4500 = vmul.f32 %v3910, %v4460
      %v4501 = vmul.f32 %v3913, %v4459
      %v4502 = vmul.f32 %v3916, %v4460
      %v4503 = vmul.f32 %v3919, %v4459
      %v4504 = vmul.f32 %v3922, %v4460
      %v4505 = vmul.f32 %v3925, %v4459
      %v4506 = vmul.f32 %v3928, %v4460
      %v4507 = vmul.f32 %v3931, %v4459
      %v4508 = vmul.f32 %v3934, %v4460
      %v4509 = vmul.f32 %v3937, %v4459
      %v4510 = vmul.f32 %v3940, %v4460
      %v4511 = vmul.f32 %v3943, %v4459
      %v4512 = vmul.f32 %v3946, %v4460
      %v4513 = vmul.f32 %v3949, %v4459
      %v4514 = vmul.f32 %v3952, %v4460
      %v4515 = vmul.f32 %v3955, %v4459
      %v4516 = vmul.f32 %v3958, %v4460
      %v4517 = vmul.f32 %v3961, %v4459
      %v4518 = vmul.f32 %v3964, %v4460
      %v4519 = vmul.f32 %v3967, %v4459
      %v4520 = vmul.f32 %v3970, %v4460
      %v4521 = vmul.f32 %v3973, %v4459
      %v4522 = vmul.f32 %v3976, %v4460
      %v4523 = vmul.f32 %v3979, %v4459
      %v4524 = vmul.f32 %v3982, %v4460
      %v4525 = vsel %vm4050, %v4461, 0.0
      %4526 = vadd.xlane.f32.xlu0 %v4525
      %v4527 = vpop.xlane.xlu0 %4526
      %v4528 = vsel %vm4050, %v4462, 0.0
      %4529 = vadd.xlane.f32.xlu0 %v4528
      %v4530 = vpop.xlane.xlu0 %4529
      %v4531 = vsel %vm4050, %v4463, 0.0
      %4532 = vadd.xlane.f32.xlu0 %v4531
      %v4533 = vpop.xlane.xlu0 %4532
      %v4534 = vsel %vm4050, %v4464, 0.0
      %4535 = vadd.xlane.f32.xlu0 %v4534
      %v4536 = vpop.xlane.xlu0 %4535
      %v4537 = vsel %vm4050, %v4465, 0.0
      %4538 = vadd.xlane.f32.xlu0 %v4537
      %v4539 = vpop.xlane.xlu0 %4538
      %v4540 = vsel %vm4050, %v4466, 0.0
      %4541 = vadd.xlane.f32.xlu0 %v4540
      %v4542 = vpop.xlane.xlu0 %4541
      %v4543 = vsel %vm4050, %v4467, 0.0
      %4544 = vadd.xlane.f32.xlu0 %v4543
      %v4545 = vpop.xlane.xlu0 %4544
      %v4546 = vsel %vm4050, %v4468, 0.0
      %4547 = vadd.xlane.f32.xlu0 %v4546
      %v4548 = vpop.xlane.xlu0 %4547
      %v4549 = vsel %vm4050, %v4469, 0.0
      %4550 = vadd.xlane.f32.xlu0 %v4549
      %v4551 = vpop.xlane.xlu0 %4550
      %v4552 = vsel %vm4050, %v4470, 0.0
      %4553 = vadd.xlane.f32.xlu0 %v4552
      %v4554 = vpop.xlane.xlu0 %4553
      %v4555 = vsel %vm4050, %v4471, 0.0
      %4556 = vadd.xlane.f32.xlu0 %v4555
      %v4557 = vpop.xlane.xlu0 %4556
      %v4558 = vsel %vm4050, %v4472, 0.0
      %4559 = vadd.xlane.f32.xlu0 %v4558
      %v4560 = vpop.xlane.xlu0 %4559
      %v4561 = vsel %vm4050, %v4473, 0.0
      %4562 = vadd.xlane.f32.xlu0 %v4561
      %v4563 = vpop.xlane.xlu0 %4562
      %v4564 = vsel %vm4050, %v4474, 0.0
      %4565 = vadd.xlane.f32.xlu0 %v4564
      %v4566 = vpop.xlane.xlu0 %4565
      %v4567 = vsel %vm4050, %v4475, 0.0
      %4568 = vadd.xlane.f32.xlu0 %v4567
      %v4569 = vpop.xlane.xlu0 %4568
      %v4570 = vsel %vm4050, %v4476, 0.0
      %4571 = vadd.xlane.f32.xlu0 %v4570
      %v4572 = vpop.xlane.xlu0 %4571
      %v4573 = vsel %vm4050, %v4477, 0.0
      %4574 = vadd.xlane.f32.xlu0 %v4573
      %v4575 = vpop.xlane.xlu0 %4574
      %v4576 = vsel %vm4050, %v4478, 0.0
      %4577 = vadd.xlane.f32.xlu0 %v4576
      %v4578 = vpop.xlane.xlu0 %4577
      %v4579 = vsel %vm4050, %v4479, 0.0
      %4580 = vadd.xlane.f32.xlu0 %v4579
      %v4581 = vpop.xlane.xlu0 %4580
      %v4582 = vsel %vm4050, %v4480, 0.0
      %4583 = vadd.xlane.f32.xlu0 %v4582
      %v4584 = vpop.xlane.xlu0 %4583
      %v4585 = vsel %vm4050, %v4481, 0.0
      %4586 = vadd.xlane.f32.xlu0 %v4585
      %v4587 = vpop.xlane.xlu0 %4586
      %v4588 = vsel %vm4050, %v4482, 0.0
      %4589 = vadd.xlane.f32.xlu0 %v4588
      %v4590 = vpop.xlane.xlu0 %4589
      %v4591 = vsel %vm4050, %v4483, 0.0
      %4592 = vadd.xlane.f32.xlu0 %v4591
      %v4593 = vpop.xlane.xlu0 %4592
      %v4594 = vsel %vm4050, %v4484, 0.0
      %4595 = vadd.xlane.f32.xlu0 %v4594
      %v4596 = vpop.xlane.xlu0 %4595
      %v4597 = vsel %vm4050, %v4485, 0.0
      %4598 = vadd.xlane.f32.xlu0 %v4597
      %v4599 = vpop.xlane.xlu0 %4598
      %v4600 = vsel %vm4050, %v4486, 0.0
      %4601 = vadd.xlane.f32.xlu0 %v4600
      %v4602 = vpop.xlane.xlu0 %4601
      %v4603 = vsel %vm4050, %v4487, 0.0
      %4604 = vadd.xlane.f32.xlu0 %v4603
      %v4605 = vpop.xlane.xlu0 %4604
      %v4606 = vsel %vm4050, %v4488, 0.0
      %4607 = vadd.xlane.f32.xlu0 %v4606
      %v4608 = vpop.xlane.xlu0 %4607
      %v4609 = vsel %vm4050, %v4489, 0.0
      %4610 = vadd.xlane.f32.xlu0 %v4609
      %v4611 = vpop.xlane.xlu0 %4610
      %v4612 = vsel %vm4050, %v4490, 0.0
      %4613 = vadd.xlane.f32.xlu0 %v4612
      %v4614 = vpop.xlane.xlu0 %4613
      %v4615 = vsel %vm4050, %v4491, 0.0
      %4616 = vadd.xlane.f32.xlu0 %v4615
      %v4617 = vpop.xlane.xlu0 %4616
      %v4618 = vsel %vm4050, %v4492, 0.0
      %4619 = vadd.xlane.f32.xlu0 %v4618
      %v4620 = vpop.xlane.xlu0 %4619
      %v4621 = vsel %vm4050, %v4493, 0.0
      %4622 = vadd.xlane.f32.xlu0 %v4621
      %v4623 = vpop.xlane.xlu0 %4622
      %v4624 = vsel %vm4050, %v4494, 0.0
      %4625 = vadd.xlane.f32.xlu0 %v4624
      %v4626 = vpop.xlane.xlu0 %4625
      %v4627 = vsel %vm4050, %v4495, 0.0
      %4628 = vadd.xlane.f32.xlu0 %v4627
      %v4629 = vpop.xlane.xlu0 %4628
      %v4630 = vsel %vm4050, %v4496, 0.0
      %4631 = vadd.xlane.f32.xlu0 %v4630
      %v4632 = vpop.xlane.xlu0 %4631
      %v4633 = vsel %vm4050, %v4497, 0.0
      %4634 = vadd.xlane.f32.xlu0 %v4633
      %v4635 = vpop.xlane.xlu0 %4634
      %v4636 = vsel %vm4050, %v4498, 0.0
      %4637 = vadd.xlane.f32.xlu0 %v4636
      %v4638 = vpop.xlane.xlu0 %4637
      %v4639 = vsel %vm4050, %v4499, 0.0
      %4640 = vadd.xlane.f32.xlu0 %v4639
      %v4641 = vpop.xlane.xlu0 %4640
      %v4642 = vsel %vm4050, %v4500, 0.0
      %4643 = vadd.xlane.f32.xlu0 %v4642
      %v4644 = vpop.xlane.xlu0 %4643
      %v4645 = vsel %vm4050, %v4501, 0.0
      %4646 = vadd.xlane.f32.xlu0 %v4645
      %v4647 = vpop.xlane.xlu0 %4646
      %v4648 = vsel %vm4050, %v4502, 0.0
      %4649 = vadd.xlane.f32.xlu0 %v4648
      %v4650 = vpop.xlane.xlu0 %4649
      %v4651 = vsel %vm4050, %v4503, 0.0
      %4652 = vadd.xlane.f32.xlu0 %v4651
      %v4653 = vpop.xlane.xlu0 %4652
      %v4654 = vsel %vm4050, %v4504, 0.0
      %4655 = vadd.xlane.f32.xlu0 %v4654
      %v4656 = vpop.xlane.xlu0 %4655
      %v4657 = vsel %vm4050, %v4505, 0.0
      %4658 = vadd.xlane.f32.xlu0 %v4657
      %v4659 = vpop.xlane.xlu0 %4658
      %v4660 = vsel %vm4050, %v4506, 0.0
      %4661 = vadd.xlane.f32.xlu0 %v4660
      %v4662 = vpop.xlane.xlu0 %4661
      %v4663 = vsel %vm4050, %v4507, 0.0
      %4664 = vadd.xlane.f32.xlu0 %v4663
      %v4665 = vpop.xlane.xlu0 %4664
      %v4666 = vsel %vm4050, %v4508, 0.0
      %4667 = vadd.xlane.f32.xlu0 %v4666
      %v4668 = vpop.xlane.xlu0 %4667
      %v4669 = vsel %vm4050, %v4509, 0.0
      %4670 = vadd.xlane.f32.xlu0 %v4669
      %v4671 = vpop.xlane.xlu0 %4670
      %v4672 = vsel %vm4050, %v4510, 0.0
      %4673 = vadd.xlane.f32.xlu0 %v4672
      %v4674 = vpop.xlane.xlu0 %4673
      %v4675 = vsel %vm4050, %v4511, 0.0
      %4676 = vadd.xlane.f32.xlu0 %v4675
      %v4677 = vpop.xlane.xlu0 %4676
      %v4678 = vsel %vm4050, %v4512, 0.0
      %4679 = vadd.xlane.f32.xlu0 %v4678
      %v4680 = vpop.xlane.xlu0 %4679
      %v4681 = vsel %vm4050, %v4513, 0.0
      %4682 = vadd.xlane.f32.xlu0 %v4681
      %v4683 = vpop.xlane.xlu0 %4682
      %v4684 = vsel %vm4050, %v4514, 0.0
      %4685 = vadd.xlane.f32.xlu0 %v4684
      %v4686 = vpop.xlane.xlu0 %4685
      %v4687 = vsel %vm4050, %v4515, 0.0
      %4688 = vadd.xlane.f32.xlu0 %v4687
      %v4689 = vpop.xlane.xlu0 %4688
      %v4690 = vsel %vm4050, %v4516, 0.0
      %4691 = vadd.xlane.f32.xlu0 %v4690
      %v4692 = vpop.xlane.xlu0 %4691
      %v4693 = vsel %vm4050, %v4517, 0.0
      %4694 = vadd.xlane.f32.xlu0 %v4693
      %v4695 = vpop.xlane.xlu0 %4694
      %v4696 = vsel %vm4050, %v4518, 0.0
      %4697 = vadd.xlane.f32.xlu0 %v4696
      %v4698 = vpop.xlane.xlu0 %4697
      %v4699 = vsel %vm4050, %v4519, 0.0
      %4700 = vadd.xlane.f32.xlu0 %v4699
      %v4701 = vpop.xlane.xlu0 %4700
      %v4702 = vsel %vm4050, %v4520, 0.0
      %4703 = vadd.xlane.f32.xlu0 %v4702
      %v4704 = vpop.xlane.xlu0 %4703
      %v4705 = vsel %vm4050, %v4521, 0.0
      %4706 = vadd.xlane.f32.xlu0 %v4705
      %v4707 = vpop.xlane.xlu0 %4706
      %v4708 = vsel %vm4050, %v4522, 0.0
      %4709 = vadd.xlane.f32.xlu0 %v4708
      %v4710 = vpop.xlane.xlu0 %4709
      %v4711 = vsel %vm4050, %v4523, 0.0
      %4712 = vadd.xlane.f32.xlu0 %v4711
      %v4713 = vpop.xlane.xlu0 %4712
      %v4714 = vsel %vm4050, %v4524, 0.0
      %4715 = vadd.xlane.f32.xlu0 %v4714
      %v4716 = vpop.xlane.xlu0 %4715
      %v4781 = vperm.slane %v4527, %v4308
      %v4782 = vperm.slane %v4530, %v4310
      %v4783 = vsel %vm4312, %v4782, %v4781
      %v4784 = vperm.slane %v4533, %v4308
      %v4785 = vperm.slane %v4536, %v4310
      %v4786 = vsel %vm4312, %v4785, %v4784
      %v4787 = vperm.slane %v4539, %v4308
      %v4788 = vperm.slane %v4542, %v4310
      %v4789 = vsel %vm4312, %v4788, %v4787
      %v4790 = vperm.slane %v4545, %v4308
      %v4791 = vperm.slane %v4548, %v4310
      %v4792 = vsel %vm4312, %v4791, %v4790
      %v4793 = vperm.slane %v4551, %v4308
      %v4794 = vperm.slane %v4554, %v4310
      %v4795 = vsel %vm4312, %v4794, %v4793
      %v4796 = vperm.slane %v4557, %v4308
      %v4797 = vperm.slane %v4560, %v4310
      %v4798 = vsel %vm4312, %v4797, %v4796
      %v4799 = vperm.slane %v4563, %v4308
      %v4800 = vperm.slane %v4566, %v4310
      %v4801 = vsel %vm4312, %v4800, %v4799
      %v4802 = vperm.slane %v4569, %v4308
      %v4803 = vperm.slane %v4572, %v4310
      %v4804 = vsel %vm4312, %v4803, %v4802
      %v4805 = vperm.slane %v4575, %v4308
      %v4806 = vperm.slane %v4578, %v4310
      %v4807 = vsel %vm4312, %v4806, %v4805
      %v4808 = vperm.slane %v4581, %v4308
      %v4809 = vperm.slane %v4584, %v4310
      %v4810 = vsel %vm4312, %v4809, %v4808
      %v4811 = vperm.slane %v4587, %v4308
      %v4812 = vperm.slane %v4590, %v4310
      %v4813 = vsel %vm4312, %v4812, %v4811
      %v4814 = vperm.slane %v4593, %v4308
      %v4815 = vperm.slane %v4596, %v4310
      %v4816 = vsel %vm4312, %v4815, %v4814
      %v4817 = vperm.slane %v4599, %v4308
      %v4818 = vperm.slane %v4602, %v4310
      %v4819 = vsel %vm4312, %v4818, %v4817
      %v4820 = vperm.slane %v4605, %v4308
      %v4821 = vperm.slane %v4608, %v4310
      %v4822 = vsel %vm4312, %v4821, %v4820
      %v4823 = vperm.slane %v4611, %v4308
      %v4824 = vperm.slane %v4614, %v4310
      %v4825 = vsel %vm4312, %v4824, %v4823
      %v4826 = vperm.slane %v4617, %v4308
      %v4827 = vperm.slane %v4620, %v4310
      %v4828 = vsel %vm4312, %v4827, %v4826
      %v4829 = vperm.slane %v4623, %v4308
      %v4830 = vperm.slane %v4626, %v4310
      %v4831 = vsel %vm4312, %v4830, %v4829
      %v4832 = vperm.slane %v4629, %v4308
      %v4833 = vperm.slane %v4632, %v4310
      %v4834 = vsel %vm4312, %v4833, %v4832
      %v4835 = vperm.slane %v4635, %v4308
      %v4836 = vperm.slane %v4638, %v4310
      %v4837 = vsel %vm4312, %v4836, %v4835
      %v4838 = vperm.slane %v4641, %v4308
      %v4839 = vperm.slane %v4644, %v4310
      %v4840 = vsel %vm4312, %v4839, %v4838
      %v4841 = vperm.slane %v4647, %v4308
      %v4842 = vperm.slane %v4650, %v4310
      %v4843 = vsel %vm4312, %v4842, %v4841
      %v4844 = vperm.slane %v4653, %v4308
      %v4845 = vperm.slane %v4656, %v4310
      %v4846 = vsel %vm4312, %v4845, %v4844
      %v4847 = vperm.slane %v4659, %v4308
      %v4848 = vperm.slane %v4662, %v4310
      %v4849 = vsel %vm4312, %v4848, %v4847
      %v4850 = vperm.slane %v4665, %v4308
      %v4851 = vperm.slane %v4668, %v4310
      %v4852 = vsel %vm4312, %v4851, %v4850
      %v4853 = vperm.slane %v4671, %v4308
      %v4854 = vperm.slane %v4674, %v4310
      %v4855 = vsel %vm4312, %v4854, %v4853
      %v4856 = vperm.slane %v4677, %v4308
      %v4857 = vperm.slane %v4680, %v4310
      %v4858 = vsel %vm4312, %v4857, %v4856
      %v4859 = vperm.slane %v4683, %v4308
      %v4860 = vperm.slane %v4686, %v4310
      %v4861 = vsel %vm4312, %v4860, %v4859
      %v4862 = vperm.slane %v4689, %v4308
      %v4863 = vperm.slane %v4692, %v4310
      %v4864 = vsel %vm4312, %v4863, %v4862
      %v4865 = vperm.slane %v4695, %v4308
      %v4866 = vperm.slane %v4698, %v4310
      %v4867 = vsel %vm4312, %v4866, %v4865
      %v4868 = vperm.slane %v4701, %v4308
      %v4869 = vperm.slane %v4704, %v4310
      %v4870 = vsel %vm4312, %v4869, %v4868
      %v4871 = vperm.slane %v4707, %v4308
      %v4872 = vperm.slane %v4710, %v4310
      %v4873 = vsel %vm4312, %v4872, %v4871
      %v4874 = vperm.slane %v4713, %v4308
      %v4875 = vperm.slane %v4716, %v4310
      %v4876 = vsel %vm4312, %v4875, %v4874
      %v4877 = vsel %vm4407, %v4786, %v4783
      %v4878 = vsel %vm4409, %v4789, %v4877
      %v4879 = vsel %vm4411, %v4792, %v4878
      %v4880 = vsel %vm4413, %v4795, %v4879
      %v4881 = vsel %vm4415, %v4798, %v4880
      %v4882 = vsel %vm4417, %v4801, %v4881
      %v4883 = vsel %vm4419, %v4804, %v4882
      %v4884 = vsel %vm4407, %v4810, %v4807
      %v4885 = vsel %vm4409, %v4813, %v4884
      %v4886 = vsel %vm4411, %v4816, %v4885
      %v4887 = vsel %vm4413, %v4819, %v4886
      %v4888 = vsel %vm4415, %v4822, %v4887
      %v4889 = vsel %vm4417, %v4825, %v4888
      %v4890 = vsel %vm4419, %v4828, %v4889
      %v4891 = vsel %vm4407, %v4834, %v4831
      %v4892 = vsel %vm4409, %v4837, %v4891
      %v4893 = vsel %vm4411, %v4840, %v4892
      %v4894 = vsel %vm4413, %v4843, %v4893
      %v4895 = vsel %vm4415, %v4846, %v4894
      %v4896 = vsel %vm4417, %v4849, %v4895
      %v4897 = vsel %vm4419, %v4852, %v4896
      %v4898 = vsel %vm4407, %v4858, %v4855
      %v4899 = vsel %vm4409, %v4861, %v4898
      %v4900 = vsel %vm4411, %v4864, %v4899
      %v4901 = vsel %vm4413, %v4867, %v4900
      %v4902 = vsel %vm4415, %v4870, %v4901
      %v4903 = vsel %vm4417, %v4873, %v4902
      %v4904 = vsel %vm4419, %v4876, %v4903
      %v4909 = vsel %vm486, %v4883, 0.0
      %4910 = vadd.xlane.f32.xlu0 %v4909
      %v4911 = vpop.xlane.xlu0 %4910
      %v4912 = vsel %vm486, %v4890, 0.0
      %4913 = vadd.xlane.f32.xlu0 %v4912
      %v4914 = vpop.xlane.xlu0 %4913
      %v4915 = vsel %vm486, %v4897, 0.0
      %4916 = vadd.xlane.f32.xlu0 %v4915
      %v4917 = vpop.xlane.xlu0 %4916
      %v4918 = vsel %vm486, %v4904, 0.0
      %4919 = vadd.xlane.f32.xlu0 %v4918
      %v4920 = vpop.xlane.xlu0 %4919
      %vm4921 = vcmask 7168
      %v4922 = vsel %vm4921, %v4448, %v4911
      %v4923 = vsel %vm4921, %v4451, %v4914
      %v4924 = vsel %vm4921, %v4454, %v4917
      %v4925 = vsel %vm4921, %v4457, %v4920
      %v4926 = vld [vmem:[%s11] sm:$0x1]
      %v4928 = vperm.slane %v4926, 0
      %v4930 = vadd.f32 %v4922, %v4928
      %v4931 = vadd.f32 %v4923, %v4928
      %v4932 = vadd.f32 %v4924, %v4928
      %v4933 = vadd.f32 %v4925, %v4928
      %vm4934 = vcmask 15360
      %4935 = vst.msk [vmem:[%s415] sm:$0xff] %vm4934, %v4930
      %4936 = vst.msk [vmem:[%s415 + $0x8] sm:$0xff] %vm4934, %v4931
      %4937 = vst.msk [vmem:[%s415 + $0x10] sm:$0xff] %vm4934, %v4932
      %4938 = vst.msk [vmem:[%s415 + $0x18] sm:$0xff] %vm4934, %v4933
      %p4939 = scmp.lt.s32.totalorder %s23, 1
      %s4940 = scalar_select %p4939, %s23, 1
      %s4941 = smul.addr %s4940, 4
      %s4942 = smul.addr %s4941, 8
      %s4943 = scalar_lea.vmem %s12, %s4942
      // Predicated region
      $region69: #{tpu_custom_call.1} parent=67 // pred_check
        %p4944 = pneg %p298
      $region70: #{tpu_custom_call.1} parent=67 // pred_check_branch
        %4946 = sbr.rel (%p4944) target = $region72
      $region71: #{tpu_custom_call.1} parent=67 // pred_region
        _
      $region72: #{tpu_custom_call.1} parent=67 // pred_fallthru
        _
    $region68: #{tpu_custom_call.1} parent=5 // pred_fallthru
      _
    %p4947 = scmp.le.s32.totalorder 2, %s18
    // Predicated region
    $region73: #{tpu_custom_call.1} parent=5 // pred_check
      %p4948 = pneg %p4947
    $region74: #{tpu_custom_call.1} parent=5 // pred_check_branch
      %4950 = sbr.rel (%p4948) target = $region76
    $region75: #{tpu_custom_call.1} parent=5 // pred_region
      %s4951 = ssub.s32 %s18, 2
      // Predicated region
      $region77: #{tpu_custom_call.1} parent=75 // pred_check
        %p4952 = pneg %p304
      $region78: #{tpu_custom_call.1} parent=75 // pred_check_branch
        %4954 = sbr.rel (%p4952) target = $region80
      $region79: #{tpu_custom_call.1} parent=75 // pred_region
        %p4955 = scmp.lt.s32.totalorder %s24, 1
        %s4956 = scalar_select %p4955, %s24, 1
        %s4957 = smul.addr %s4956, 4
        %s4958 = smul.addr %s4957, 8
        %s4959 = scalar_lea.vmem %s12, %s4958
      $region80: #{tpu_custom_call.1} parent=75 // pred_fallthru
        _
    $region76: #{tpu_custom_call.1} parent=5 // pred_fallthru
      _
  $region6: #{tpu_custom_call.1} parent=0 // loop_footer
    %s22 = sadd.s32 1, %s18
  $region7: #{tpu_custom_call.1} parent=0 // loop_footer_branch
    %17 = sbr.rel target = $region3
  $region8: #{tpu_custom_call.1} parent=0 // loop_exit
    _

</llo_original>
